<compile_context>
chip_gen: v5e
topology: v5e:2x2
jax: 0.10.0
libtpu: 0.0.40
codegen_flags: <defaults>
</compile_context>

<pallas_src>
import jax
import jax.numpy as jnp
import numpy as np
from jax.experimental import pallas as pl
from jax.experimental.pallas import tpu as pltpu

_EPS = 1e-5
_HIGH = jax.lax.Precision.HIGHEST  # reference only

# Fixed row layout of the packed per-channel-vector buffer.
_VROW_B1, _VROW_B2, _VROW_B3, _VROW_FCB = 0, 4, 8, 12


# ----------------------------------------------------------------------------
# Host-side parameter packing (cuts input DMA count to 3)
# ----------------------------------------------------------------------------
def _pack_weights(p1, p2, p3, fc_w, width):
    """Concatenate all conv weights (as (K*Cin, Cout)) + fc weight into one
    (rows, width) buffer; every section start is 8-row aligned."""
    sections = [
        ("b1c1", p1["w1"].reshape(-1, p1["w1"].shape[2])),
        ("b1c2", p1["w2"].reshape(-1, p1["w2"].shape[2])),
        ("b2c1", p2["w1"].reshape(-1, p2["w1"].shape[2])),
        ("b2c2", p2["w2"].reshape(-1, p2["w2"].shape[2])),
        ("b3c1", p3["w1"].reshape(-1, p3["w1"].shape[2])),
        ("b3c2", p3["w2"].reshape(-1, p3["w2"].shape[2])),
        ("fc",   fc_w),
    ]
    parts, offs, cur = [], {}, 0
    for name, mat in sections:
        offs[name] = cur
        parts.append(jnp.pad(mat.astype(jnp.float32),
                             ((0, 0), (0, width - mat.shape[1]))))
        cur += mat.shape[0]
        tail = (-cur) % 8
        if tail:
            parts.append(jnp.zeros((tail, width), jnp.float32))
            cur += tail
    return jnp.concatenate(parts, axis=0), offs


def _pack_vectors(p1, p2, p3, fc_b, width):
    """All BN gamma/beta rows + fc bias row into one small (16, width) buffer."""
    vecs = [p1["g1"], p1["be1"], p1["g2"], p1["be2"],
            p2["g1"], p2["be1"], p2["g2"], p2["be2"],
            p3["g1"], p3["be1"], p3["g2"], p3["be2"],
            fc_b]
    rows = [jnp.pad(v.astype(jnp.float32), ((0, 0), (0, width - v.shape[1])))
            for v in vecs]
    buf = jnp.concatenate(rows, axis=0)
    return jnp.pad(buf, ((0, (-buf.shape[0]) % 8), (0, 0)))


# ----------------------------------------------------------------------------
# In-kernel helpers (traced inside the Pallas kernel body)
# ----------------------------------------------------------------------------
def _shift_down(y, shift, m):
    """out[i] = y[i - shift] with zeros for i < shift; m output rows."""
    if shift == 0:
        return y[0:m, :]
    z = jnp.zeros((shift, y.shape[1]), jnp.float32)
    return jnp.concatenate([z, y[0:m - shift, :]], axis=0)


def _bn_tanh(c, vmask, inv_count, g, be):
    """Training-mode BatchNorm (masked batch stats, biased variance) + tanh."""
    mean = jnp.sum(c * vmask, axis=0, keepdims=True) * inv_count
    d = (c - mean) * vmask
    var = jnp.sum(d * d, axis=0, keepdims=True) * inv_count
    inv = jax.lax.rsqrt(var + _EPS)
    return jnp.tanh((c - mean) * inv * g + be)


def _conv_norm_pool(x, w_ref, v_ref, pool_ref, *, w1_off, w2_off, vrow,
                    cin, ch, K, batch):
    """One ConvNormPool block on a batch-flattened (batch*Lin, cin) value."""
    R = x.shape[0]
    Lin = R // batch
    Lc = Lin - K + 1          # 'valid' conv output length per batch segment
    M = R - K + 1             # flattened conv output rows (incl. junk rows)
    inv_count = 1.0 / float(batch * Lc)

    # Validity mask of flattened conv-output rows; built once, broadcast once.
    rows = jax.lax.broadcasted_iota(jnp.int32, (M, 1), 0)
    if (Lin & (Lin - 1)) == 0:                       # power of two: O(1) in B
        valid = jnp.bitwise_and(rows, Lin - 1) < Lc
    else:                                            # safe fallback
        valid = rows < Lc
        for b in range(1, batch):
            valid = valid | ((rows >= b * Lin) & (rows < b * Lin + Lc))
    vmask = jnp.broadcast_to(valid.astype(jnp.float32), (M, ch))

    # BN affine rows from the packed vector buffer.
    g1 = v_ref[vrow + 0:vrow + 1, 0:ch]
    be1 = v_ref[vrow + 1:vrow + 2, 0:ch]
    g2 = v_ref[vrow + 2:vrow + 3, 0:ch]
    be2 = v_ref[vrow + 3:vrow + 4, 0:ch]

    # ---- conv1 ('valid') ----------------------------------------------
    if cin == 1:
        # VPU path: hoist the (R,1)->(R,ch) lane broadcast out of the K loop.
        w1rows = w_ref[w1_off:w1_off + K, 0:ch]              # (K, ch)
        xb = jnp.broadcast_to(x, (R, ch))
        c1 = xb[0:M, :] * w1rows[0:1, :]
        for k in range(1, K):
            c1 = c1 + xb[k:k + M, :] * w1rows[k:k + 1, :]
    else:
        # im2col: one (M, K*cin) @ (K*cin, ch) MXU matmul instead of K dots.
        g1mat = jnp.concatenate([x[k:k + M, :] for k in range(K)], axis=1)
        w1p = w_ref[w1_off:w1_off + K * cin, 0:ch]
        c1 = jnp.dot(g1mat, w1p, preferred_element_type=jnp.float32)

    y1 = _bn_tanh(c1, vmask, inv_count, g1, be1) * vmask     # masked rows -> 0

    # ---- F.pad(K-1, 0) + conv2 fused as a shifted im2col matmul ---------
    # pad1[i] = y1[i-(K-1)] (zeros otherwise); masking y1 above is exactly what
    # turns the flattened shift into per-segment left zero padding.
    g2mat = jnp.concatenate(
        [_shift_down(y1, K - 1 - k, M) for k in range(K)], axis=1)
    w2p = w_ref[w2_off:w2_off + K * ch, 0:ch]
    c2 = jnp.dot(g2mat, w2p, preferred_element_type=jnp.float32)
    y2 = _bn_tanh(c2, vmask, inv_count, g2, be2) * vmask

    # ---- F.pad(K-1, 0) + MaxPool1d(2) -----------------------------------
    # Build the padded value, store it with one aligned full-tile store, then
    # pool with two stride-2 sublane reads + a VPU max.  Segment lengths are
    # even, so pooled pairs never cross batch boundaries.
    pad2 = jnp.concatenate([jnp.zeros((K - 1, ch), jnp.float32), y2], axis=0)
    pool_ref[...] = pad2
    even = pool_ref[pl.ds(0, R // 2, stride=2), :]
    odd = pool_ref[pl.ds(1, R // 2, stride=2), :]
    return jnp.maximum(even, odd)                    # (batch * Lin // 2, ch)


# ----------------------------------------------------------------------------
# Fused forward pass (one pallas_call for the whole network)
# ----------------------------------------------------------------------------
def cnn_forward(x, p1, p2, p3, fc_w, fc_b, K=5):
    """x: (B, L, Cin) channels-last.  Returns softmax probabilities (B, NC)."""
    B, L, cin0 = x.shape
    C1 = p1["w1"].shape[2]
    C2 = p2["w1"].shape[2]
    C3 = p3["w1"].shape[2]
    NC = fc_w.shape[1]

    # Static layout assumptions (three MaxPool1d(2) stages, valid conv sizes).
    assert L % 8 == 0, "L must be divisible by 8 (three MaxPool1d(2) stages)"
    assert L // 4 >= K, "per-segment length must stay >= kernel_size"
    assert p1["w1"].shape[1] == cin0 and p2["w1"].shape[1] == C1
    assert p3["w1"].shape[1] == C2 and fc_w.shape[0] == C3

    width = max(C1, C2, C3, NC)
    Lp = L // 8                                      # length after 3 maxpools

    wbuf, offs = _pack_weights(p1, p2, p3, fc_w, width)
    vbuf = _pack_vectors(p1, p2, p3, fc_b, width)
    x_flat = x.reshape(B * L, cin0)

    def kernel(x_ref, w_ref, v_ref, out_ref, buf1, buf2, buf3):
        h = _conv_norm_pool(x_ref[...], w_ref, v_ref, buf1,
                            w1_off=offs["b1c1"], w2_off=offs["b1c2"],
                            vrow=_VROW_B1, cin=cin0, ch=C1, K=K, batch=B)
        h = _conv_norm_pool(h, w_ref, v_ref, buf2,
                            w1_off=offs["b2c1"], w2_off=offs["b2c2"],
                            vrow=_VROW_B2, cin=C1, ch=C2, K=K, batch=B)
        h = _conv_norm_pool(h, w_ref, v_ref, buf3,
                            w1_off=offs["b3c1"], w2_off=offs["b3c2"],
                            vrow=_VROW_B3, cin=C2, ch=C3, K=K, batch=B)
        # Head: AdaptiveAvgPool1d(1) as an in-kernel per-segment mean (no dense
        # averaging matrix / extra DMA), then Linear + softmax.
        avg = jnp.sum(h.reshape(B, Lp, C3), axis=1) * (1.0 / Lp)      # (B, C3)
        fcw = w_ref[offs["fc"]:offs["fc"] + C3, 0:NC]
        fcb = v_ref[_VROW_FCB:_VROW_FCB + 1, 0:NC]
        logits = jnp.dot(avg, fcw, preferred_element_type=jnp.float32) + fcb
        m = jnp.max(logits, axis=1, keepdims=True)
        e = jnp.exp(logits - m)
        out_ref[...] = (e / jnp.sum(e, axis=1, keepdims=True)).astype(out_ref.dtype)

    vmem = pl.BlockSpec(memory_space=pltpu.MemorySpace.VMEM)
    return pl.pallas_call(
        kernel,
        out_shape=jax.ShapeDtypeStruct((B, NC), jnp.float32),
        in_specs=[vmem, vmem, vmem],
        out_specs=vmem,
        scratch_shapes=[
            pltpu.VMEM((B * L, C1), jnp.float32),
            pltpu.VMEM((B * L // 2, C2), jnp.float32),
            pltpu.VMEM((B * L // 4, C3), jnp.float32),
        ],
    )(x_flat, wbuf, vbuf)


# ----------------------------------------------------------------------------
# Deterministic parameter init (PyTorch-like, weights as (K, Cin, Cout))
# ----------------------------------------------------------------------------
def init_block_params(key, cin, cout, K):
    ks = jax.random.split(key, 8)
    bound1 = 1.0 / np.sqrt(cin * K)
    bound2 = 1.0 / np.sqrt(cout * K)
    return dict(
        w1=jax.random.uniform(ks[0], (K, cin, cout), jnp.float32, -bound1, bound1),
        b1=jax.random.uniform(ks[1], (1, cout), jnp.float32, -bound1, bound1),
        g1=1.0 + 0.1 * jax.random.normal(ks[2], (1, cout), jnp.float32),
        be1=0.1 * jax.random.normal(ks[3], (1, cout), jnp.float32),
        w2=jax.random.uniform(ks[4], (K, cout, cout), jnp.float32, -bound2, bound2),
        b2=jax.random.uniform(ks[5], (1, cout), jnp.float32, -bound2, bound2),
        g2=1.0 + 0.1 * jax.random.normal(ks[6], (1, cout), jnp.float32),
        be2=0.1 * jax.random.normal(ks[7], (1, cout), jnp.float32),
    )


# ----------------------------------------------------------------------------
# Pure-JAX reference (exact f32 matmuls, includes conv biases) for verification
# ----------------------------------------------------------------------------
def ref_conv1d(x, w, b):
    K = w.shape[0]
    Lc = x.shape[1] - K + 1
    acc = sum(jnp.einsum("blc,cd->bld", x[:, k:k + Lc, :], w[k],
                         precision=_HIGH) for k in range(K))
    return acc + b[None, :, :]


def ref_bn(x, g, be):
    mean = jnp.mean(x, axis=(0, 1), keepdims=True)
    var = jnp.mean((x - mean) ** 2, axis=(0, 1), keepdims=True)
    return (x - mean) * jax.lax.rsqrt(var + _EPS) * g[None] + be[None]


def ref_block(x, p, K):
    h = jnp.tanh(ref_bn(ref_conv1d(x, p["w1"], p["b1"]), p["g1"], p["be1"]))
    h = jnp.pad(h, ((0, 0), (K - 1, 0), (0, 0)))
    h = jnp.tanh(ref_bn(ref_conv1d(h, p["w2"], p["b2"]), p["g2"], p["be2"]))
    h = jnp.pad(h, ((0, 0), (K - 1, 0), (0, 0)))
    return jnp.maximum(h[:, 0::2, :], h[:, 1::2, :])


def ref_head(x, w, b):
    avg = jnp.mean(x, axis=1)
    logits = jnp.dot(avg, w, precision=_HIGH) + b
    return jax.nn.softmax(logits, axis=-1)


# ----------------------------------------------------------------------------
if __name__ == "__main__":
    key = jax.random.PRNGKey(0)
    kx, k1, k2, k3, kf = jax.random.split(key, 5)

    # CNN(input_size=1, hid_size=32, kernel_size=5, num_classes=5) on length-64
    # signals, batch 2 (scaled-down hid_size, same structure as the module).
    B, L, IN_CH, HID, K, NC = 2, 64, 1, 32, 5, 5

    x_ncl = jax.random.normal(kx, (B, IN_CH, L), jnp.float32)   # PyTorch NCL
    x = jnp.transpose(x_ncl, (0, 2, 1))                         # (B, L, 1)

    p1 = init_block_params(k1, IN_CH, HID, K)          # 1  -> 32
    p2 = init_block_params(k2, HID, HID // 2, K)       # 32 -> 16
    p3 = init_block_params(k3, HID // 2, HID // 4, K)  # 16 -> 8

    kfw, kfb = jax.random.split(kf)
    fb = 1.0 / np.sqrt(HID // 4)
    fc_w = jax.random.uniform(kfw, (HID // 4, NC), jnp.float32, -fb, fb)
    fc_b = jax.random.uniform(kfb, (1, NC), jnp.float32, -fb, fb)

    out = cnn_forward(x, p1, p2, p3, fc_w, fc_b, K=K)
    out = jax.block_until_ready(out)

    ref = ref_head(
        ref_block(ref_block(ref_block(x, p1, K), p2, K), p3, K), fc_w, fc_b)

    # Kernel runs MXU matmuls at default precision; the reference is exact f32,
    # so compare with a correspondingly loose tolerance.
    np.testing.assert_allclose(np.asarray(out), np.asarray(ref),
                               rtol=5e-2, atol=2e-2)
    assert np.allclose(np.asarray(out).sum(axis=1), 1.0, atol=1e-4)
    print("KERNEL_OK")
</pallas_src>

<mosaic_0001>
module attributes {stable_mosaic.version = 11 : i64} {
  func.func @kernel(%arg0: memref<128x1xf32, #tpu.memory_space<vmem>>, %arg1: memref<536x32xf32, #tpu.memory_space<vmem>>, %arg2: memref<16x32xf32, #tpu.memory_space<vmem>>, %arg3: memref<2x5xf32, #tpu.memory_space<vmem>>, %arg4: memref<128x32xf32, #tpu.memory_space<vmem>>, %arg5: memref<64x16xf32, #tpu.memory_space<vmem>>, %arg6: memref<32x8xf32, #tpu.memory_space<vmem>>) attributes {dimension_semantics = [], scalar_prefetch = 0 : i64, scratch_operands = 3 : i64, tpu.core_type = #tpu.core_type<tc>} {
    %c0 = arith.constant 0 : index
    %c0_0 = arith.constant 0 : index
    %0 = vector.load %arg0[%c0, %c0_0] : memref<128x1xf32, #tpu.memory_space<vmem>>, vector<128x1xf32>
    %1 = tpu.iota {dimensions = array<i32: 0>} : vector<124x1xi32>
    %c63_i32 = arith.constant 63 : i32
    %2 = vector.broadcast %c63_i32 : i32 to vector<124x1xi32>
    %3 = arith.andi %1, %2 : vector<124x1xi32>
    %c60_i32 = arith.constant 60 : i32
    %4 = vector.broadcast %c60_i32 : i32 to vector<124x1xi32>
    %5 = arith.cmpi slt, %3, %4 : vector<124x1xi32>
    %6 = arith.extui %5 : vector<124x1xi1> to vector<124x1xi32>
    %7 = arith.sitofp %6 : vector<124x1xi32> to vector<124x1xf32>
    %8 = vector.shape_cast %7 : vector<124x1xf32> to vector<124x1xf32>
    %9 = vector.broadcast %8 : vector<124x1xf32> to vector<124x32xf32>
    %c0_1 = arith.constant 0 : index
    %c0_2 = arith.constant 0 : index
    %10 = vector.load %arg2[%c0_1, %c0_2] : memref<16x32xf32, #tpu.memory_space<vmem>>, vector<1x32xf32>
    %c1 = arith.constant 1 : index
    %c0_3 = arith.constant 0 : index
    %11 = vector.load %arg2[%c1, %c0_3] : memref<16x32xf32, #tpu.memory_space<vmem>>, vector<1x32xf32>
    %c2 = arith.constant 2 : index
    %c0_4 = arith.constant 0 : index
    %12 = vector.load %arg2[%c2, %c0_4] : memref<16x32xf32, #tpu.memory_space<vmem>>, vector<1x32xf32>
    %c3 = arith.constant 3 : index
    %c0_5 = arith.constant 0 : index
    %13 = vector.load %arg2[%c3, %c0_5] : memref<16x32xf32, #tpu.memory_space<vmem>>, vector<1x32xf32>
    %c0_6 = arith.constant 0 : index
    %c0_7 = arith.constant 0 : index
    %14 = vector.load %arg1[%c0_6, %c0_7] : memref<536x32xf32, #tpu.memory_space<vmem>>, vector<5x32xf32>
    %15 = vector.shape_cast %0 : vector<128x1xf32> to vector<128x1xf32>
    %16 = vector.broadcast %15 : vector<128x1xf32> to vector<128x32xf32>
    %17 = vector.extract_strided_slice %16 {offsets = [0, 0], sizes = [124, 32], strides = [1, 1]} : vector<128x32xf32> to vector<124x32xf32>
    %18 = vector.extract_strided_slice %14 {offsets = [0, 0], sizes = [1, 32], strides = [1, 1]} : vector<5x32xf32> to vector<1x32xf32>
    %19 = vector.broadcast %18 : vector<1x32xf32> to vector<124x32xf32>
    %20 = arith.mulf %17, %19 : vector<124x32xf32>
    %21 = vector.extract_strided_slice %16 {offsets = [1, 0], sizes = [124, 32], strides = [1, 1]} : vector<128x32xf32> to vector<124x32xf32>
    %22 = vector.extract_strided_slice %14 {offsets = [1, 0], sizes = [1, 32], strides = [1, 1]} : vector<5x32xf32> to vector<1x32xf32>
    %23 = vector.broadcast %22 : vector<1x32xf32> to vector<124x32xf32>
    %24 = arith.mulf %21, %23 : vector<124x32xf32>
    %25 = arith.addf %20, %24 : vector<124x32xf32>
    %26 = vector.extract_strided_slice %16 {offsets = [2, 0], sizes = [124, 32], strides = [1, 1]} : vector<128x32xf32> to vector<124x32xf32>
    %27 = vector.extract_strided_slice %14 {offsets = [2, 0], sizes = [1, 32], strides = [1, 1]} : vector<5x32xf32> to vector<1x32xf32>
    %28 = vector.broadcast %27 : vector<1x32xf32> to vector<124x32xf32>
    %29 = arith.mulf %26, %28 : vector<124x32xf32>
    %30 = arith.addf %25, %29 : vector<124x32xf32>
    %31 = vector.extract_strided_slice %16 {offsets = [3, 0], sizes = [124, 32], strides = [1, 1]} : vector<128x32xf32> to vector<124x32xf32>
    %32 = vector.extract_strided_slice %14 {offsets = [3, 0], sizes = [1, 32], strides = [1, 1]} : vector<5x32xf32> to vector<1x32xf32>
    %33 = vector.broadcast %32 : vector<1x32xf32> to vector<124x32xf32>
    %34 = arith.mulf %31, %33 : vector<124x32xf32>
    %35 = arith.addf %30, %34 : vector<124x32xf32>
    %36 = vector.extract_strided_slice %16 {offsets = [4, 0], sizes = [124, 32], strides = [1, 1]} : vector<128x32xf32> to vector<124x32xf32>
    %37 = vector.extract_strided_slice %14 {offsets = [4, 0], sizes = [1, 32], strides = [1, 1]} : vector<5x32xf32> to vector<1x32xf32>
    %38 = vector.broadcast %37 : vector<1x32xf32> to vector<124x32xf32>
    %39 = arith.mulf %36, %38 : vector<124x32xf32>
    %40 = arith.addf %35, %39 : vector<124x32xf32>
    %41 = arith.mulf %40, %9 : vector<124x32xf32>
    %cst = arith.constant dense<0.000000e+00> : vector<32xf32>
    %42 = vector.multi_reduction <add>, %41, %cst [0] : vector<124x32xf32> to vector<32xf32>
    %43 = vector.shape_cast %42 : vector<32xf32> to vector<1x32xf32>
    %cst_8 = arith.constant 0.00833333377 : f32
    %44 = vector.broadcast %cst_8 : f32 to vector<1x32xf32>
    %45 = arith.mulf %43, %44 : vector<1x32xf32>
    %46 = vector.broadcast %45 : vector<1x32xf32> to vector<124x32xf32>
    %47 = arith.subf %40, %46 : vector<124x32xf32>
    %48 = arith.mulf %47, %9 : vector<124x32xf32>
    %49 = arith.mulf %48, %48 : vector<124x32xf32>
    %cst_9 = arith.constant dense<0.000000e+00> : vector<32xf32>
    %50 = vector.multi_reduction <add>, %49, %cst_9 [0] : vector<124x32xf32> to vector<32xf32>
    %51 = vector.shape_cast %50 : vector<32xf32> to vector<1x32xf32>
    %cst_10 = arith.constant 0.00833333377 : f32
    %52 = vector.broadcast %cst_10 : f32 to vector<1x32xf32>
    %53 = arith.mulf %51, %52 : vector<1x32xf32>
    %cst_11 = arith.constant 9.99999974E-6 : f32
    %54 = vector.broadcast %cst_11 : f32 to vector<1x32xf32>
    %55 = arith.addf %53, %54 : vector<1x32xf32>
    %56 = math.rsqrt %55 : vector<1x32xf32>
    %57 = vector.broadcast %45 : vector<1x32xf32> to vector<124x32xf32>
    %58 = arith.subf %40, %57 : vector<124x32xf32>
    %59 = vector.broadcast %56 : vector<1x32xf32> to vector<124x32xf32>
    %60 = arith.mulf %58, %59 : vector<124x32xf32>
    %61 = vector.broadcast %10 : vector<1x32xf32> to vector<124x32xf32>
    %62 = arith.mulf %60, %61 : vector<124x32xf32>
    %63 = vector.broadcast %11 : vector<1x32xf32> to vector<124x32xf32>
    %64 = arith.addf %62, %63 : vector<124x32xf32>
    %65 = math.tanh %64 : vector<124x32xf32>
    %66 = arith.mulf %65, %9 : vector<124x32xf32>
    %cst_12 = arith.constant 0.000000e+00 : f32
    %67 = vector.broadcast %cst_12 : f32 to vector<4x32xf32>
    %68 = vector.extract_strided_slice %66 {offsets = [0, 0], sizes = [120, 32], strides = [1, 1]} : vector<124x32xf32> to vector<120x32xf32>
    %69 = tpu.concatenate %67, %68 in 0 : vector<4x32xf32>, vector<120x32xf32> -> vector<124x32xf32>
    %cst_13 = arith.constant 0.000000e+00 : f32
    %70 = vector.broadcast %cst_13 : f32 to vector<3x32xf32>
    %71 = vector.extract_strided_slice %66 {offsets = [0, 0], sizes = [121, 32], strides = [1, 1]} : vector<124x32xf32> to vector<121x32xf32>
    %72 = tpu.concatenate %70, %71 in 0 : vector<3x32xf32>, vector<121x32xf32> -> vector<124x32xf32>
    %cst_14 = arith.constant 0.000000e+00 : f32
    %73 = vector.broadcast %cst_14 : f32 to vector<2x32xf32>
    %74 = vector.extract_strided_slice %66 {offsets = [0, 0], sizes = [122, 32], strides = [1, 1]} : vector<124x32xf32> to vector<122x32xf32>
    %75 = tpu.concatenate %73, %74 in 0 : vector<2x32xf32>, vector<122x32xf32> -> vector<124x32xf32>
    %cst_15 = arith.constant 0.000000e+00 : f32
    %76 = vector.broadcast %cst_15 : f32 to vector<1x32xf32>
    %77 = vector.extract_strided_slice %66 {offsets = [0, 0], sizes = [123, 32], strides = [1, 1]} : vector<124x32xf32> to vector<123x32xf32>
    %78 = tpu.concatenate %76, %77 in 0 : vector<1x32xf32>, vector<123x32xf32> -> vector<124x32xf32>
    %79 = tpu.concatenate %69, %72, %75, %78, %66 in 1 : vector<124x32xf32>, vector<124x32xf32>, vector<124x32xf32>, vector<124x32xf32>, vector<124x32xf32> -> vector<124x160xf32>
    %c8 = arith.constant 8 : index
    %c0_16 = arith.constant 0 : index
    %80 = vector.load %arg1[%c8, %c0_16] : memref<536x32xf32, #tpu.memory_space<vmem>>, vector<160x32xf32>
    %cst_17 = arith.constant dense<0.000000e+00> : vector<124x32xf32>
    %81 = tpu.matmul %79, %80, %cst_17 {dimension_numbers = #tpu.dot_dimension_numbers<[1], [0], [0], [1], [0, 0, 1, 1], [], []>} : vector<124x160xf32>, vector<160x32xf32>, vector<124x32xf32> -> vector<124x32xf32>
    %82 = arith.mulf %81, %9 : vector<124x32xf32>
    %cst_18 = arith.constant dense<0.000000e+00> : vector<32xf32>
    %83 = vector.multi_reduction <add>, %82, %cst_18 [0] : vector<124x32xf32> to vector<32xf32>
    %84 = vector.shape_cast %83 : vector<32xf32> to vector<1x32xf32>
    %cst_19 = arith.constant 0.00833333377 : f32
    %85 = vector.broadcast %cst_19 : f32 to vector<1x32xf32>
    %86 = arith.mulf %84, %85 : vector<1x32xf32>
    %87 = vector.broadcast %86 : vector<1x32xf32> to vector<124x32xf32>
    %88 = arith.subf %81, %87 : vector<124x32xf32>
    %89 = arith.mulf %88, %9 : vector<124x32xf32>
    %90 = arith.mulf %89, %89 : vector<124x32xf32>
    %cst_20 = arith.constant dense<0.000000e+00> : vector<32xf32>
    %91 = vector.multi_reduction <add>, %90, %cst_20 [0] : vector<124x32xf32> to vector<32xf32>
    %92 = vector.shape_cast %91 : vector<32xf32> to vector<1x32xf32>
    %cst_21 = arith.constant 0.00833333377 : f32
    %93 = vector.broadcast %cst_21 : f32 to vector<1x32xf32>
    %94 = arith.mulf %92, %93 : vector<1x32xf32>
    %cst_22 = arith.constant 9.99999974E-6 : f32
    %95 = vector.broadcast %cst_22 : f32 to vector<1x32xf32>
    %96 = arith.addf %94, %95 : vector<1x32xf32>
    %97 = math.rsqrt %96 : vector<1x32xf32>
    %98 = vector.broadcast %86 : vector<1x32xf32> to vector<124x32xf32>
    %99 = arith.subf %81, %98 : vector<124x32xf32>
    %100 = vector.broadcast %97 : vector<1x32xf32> to vector<124x32xf32>
    %101 = arith.mulf %99, %100 : vector<124x32xf32>
    %102 = vector.broadcast %12 : vector<1x32xf32> to vector<124x32xf32>
    %103 = arith.mulf %101, %102 : vector<124x32xf32>
    %104 = vector.broadcast %13 : vector<1x32xf32> to vector<124x32xf32>
    %105 = arith.addf %103, %104 : vector<124x32xf32>
    %106 = math.tanh %105 : vector<124x32xf32>
    %107 = arith.mulf %106, %9 : vector<124x32xf32>
    %cst_23 = arith.constant 0.000000e+00 : f32
    %108 = vector.broadcast %cst_23 : f32 to vector<4x32xf32>
    %109 = tpu.concatenate %108, %107 in 0 : vector<4x32xf32>, vector<124x32xf32> -> vector<128x32xf32>
    %c0_24 = arith.constant 0 : index
    %c0_25 = arith.constant 0 : index
    %110 = vector.load %arg4[%c0_24, %c0_25] : memref<128x32xf32, #tpu.memory_space<vmem>>, vector<128x32xf32>
    tpu.vector_store %arg4[%c0_24, %c0_25], %109 {strides = array<i32>} : memref<128x32xf32, #tpu.memory_space<vmem>>, vector<128x32xf32>,
    %c0_26 = arith.constant 0 : index
    %c0_27 = arith.constant 0 : index
    %111 = tpu.strided_load %arg4[%c0_26, %c0_27] {strides = array<i32: 2, 1>} : memref<128x32xf32, #tpu.memory_space<vmem>>, vector<64x32xf32>
    %c1_28 = arith.constant 1 : index
    %c0_29 = arith.constant 0 : index
    %112 = tpu.strided_load %arg4[%c1_28, %c0_29] {strides = array<i32: 2, 1>} : memref<128x32xf32, #tpu.memory_space<vmem>>, vector<64x32xf32>
    %113 = arith.maximumf %111, %112 : vector<64x32xf32>
    %114 = tpu.iota {dimensions = array<i32: 0>} : vector<60x1xi32>
    %c31_i32 = arith.constant 31 : i32
    %115 = vector.broadcast %c31_i32 : i32 to vector<60x1xi32>
    %116 = arith.andi %114, %115 : vector<60x1xi32>
    %c28_i32 = arith.constant 28 : i32
    %117 = vector.broadcast %c28_i32 : i32 to vector<60x1xi32>
    %118 = arith.cmpi slt, %116, %117 : vector<60x1xi32>
    %119 = arith.extui %118 : vector<60x1xi1> to vector<60x1xi32>
    %120 = arith.sitofp %119 : vector<60x1xi32> to vector<60x1xf32>
    %121 = vector.shape_cast %120 : vector<60x1xf32> to vector<60x1xf32>
    %122 = vector.broadcast %121 : vector<60x1xf32> to vector<60x16xf32>
    %c4 = arith.constant 4 : index
    %c0_30 = arith.constant 0 : index
    %123 = vector.load %arg2[%c4, %c0_30] : memref<16x32xf32, #tpu.memory_space<vmem>>, vector<1x16xf32>
    %c5 = arith.constant 5 : index
    %c0_31 = arith.constant 0 : index
    %124 = vector.load %arg2[%c5, %c0_31] : memref<16x32xf32, #tpu.memory_space<vmem>>, vector<1x16xf32>
    %c6 = arith.constant 6 : index
    %c0_32 = arith.constant 0 : index
    %125 = vector.load %arg2[%c6, %c0_32] : memref<16x32xf32, #tpu.memory_space<vmem>>, vector<1x16xf32>
    %c7 = arith.constant 7 : index
    %c0_33 = arith.constant 0 : index
    %126 = vector.load %arg2[%c7, %c0_33] : memref<16x32xf32, #tpu.memory_space<vmem>>, vector<1x16xf32>
    %127 = vector.extract_strided_slice %113 {offsets = [0, 0], sizes = [60, 32], strides = [1, 1]} : vector<64x32xf32> to vector<60x32xf32>
    %128 = vector.extract_strided_slice %113 {offsets = [1, 0], sizes = [60, 32], strides = [1, 1]} : vector<64x32xf32> to vector<60x32xf32>
    %129 = vector.extract_strided_slice %113 {offsets = [2, 0], sizes = [60, 32], strides = [1, 1]} : vector<64x32xf32> to vector<60x32xf32>
    %130 = vector.extract_strided_slice %113 {offsets = [3, 0], sizes = [60, 32], strides = [1, 1]} : vector<64x32xf32> to vector<60x32xf32>
    %131 = vector.extract_strided_slice %113 {offsets = [4, 0], sizes = [60, 32], strides = [1, 1]} : vector<64x32xf32> to vector<60x32xf32>
    %132 = tpu.concatenate %127, %128, %129, %130, %131 in 1 : vector<60x32xf32>, vector<60x32xf32>, vector<60x32xf32>, vector<60x32xf32>, vector<60x32xf32> -> vector<60x160xf32>
    %c168 = arith.constant 168 : index
    %c0_34 = arith.constant 0 : index
    %133 = vector.load %arg1[%c168, %c0_34] : memref<536x32xf32, #tpu.memory_space<vmem>>, vector<160x16xf32>
    %cst_35 = arith.constant dense<0.000000e+00> : vector<60x16xf32>
    %134 = tpu.matmul %132, %133, %cst_35 {dimension_numbers = #tpu.dot_dimension_numbers<[1], [0], [0], [1], [0, 0, 1, 1], [], []>} : vector<60x160xf32>, vector<160x16xf32>, vector<60x16xf32> -> vector<60x16xf32>
    %135 = arith.mulf %134, %122 : vector<60x16xf32>
    %cst_36 = arith.constant dense<0.000000e+00> : vector<16xf32>
    %136 = vector.multi_reduction <add>, %135, %cst_36 [0] : vector<60x16xf32> to vector<16xf32>
    %137 = vector.shape_cast %136 : vector<16xf32> to vector<1x16xf32>
    %cst_37 = arith.constant 0.0178571437 : f32
    %138 = vector.broadcast %cst_37 : f32 to vector<1x16xf32>
    %139 = arith.mulf %137, %138 : vector<1x16xf32>
    %140 = vector.broadcast %139 : vector<1x16xf32> to vector<60x16xf32>
    %141 = arith.subf %134, %140 : vector<60x16xf32>
    %142 = arith.mulf %141, %122 : vector<60x16xf32>
    %143 = arith.mulf %142, %142 : vector<60x16xf32>
    %cst_38 = arith.constant dense<0.000000e+00> : vector<16xf32>
    %144 = vector.multi_reduction <add>, %143, %cst_38 [0] : vector<60x16xf32> to vector<16xf32>
    %145 = vector.shape_cast %144 : vector<16xf32> to vector<1x16xf32>
    %cst_39 = arith.constant 0.0178571437 : f32
    %146 = vector.broadcast %cst_39 : f32 to vector<1x16xf32>
    %147 = arith.mulf %145, %146 : vector<1x16xf32>
    %cst_40 = arith.constant 9.99999974E-6 : f32
    %148 = vector.broadcast %cst_40 : f32 to vector<1x16xf32>
    %149 = arith.addf %147, %148 : vector<1x16xf32>
    %150 = math.rsqrt %149 : vector<1x16xf32>
    %151 = vector.broadcast %139 : vector<1x16xf32> to vector<60x16xf32>
    %152 = arith.subf %134, %151 : vector<60x16xf32>
    %153 = vector.broadcast %150 : vector<1x16xf32> to vector<60x16xf32>
    %154 = arith.mulf %152, %153 : vector<60x16xf32>
    %155 = vector.broadcast %123 : vector<1x16xf32> to vector<60x16xf32>
    %156 = arith.mulf %154, %155 : vector<60x16xf32>
    %157 = vector.broadcast %124 : vector<1x16xf32> to vector<60x16xf32>
    %158 = arith.addf %156, %157 : vector<60x16xf32>
    %159 = math.tanh %158 : vector<60x16xf32>
    %160 = arith.mulf %159, %122 : vector<60x16xf32>
    %cst_41 = arith.constant 0.000000e+00 : f32
    %161 = vector.broadcast %cst_41 : f32 to vector<4x16xf32>
    %162 = vector.extract_strided_slice %160 {offsets = [0, 0], sizes = [56, 16], strides = [1, 1]} : vector<60x16xf32> to vector<56x16xf32>
    %163 = tpu.concatenate %161, %162 in 0 : vector<4x16xf32>, vector<56x16xf32> -> vector<60x16xf32>
    %cst_42 = arith.constant 0.000000e+00 : f32
    %164 = vector.broadcast %cst_42 : f32 to vector<3x16xf32>
    %165 = vector.extract_strided_slice %160 {offsets = [0, 0], sizes = [57, 16], strides = [1, 1]} : vector<60x16xf32> to vector<57x16xf32>
    %166 = tpu.concatenate %164, %165 in 0 : vector<3x16xf32>, vector<57x16xf32> -> vector<60x16xf32>
    %cst_43 = arith.constant 0.000000e+00 : f32
    %167 = vector.broadcast %cst_43 : f32 to vector<2x16xf32>
    %168 = vector.extract_strided_slice %160 {offsets = [0, 0], sizes = [58, 16], strides = [1, 1]} : vector<60x16xf32> to vector<58x16xf32>
    %169 = tpu.concatenate %167, %168 in 0 : vector<2x16xf32>, vector<58x16xf32> -> vector<60x16xf32>
    %cst_44 = arith.constant 0.000000e+00 : f32
    %170 = vector.broadcast %cst_44 : f32 to vector<1x16xf32>
    %171 = vector.extract_strided_slice %160 {offsets = [0, 0], sizes = [59, 16], strides = [1, 1]} : vector<60x16xf32> to vector<59x16xf32>
    %172 = tpu.concatenate %170, %171 in 0 : vector<1x16xf32>, vector<59x16xf32> -> vector<60x16xf32>
    %173 = tpu.concatenate %163, %166, %169, %172, %160 in 1 : vector<60x16xf32>, vector<60x16xf32>, vector<60x16xf32>, vector<60x16xf32>, vector<60x16xf32> -> vector<60x80xf32>
    %c328 = arith.constant 328 : index
    %c0_45 = arith.constant 0 : index
    %174 = vector.load %arg1[%c328, %c0_45] : memref<536x32xf32, #tpu.memory_space<vmem>>, vector<80x16xf32>
    %cst_46 = arith.constant dense<0.000000e+00> : vector<60x16xf32>
    %175 = tpu.matmul %173, %174, %cst_46 {dimension_numbers = #tpu.dot_dimension_numbers<[1], [0], [0], [1], [0, 0, 1, 1], [], []>} : vector<60x80xf32>, vector<80x16xf32>, vector<60x16xf32> -> vector<60x16xf32>
    %176 = arith.mulf %175, %122 : vector<60x16xf32>
    %cst_47 = arith.constant dense<0.000000e+00> : vector<16xf32>
    %177 = vector.multi_reduction <add>, %176, %cst_47 [0] : vector<60x16xf32> to vector<16xf32>
    %178 = vector.shape_cast %177 : vector<16xf32> to vector<1x16xf32>
    %cst_48 = arith.constant 0.0178571437 : f32
    %179 = vector.broadcast %cst_48 : f32 to vector<1x16xf32>
    %180 = arith.mulf %178, %179 : vector<1x16xf32>
    %181 = vector.broadcast %180 : vector<1x16xf32> to vector<60x16xf32>
    %182 = arith.subf %175, %181 : vector<60x16xf32>
    %183 = arith.mulf %182, %122 : vector<60x16xf32>
    %184 = arith.mulf %183, %183 : vector<60x16xf32>
    %cst_49 = arith.constant dense<0.000000e+00> : vector<16xf32>
    %185 = vector.multi_reduction <add>, %184, %cst_49 [0] : vector<60x16xf32> to vector<16xf32>
    %186 = vector.shape_cast %185 : vector<16xf32> to vector<1x16xf32>
    %cst_50 = arith.constant 0.0178571437 : f32
    %187 = vector.broadcast %cst_50 : f32 to vector<1x16xf32>
    %188 = arith.mulf %186, %187 : vector<1x16xf32>
    %cst_51 = arith.constant 9.99999974E-6 : f32
    %189 = vector.broadcast %cst_51 : f32 to vector<1x16xf32>
    %190 = arith.addf %188, %189 : vector<1x16xf32>
    %191 = math.rsqrt %190 : vector<1x16xf32>
    %192 = vector.broadcast %180 : vector<1x16xf32> to vector<60x16xf32>
    %193 = arith.subf %175, %192 : vector<60x16xf32>
    %194 = vector.broadcast %191 : vector<1x16xf32> to vector<60x16xf32>
    %195 = arith.mulf %193, %194 : vector<60x16xf32>
    %196 = vector.broadcast %125 : vector<1x16xf32> to vector<60x16xf32>
    %197 = arith.mulf %195, %196 : vector<60x16xf32>
    %198 = vector.broadcast %126 : vector<1x16xf32> to vector<60x16xf32>
    %199 = arith.addf %197, %198 : vector<60x16xf32>
    %200 = math.tanh %199 : vector<60x16xf32>
    %201 = arith.mulf %200, %122 : vector<60x16xf32>
    %cst_52 = arith.constant 0.000000e+00 : f32
    %202 = vector.broadcast %cst_52 : f32 to vector<4x16xf32>
    %203 = tpu.concatenate %202, %201 in 0 : vector<4x16xf32>, vector<60x16xf32> -> vector<64x16xf32>
    %c0_53 = arith.constant 0 : index
    %c0_54 = arith.constant 0 : index
    %204 = vector.load %arg5[%c0_53, %c0_54] : memref<64x16xf32, #tpu.memory_space<vmem>>, vector<64x16xf32>
    tpu.vector_store %arg5[%c0_53, %c0_54], %203 {strides = array<i32>} : memref<64x16xf32, #tpu.memory_space<vmem>>, vector<64x16xf32>,
    %c0_55 = arith.constant 0 : index
    %c0_56 = arith.constant 0 : index
    %205 = tpu.strided_load %arg5[%c0_55, %c0_56] {strides = array<i32: 2, 1>} : memref<64x16xf32, #tpu.memory_space<vmem>>, vector<32x16xf32>
    %c1_57 = arith.constant 1 : index
    %c0_58 = arith.constant 0 : index
    %206 = tpu.strided_load %arg5[%c1_57, %c0_58] {strides = array<i32: 2, 1>} : memref<64x16xf32, #tpu.memory_space<vmem>>, vector<32x16xf32>
    %207 = arith.maximumf %205, %206 : vector<32x16xf32>
    %208 = tpu.iota {dimensions = array<i32: 0>} : vector<28x1xi32>
    %c15_i32 = arith.constant 15 : i32
    %209 = vector.broadcast %c15_i32 : i32 to vector<28x1xi32>
    %210 = arith.andi %208, %209 : vector<28x1xi32>
    %c12_i32 = arith.constant 12 : i32
    %211 = vector.broadcast %c12_i32 : i32 to vector<28x1xi32>
    %212 = arith.cmpi slt, %210, %211 : vector<28x1xi32>
    %213 = arith.extui %212 : vector<28x1xi1> to vector<28x1xi32>
    %214 = arith.sitofp %213 : vector<28x1xi32> to vector<28x1xf32>
    %215 = vector.shape_cast %214 : vector<28x1xf32> to vector<28x1xf32>
    %216 = vector.broadcast %215 : vector<28x1xf32> to vector<28x8xf32>
    %c8_59 = arith.constant 8 : index
    %c0_60 = arith.constant 0 : index
    %217 = vector.load %arg2[%c8_59, %c0_60] : memref<16x32xf32, #tpu.memory_space<vmem>>, vector<1x8xf32>
    %c9 = arith.constant 9 : index
    %c0_61 = arith.constant 0 : index
    %218 = vector.load %arg2[%c9, %c0_61] : memref<16x32xf32, #tpu.memory_space<vmem>>, vector<1x8xf32>
    %c10 = arith.constant 10 : index
    %c0_62 = arith.constant 0 : index
    %219 = vector.load %arg2[%c10, %c0_62] : memref<16x32xf32, #tpu.memory_space<vmem>>, vector<1x8xf32>
    %c11 = arith.constant 11 : index
    %c0_63 = arith.constant 0 : index
    %220 = vector.load %arg2[%c11, %c0_63] : memref<16x32xf32, #tpu.memory_space<vmem>>, vector<1x8xf32>
    %221 = vector.extract_strided_slice %207 {offsets = [0, 0], sizes = [28, 16], strides = [1, 1]} : vector<32x16xf32> to vector<28x16xf32>
    %222 = vector.extract_strided_slice %207 {offsets = [1, 0], sizes = [28, 16], strides = [1, 1]} : vector<32x16xf32> to vector<28x16xf32>
    %223 = vector.extract_strided_slice %207 {offsets = [2, 0], sizes = [28, 16], strides = [1, 1]} : vector<32x16xf32> to vector<28x16xf32>
    %224 = vector.extract_strided_slice %207 {offsets = [3, 0], sizes = [28, 16], strides = [1, 1]} : vector<32x16xf32> to vector<28x16xf32>
    %225 = vector.extract_strided_slice %207 {offsets = [4, 0], sizes = [28, 16], strides = [1, 1]} : vector<32x16xf32> to vector<28x16xf32>
    %226 = tpu.concatenate %221, %222, %223, %224, %225 in 1 : vector<28x16xf32>, vector<28x16xf32>, vector<28x16xf32>, vector<28x16xf32>, vector<28x16xf32> -> vector<28x80xf32>
    %c408 = arith.constant 408 : index
    %c0_64 = arith.constant 0 : index
    %227 = vector.load %arg1[%c408, %c0_64] : memref<536x32xf32, #tpu.memory_space<vmem>>, vector<80x8xf32>
    %cst_65 = arith.constant dense<0.000000e+00> : vector<28x8xf32>
    %228 = tpu.matmul %226, %227, %cst_65 {dimension_numbers = #tpu.dot_dimension_numbers<[1], [0], [0], [1], [0, 0, 1, 1], [], []>} : vector<28x80xf32>, vector<80x8xf32>, vector<28x8xf32> -> vector<28x8xf32>
    %229 = arith.mulf %228, %216 : vector<28x8xf32>
    %cst_66 = arith.constant dense<0.000000e+00> : vector<8xf32>
    %230 = vector.multi_reduction <add>, %229, %cst_66 [0] : vector<28x8xf32> to vector<8xf32>
    %231 = vector.shape_cast %230 : vector<8xf32> to vector<1x8xf32>
    %cst_67 = arith.constant 0.0416666679 : f32
    %232 = vector.broadcast %cst_67 : f32 to vector<1x8xf32>
    %233 = arith.mulf %231, %232 : vector<1x8xf32>
    %234 = vector.broadcast %233 : vector<1x8xf32> to vector<28x8xf32>
    %235 = arith.subf %228, %234 : vector<28x8xf32>
    %236 = arith.mulf %235, %216 : vector<28x8xf32>
    %237 = arith.mulf %236, %236 : vector<28x8xf32>
    %cst_68 = arith.constant dense<0.000000e+00> : vector<8xf32>
    %238 = vector.multi_reduction <add>, %237, %cst_68 [0] : vector<28x8xf32> to vector<8xf32>
    %239 = vector.shape_cast %238 : vector<8xf32> to vector<1x8xf32>
    %cst_69 = arith.constant 0.0416666679 : f32
    %240 = vector.broadcast %cst_69 : f32 to vector<1x8xf32>
    %241 = arith.mulf %239, %240 : vector<1x8xf32>
    %cst_70 = arith.constant 9.99999974E-6 : f32
    %242 = vector.broadcast %cst_70 : f32 to vector<1x8xf32>
    %243 = arith.addf %241, %242 : vector<1x8xf32>
    %244 = math.rsqrt %243 : vector<1x8xf32>
    %245 = vector.broadcast %233 : vector<1x8xf32> to vector<28x8xf32>
    %246 = arith.subf %228, %245 : vector<28x8xf32>
    %247 = vector.broadcast %244 : vector<1x8xf32> to vector<28x8xf32>
    %248 = arith.mulf %246, %247 : vector<28x8xf32>
    %249 = vector.broadcast %217 : vector<1x8xf32> to vector<28x8xf32>
    %250 = arith.mulf %248, %249 : vector<28x8xf32>
    %251 = vector.broadcast %218 : vector<1x8xf32> to vector<28x8xf32>
    %252 = arith.addf %250, %251 : vector<28x8xf32>
    %253 = math.tanh %252 : vector<28x8xf32>
    %254 = arith.mulf %253, %216 : vector<28x8xf32>
    %cst_71 = arith.constant 0.000000e+00 : f32
    %255 = vector.broadcast %cst_71 : f32 to vector<4x8xf32>
    %256 = vector.extract_strided_slice %254 {offsets = [0, 0], sizes = [24, 8], strides = [1, 1]} : vector<28x8xf32> to vector<24x8xf32>
    %257 = tpu.concatenate %255, %256 in 0 : vector<4x8xf32>, vector<24x8xf32> -> vector<28x8xf32>
    %cst_72 = arith.constant 0.000000e+00 : f32
    %258 = vector.broadcast %cst_72 : f32 to vector<3x8xf32>
    %259 = vector.extract_strided_slice %254 {offsets = [0, 0], sizes = [25, 8], strides = [1, 1]} : vector<28x8xf32> to vector<25x8xf32>
    %260 = tpu.concatenate %258, %259 in 0 : vector<3x8xf32>, vector<25x8xf32> -> vector<28x8xf32>
    %cst_73 = arith.constant 0.000000e+00 : f32
    %261 = vector.broadcast %cst_73 : f32 to vector<2x8xf32>
    %262 = vector.extract_strided_slice %254 {offsets = [0, 0], sizes = [26, 8], strides = [1, 1]} : vector<28x8xf32> to vector<26x8xf32>
    %263 = tpu.concatenate %261, %262 in 0 : vector<2x8xf32>, vector<26x8xf32> -> vector<28x8xf32>
    %cst_74 = arith.constant 0.000000e+00 : f32
    %264 = vector.broadcast %cst_74 : f32 to vector<1x8xf32>
    %265 = vector.extract_strided_slice %254 {offsets = [0, 0], sizes = [27, 8], strides = [1, 1]} : vector<28x8xf32> to vector<27x8xf32>
    %266 = tpu.concatenate %264, %265 in 0 : vector<1x8xf32>, vector<27x8xf32> -> vector<28x8xf32>
    %267 = tpu.concatenate %257, %260, %263, %266, %254 in 1 : vector<28x8xf32>, vector<28x8xf32>, vector<28x8xf32>, vector<28x8xf32>, vector<28x8xf32> -> vector<28x40xf32>
    %c488 = arith.constant 488 : index
    %c0_75 = arith.constant 0 : index
    %268 = vector.load %arg1[%c488, %c0_75] : memref<536x32xf32, #tpu.memory_space<vmem>>, vector<40x8xf32>
    %cst_76 = arith.constant dense<0.000000e+00> : vector<28x8xf32>
    %269 = tpu.matmul %267, %268, %cst_76 {dimension_numbers = #tpu.dot_dimension_numbers<[1], [0], [0], [1], [0, 0, 1, 1], [], []>} : vector<28x40xf32>, vector<40x8xf32>, vector<28x8xf32> -> vector<28x8xf32>
    %270 = arith.mulf %269, %216 : vector<28x8xf32>
    %cst_77 = arith.constant dense<0.000000e+00> : vector<8xf32>
    %271 = vector.multi_reduction <add>, %270, %cst_77 [0] : vector<28x8xf32> to vector<8xf32>
    %272 = vector.shape_cast %271 : vector<8xf32> to vector<1x8xf32>
    %cst_78 = arith.constant 0.0416666679 : f32
    %273 = vector.broadcast %cst_78 : f32 to vector<1x8xf32>
    %274 = arith.mulf %272, %273 : vector<1x8xf32>
    %275 = vector.broadcast %274 : vector<1x8xf32> to vector<28x8xf32>
    %276 = arith.subf %269, %275 : vector<28x8xf32>
    %277 = arith.mulf %276, %216 : vector<28x8xf32>
    %278 = arith.mulf %277, %277 : vector<28x8xf32>
    %cst_79 = arith.constant dense<0.000000e+00> : vector<8xf32>
    %279 = vector.multi_reduction <add>, %278, %cst_79 [0] : vector<28x8xf32> to vector<8xf32>
    %280 = vector.shape_cast %279 : vector<8xf32> to vector<1x8xf32>
    %cst_80 = arith.constant 0.0416666679 : f32
    %281 = vector.broadcast %cst_80 : f32 to vector<1x8xf32>
    %282 = arith.mulf %280, %281 : vector<1x8xf32>
    %cst_81 = arith.constant 9.99999974E-6 : f32
    %283 = vector.broadcast %cst_81 : f32 to vector<1x8xf32>
    %284 = arith.addf %282, %283 : vector<1x8xf32>
    %285 = math.rsqrt %284 : vector<1x8xf32>
    %286 = vector.broadcast %274 : vector<1x8xf32> to vector<28x8xf32>
    %287 = arith.subf %269, %286 : vector<28x8xf32>
    %288 = vector.broadcast %285 : vector<1x8xf32> to vector<28x8xf32>
    %289 = arith.mulf %287, %288 : vector<28x8xf32>
    %290 = vector.broadcast %219 : vector<1x8xf32> to vector<28x8xf32>
    %291 = arith.mulf %289, %290 : vector<28x8xf32>
    %292 = vector.broadcast %220 : vector<1x8xf32> to vector<28x8xf32>
    %293 = arith.addf %291, %292 : vector<28x8xf32>
    %294 = math.tanh %293 : vector<28x8xf32>
    %295 = arith.mulf %294, %216 : vector<28x8xf32>
    %cst_82 = arith.constant 0.000000e+00 : f32
    %296 = vector.broadcast %cst_82 : f32 to vector<4x8xf32>
    %297 = tpu.concatenate %296, %295 in 0 : vector<4x8xf32>, vector<28x8xf32> -> vector<32x8xf32>
    %c0_83 = arith.constant 0 : index
    %c0_84 = arith.constant 0 : index
    %298 = vector.load %arg6[%c0_83, %c0_84] : memref<32x8xf32, #tpu.memory_space<vmem>>, vector<32x8xf32>
    tpu.vector_store %arg6[%c0_83, %c0_84], %297 {strides = array<i32>} : memref<32x8xf32, #tpu.memory_space<vmem>>, vector<32x8xf32>,
    %c0_85 = arith.constant 0 : index
    %c0_86 = arith.constant 0 : index
    %299 = tpu.strided_load %arg6[%c0_85, %c0_86] {strides = array<i32: 2, 1>} : memref<32x8xf32, #tpu.memory_space<vmem>>, vector<16x8xf32>
    %c1_87 = arith.constant 1 : index
    %c0_88 = arith.constant 0 : index
    %300 = tpu.strided_load %arg6[%c1_87, %c0_88] {strides = array<i32: 2, 1>} : memref<32x8xf32, #tpu.memory_space<vmem>>, vector<16x8xf32>
    %301 = arith.maximumf %299, %300 : vector<16x8xf32>
    %302 = vector.shape_cast %301 : vector<16x8xf32> to vector<2x8x8xf32>
    %cst_89 = arith.constant dense<0.000000e+00> : vector<2x8xf32>
    %303 = vector.multi_reduction <add>, %302, %cst_89 [1] : vector<2x8x8xf32> to vector<2x8xf32>
    %cst_90 = arith.constant 1.250000e-01 : f32
    %304 = vector.broadcast %cst_90 : f32 to vector<2x8xf32>
    %305 = arith.mulf %303, %304 : vector<2x8xf32>
    %c528 = arith.constant 528 : index
    %c0_91 = arith.constant 0 : index
    %306 = vector.load %arg1[%c528, %c0_91] : memref<536x32xf32, #tpu.memory_space<vmem>>, vector<8x5xf32>
    %c12 = arith.constant 12 : index
    %c0_92 = arith.constant 0 : index
    %307 = vector.load %arg2[%c12, %c0_92] : memref<16x32xf32, #tpu.memory_space<vmem>>, vector<1x5xf32>
    %cst_93 = arith.constant dense<0.000000e+00> : vector<2x5xf32>
    %308 = tpu.matmul %305, %306, %cst_93 {dimension_numbers = #tpu.dot_dimension_numbers<[1], [0], [0], [1], [0, 0, 1, 1], [], []>} : vector<2x8xf32>, vector<8x5xf32>, vector<2x5xf32> -> vector<2x5xf32>
    %309 = vector.broadcast %307 : vector<1x5xf32> to vector<2x5xf32>
    %310 = arith.addf %308, %309 : vector<2x5xf32>
    %cst_94 = arith.constant dense<0xFF800000> : vector<2xf32>
    %311 = vector.multi_reduction <maximumf>, %310, %cst_94 [1] : vector<2x5xf32> to vector<2xf32>
    %312 = vector.shape_cast %311 : vector<2xf32> to vector<2x1xf32>
    %313 = vector.broadcast %312 : vector<2x1xf32> to vector<2x5xf32>
    %314 = arith.subf %310, %313 : vector<2x5xf32>
    %315 = math.exp %314 : vector<2x5xf32>
    %cst_95 = arith.constant dense<0.000000e+00> : vector<2xf32>
    %316 = vector.multi_reduction <add>, %315, %cst_95 [1] : vector<2x5xf32> to vector<2xf32>
    %317 = vector.shape_cast %316 : vector<2xf32> to vector<2x1xf32>
    %318 = vector.broadcast %317 : vector<2x1xf32> to vector<2x5xf32>
    %319 = arith.divf %315, %318 : vector<2x5xf32>
    %c0_96 = arith.constant 0 : index
    %c0_97 = arith.constant 0 : index
    %320 = vector.load %arg3[%c0_96, %c0_97] : memref<2x5xf32, #tpu.memory_space<vmem>>, vector<2x5xf32>
    tpu.vector_store %arg3[%c0_96, %c0_97], %319 {strides = array<i32>} : memref<2x5xf32, #tpu.memory_space<vmem>>, vector<2x5xf32>,
    return
  }
}

</mosaic_0001>

<llo_original>
// kernel: tpu_custom_call.1
$region0: #{tpu_custom_call.1}
  #allocation0 [shape = 'u32[]', space=smem, size = 0x4, offset = 0x4, fixed_abs, tag = 'smem constant byte address 0x4 - core index']
  #allocation1 [shape = 'u32[72,128]{1,0:T(1,128)}', space=vmem, size = 0x9000, scoped, tag = 'internal scratch']
  #allocation2 [shape = 'f32[128,32]{1,0:T(8,128)}', space=vmem, size = 0x10000, scoped, tag = 'scratch operand']
  #allocation3 [shape = 'f32[64,16]{1,0:T(8,128)}', space=vmem, size = 0x8000, scoped, tag = 'scratch operand']
  #allocation4 [shape = 'f32[32,8]{1,0:T(8,128)}', space=vmem, size = 0x4000, scoped, tag = 'scratch operand']
  %s0 = inlined_call_operand.vmem [shape: f32[128,1], index: 0, kind: input, shape index: {}]
  %s1 = inlined_call_operand.vmem [shape: f32[536,32], index: 1, kind: input, shape index: {}]
  %s2 = inlined_call_operand.vmem [shape: f32[16,32], index: 2, kind: input, shape index: {}]
  %s3 = inlined_call_operand.hbm [shape: f32[2,5], index: 3, kind: output, shape index: {}]
  %s4 = sld [smem:[#allocation0]]
  $region22: #{tpu_custom_call.1} parent=0
    _
  %s6 = ssub.s32 1, %s4
  %s7 = scalar_select 0, %s6, %s4
  $region1: #{tpu_custom_call.1} parent=0
    #allocation5 [shape = 'u8[1024]{0}', space=vmem, size = 0x400, scoped, tag = 'output window, operand 0, single buffered']
    #allocation6 [shape = 's32[1]{0}', space=sflag, size = 0x4, scoped, tag = 'scoped memory for tpu_custom_call.1']
    %8 = vsyncpa [#allocation6], 0
    // Predicated region
    $region2: #{tpu_custom_call.1} parent=1 // pred_check
      _
    $region3: #{tpu_custom_call.1} parent=1 // pred_check_branch
      %10 = sbr.rel (0) target = $region5
    $region4: #{tpu_custom_call.1} parent=1 // pred_region
      _
    $region5: #{tpu_custom_call.1} parent=1 // pred_fallthru
      _
    // Predicated region
    $region6: #{tpu_custom_call.1} parent=1 // pred_check
      _
    $region7: #{tpu_custom_call.1} parent=1 // pred_check_branch
      %12 = sbr.rel (0) target = $region9
    $region8: #{tpu_custom_call.1} parent=1 // pred_region
      _
    $region9: #{tpu_custom_call.1} parent=1 // pred_fallthru
      _
    // Predicated region
    $region10: #{tpu_custom_call.1} parent=1 // pred_check
      _
    $region11: #{tpu_custom_call.1} parent=1 // pred_check_branch
      %14 = sbr.rel (0) target = $region13
    $region12: #{tpu_custom_call.1} parent=1 // pred_region
      _
    $region13: #{tpu_custom_call.1} parent=1 // pred_fallthru
      _
    %v15 = vld [vmem:[%s0] sm:$0xff]
    %v16 = vld [vmem:[%s0 + $0x8] sm:$0xff]
    %v17 = vld [vmem:[%s0 + $0x10] sm:$0xff]
    %v18 = vld [vmem:[%s0 + $0x18] sm:$0xff]
    %v19 = vld [vmem:[%s0 + $0x20] sm:$0xff]
    %v20 = vld [vmem:[%s0 + $0x28] sm:$0xff]
    %v21 = vld [vmem:[%s0 + $0x30] sm:$0xff]
    %v22 = vld [vmem:[%s0 + $0x38] sm:$0xff]
    %v23 = vld [vmem:[%s0 + $0x40] sm:$0xff]
    %v24 = vld [vmem:[%s0 + $0x48] sm:$0xff]
    %v25 = vld [vmem:[%s0 + $0x50] sm:$0xff]
    %v26 = vld [vmem:[%s0 + $0x58] sm:$0xff]
    %v27 = vld [vmem:[%s0 + $0x60] sm:$0xff]
    %v28 = vld [vmem:[%s0 + $0x68] sm:$0xff]
    %v29 = vld [vmem:[%s0 + $0x70] sm:$0xff]
    %v30 = vld [vmem:[%s0 + $0x78] sm:$0xff]
    %v31 = vlaneseq
    %v32 = vshrl.u32 %v31, 7
    %v33 = vadd.s32 %v32, 8
    %v34 = vadd.s32 %v32, 16
    %v35 = vadd.s32 %v32, 24
    %v36 = vadd.s32 %v32, 32
    %v37 = vadd.s32 %v32, 40
    %v38 = vadd.s32 %v32, 48
    %v39 = vadd.s32 %v32, 56
    %v40 = vadd.s32 %v32, 64
    %v41 = vadd.s32 %v32, 72
    %v42 = vadd.s32 %v32, 80
    %v43 = vadd.s32 %v32, 88
    %v44 = vadd.s32 %v32, 96
    %v45 = vadd.s32 %v32, 104
    %v46 = vadd.s32 %v32, 112
    %v47 = vadd.s32 %v32, 120
    %v48 = vand.u32 %v32, 63
    %v49 = vand.u32 %v33, 63
    %v50 = vand.u32 %v34, 63
    %v51 = vand.u32 %v35, 63
    %v52 = vand.u32 %v36, 63
    %v53 = vand.u32 %v37, 63
    %v54 = vand.u32 %v38, 63
    %v55 = vand.u32 %v39, 63
    %v56 = vand.u32 %v40, 63
    %v57 = vand.u32 %v41, 63
    %v58 = vand.u32 %v42, 63
    %v59 = vand.u32 %v43, 63
    %v60 = vand.u32 %v44, 63
    %v61 = vand.u32 %v45, 63
    %v62 = vand.u32 %v46, 63
    %v63 = vand.u32 %v47, 63
    %vm64 = vcmp.lt.s32.totalorder %v48, 60
    %vm65 = vcmp.lt.s32.totalorder %v49, 60
    %vm66 = vcmp.lt.s32.totalorder %v50, 60
    %vm67 = vcmp.lt.s32.totalorder %v51, 60
    %vm68 = vcmp.lt.s32.totalorder %v52, 60
    %vm69 = vcmp.lt.s32.totalorder %v53, 60
    %vm70 = vcmp.lt.s32.totalorder %v54, 60
    %vm71 = vcmp.lt.s32.totalorder %v55, 60
    %vm72 = vcmp.lt.s32.totalorder %v56, 60
    %vm73 = vcmp.lt.s32.totalorder %v57, 60
    %vm74 = vcmp.lt.s32.totalorder %v58, 60
    %vm75 = vcmp.lt.s32.totalorder %v59, 60
    %vm76 = vcmp.lt.s32.totalorder %v60, 60
    %vm77 = vcmp.lt.s32.totalorder %v61, 60
    %vm78 = vcmp.lt.s32.totalorder %v62, 60
    %vm79 = vcmp.lt.s32.totalorder %v63, 60
    %v80 = vsel %vm64, 1, 0
    %v81 = vsel %vm65, 1, 0
    %v82 = vsel %vm66, 1, 0
    %v83 = vsel %vm67, 1, 0
    %v84 = vsel %vm68, 1, 0
    %v85 = vsel %vm69, 1, 0
    %v86 = vsel %vm70, 1, 0
    %v87 = vsel %vm71, 1, 0
    %v88 = vsel %vm72, 1, 0
    %v89 = vsel %vm73, 1, 0
    %v90 = vsel %vm74, 1, 0
    %v91 = vsel %vm75, 1, 0
    %v92 = vsel %vm76, 1, 0
    %v93 = vsel %vm77, 1, 0
    %v94 = vsel %vm78, 1, 0
    %v95 = vsel %vm79, 1, 0
    %v96 = vcvt.s32.f32 %v80
    %v97 = vcvt.s32.f32 %v81
    %v98 = vcvt.s32.f32 %v82
    %v99 = vcvt.s32.f32 %v83
    %v100 = vcvt.s32.f32 %v84
    %v101 = vcvt.s32.f32 %v85
    %v102 = vcvt.s32.f32 %v86
    %v103 = vcvt.s32.f32 %v87
    %v104 = vcvt.s32.f32 %v88
    %v105 = vcvt.s32.f32 %v89
    %v106 = vcvt.s32.f32 %v90
    %v107 = vcvt.s32.f32 %v91
    %v108 = vcvt.s32.f32 %v92
    %v109 = vcvt.s32.f32 %v93
    %v110 = vcvt.s32.f32 %v94
    %v111 = vcvt.s32.f32 %v95
    %v112 = vld [vmem:[%s2] sm:$0x1]
    %v113 = vld [vmem:[%s2 + $0x1] sm:$0x1]
    %v114 = vld [vmem:[%s2 + $0x2] sm:$0x1]
    %v115 = vld [vmem:[%s2 + $0x3] sm:$0x1]
    %v116 = vld [vmem:[%s1] sm:$0x1f]
    %118 = vset.pattern.permute.xlu0 0
    %119 = vperm.xlu0 %118, %v15
    %v120 = vpop.permute.xlu0 %119
    %123 = vset.pattern.permute.xlu0 0
    %124 = vperm.xlu0 %123, %v16
    %v125 = vpop.permute.xlu0 %124
    %128 = vset.pattern.permute.xlu0 0
    %129 = vperm.xlu0 %128, %v17
    %v130 = vpop.permute.xlu0 %129
    %133 = vset.pattern.permute.xlu0 0
    %134 = vperm.xlu0 %133, %v18
    %v135 = vpop.permute.xlu0 %134
    %138 = vset.pattern.permute.xlu0 0
    %139 = vperm.xlu0 %138, %v19
    %v140 = vpop.permute.xlu0 %139
    %143 = vset.pattern.permute.xlu0 0
    %144 = vperm.xlu0 %143, %v20
    %v145 = vpop.permute.xlu0 %144
    %148 = vset.pattern.permute.xlu0 0
    %149 = vperm.xlu0 %148, %v21
    %v150 = vpop.permute.xlu0 %149
    %153 = vset.pattern.permute.xlu0 0
    %154 = vperm.xlu0 %153, %v22
    %v155 = vpop.permute.xlu0 %154
    %158 = vset.pattern.permute.xlu0 0
    %159 = vperm.xlu0 %158, %v23
    %v160 = vpop.permute.xlu0 %159
    %163 = vset.pattern.permute.xlu0 0
    %164 = vperm.xlu0 %163, %v24
    %v165 = vpop.permute.xlu0 %164
    %168 = vset.pattern.permute.xlu0 0
    %169 = vperm.xlu0 %168, %v25
    %v170 = vpop.permute.xlu0 %169
    %173 = vset.pattern.permute.xlu0 0
    %174 = vperm.xlu0 %173, %v26
    %v175 = vpop.permute.xlu0 %174
    %178 = vset.pattern.permute.xlu0 0
    %179 = vperm.xlu0 %178, %v27
    %v180 = vpop.permute.xlu0 %179
    %183 = vset.pattern.permute.xlu0 0
    %184 = vperm.xlu0 %183, %v28
    %v185 = vpop.permute.xlu0 %184
    %188 = vset.pattern.permute.xlu0 0
    %189 = vperm.xlu0 %188, %v29
    %v190 = vpop.permute.xlu0 %189
    %193 = vset.pattern.permute.xlu0 0
    %194 = vperm.xlu0 %193, %v30
    %v195 = vpop.permute.xlu0 %194
    %v197 = vperm.slane %v116, 0
    %v198 = vmul.f32 %v120, %v197
    %v199 = vmul.f32 %v125, %v197
    %v200 = vmul.f32 %v130, %v197
    %v201 = vmul.f32 %v135, %v197
    %v202 = vmul.f32 %v140, %v197
    %v203 = vmul.f32 %v145, %v197
    %v204 = vmul.f32 %v150, %v197
    %v205 = vmul.f32 %v155, %v197
    %v206 = vmul.f32 %v160, %v197
    %v207 = vmul.f32 %v165, %v197
    %v208 = vmul.f32 %v170, %v197
    %v209 = vmul.f32 %v175, %v197
    %v210 = vmul.f32 %v180, %v197
    %v211 = vmul.f32 %v185, %v197
    %v212 = vmul.f32 %v190, %v197
    %v213 = vmul.f32 %v195, %v197
    %v214 = vperm.slane %v116, 1
    %v215 = vmul.f32 %v120, %v214
    %v216 = vmul.f32 %v125, %v214
    %v217 = vmul.f32 %v130, %v214
    %v218 = vmul.f32 %v135, %v214
    %v219 = vmul.f32 %v140, %v214
    %v220 = vmul.f32 %v145, %v214
    %v221 = vmul.f32 %v150, %v214
    %v222 = vmul.f32 %v155, %v214
    %v223 = vmul.f32 %v160, %v214
    %v224 = vmul.f32 %v165, %v214
    %v225 = vmul.f32 %v170, %v214
    %v226 = vmul.f32 %v175, %v214
    %v227 = vmul.f32 %v180, %v214
    %v228 = vmul.f32 %v185, %v214
    %v229 = vmul.f32 %v190, %v214
    %v230 = vmul.f32 %v195, %v214
    %vm247 = vcmask 1046528
    %v248 = vrot.slane %v215, 1
    %v249 = vrot.slane %v216, 1
    %v250 = vsel %vm247, %v248, %v249
    %v251 = vrot.slane %v217, 1
    %v252 = vsel %vm247, %v249, %v251
    %v253 = vrot.slane %v218, 1
    %v254 = vsel %vm247, %v251, %v253
    %v255 = vrot.slane %v219, 1
    %v256 = vsel %vm247, %v253, %v255
    %v257 = vrot.slane %v220, 1
    %v258 = vsel %vm247, %v255, %v257
    %v259 = vrot.slane %v221, 1
    %v260 = vsel %vm247, %v257, %v259
    %v261 = vrot.slane %v222, 1
    %v262 = vsel %vm247, %v259, %v261
    %v263 = vrot.slane %v223, 1
    %v264 = vsel %vm247, %v261, %v263
    %v265 = vrot.slane %v224, 1
    %v266 = vsel %vm247, %v263, %v265
    %v267 = vrot.slane %v225, 1
    %v268 = vsel %vm247, %v265, %v267
    %v269 = vrot.slane %v226, 1
    %v270 = vsel %vm247, %v267, %v269
    %v271 = vrot.slane %v227, 1
    %v272 = vsel %vm247, %v269, %v271
    %v273 = vrot.slane %v228, 1
    %v274 = vsel %vm247, %v271, %v273
    %v275 = vrot.slane %v229, 1
    %v276 = vsel %vm247, %v273, %v275
    %v277 = vrot.slane %v230, 1
    %v278 = vsel %vm247, %v275, %v277
    %v295 = vadd.f32 %v198, %v250
    %v296 = vadd.f32 %v199, %v252
    %v297 = vadd.f32 %v200, %v254
    %v298 = vadd.f32 %v201, %v256
    %v299 = vadd.f32 %v202, %v258
    %v300 = vadd.f32 %v203, %v260
    %v301 = vadd.f32 %v204, %v262
    %v302 = vadd.f32 %v205, %v264
    %v303 = vadd.f32 %v206, %v266
    %v304 = vadd.f32 %v207, %v268
    %v305 = vadd.f32 %v208, %v270
    %v306 = vadd.f32 %v209, %v272
    %v307 = vadd.f32 %v210, %v274
    %v308 = vadd.f32 %v211, %v276
    %v309 = vadd.f32 %v212, %v278
    %v310 = vadd.f32 %v213, %v277
    %v311 = vperm.slane %v116, 2
    %v312 = vmul.f32 %v120, %v311
    %v313 = vmul.f32 %v125, %v311
    %v314 = vmul.f32 %v130, %v311
    %v315 = vmul.f32 %v135, %v311
    %v316 = vmul.f32 %v140, %v311
    %v317 = vmul.f32 %v145, %v311
    %v318 = vmul.f32 %v150, %v311
    %v319 = vmul.f32 %v155, %v311
    %v320 = vmul.f32 %v160, %v311
    %v321 = vmul.f32 %v165, %v311
    %v322 = vmul.f32 %v170, %v311
    %v323 = vmul.f32 %v175, %v311
    %v324 = vmul.f32 %v180, %v311
    %v325 = vmul.f32 %v185, %v311
    %v326 = vmul.f32 %v190, %v311
    %v327 = vmul.f32 %v195, %v311
    %vm344 = vcmask 1045504
    %v345 = vrot.slane %v312, 2
    %v346 = vrot.slane %v313, 2
    %v347 = vsel %vm344, %v345, %v346
    %v348 = vrot.slane %v314, 2
    %v349 = vsel %vm344, %v346, %v348
    %v350 = vrot.slane %v315, 2
    %v351 = vsel %vm344, %v348, %v350
    %v352 = vrot.slane %v316, 2
    %v353 = vsel %vm344, %v350, %v352
    %v354 = vrot.slane %v317, 2
    %v355 = vsel %vm344, %v352, %v354
    %v356 = vrot.slane %v318, 2
    %v357 = vsel %vm344, %v354, %v356
    %v358 = vrot.slane %v319, 2
    %v359 = vsel %vm344, %v356, %v358
    %v360 = vrot.slane %v320, 2
    %v361 = vsel %vm344, %v358, %v360
    %v362 = vrot.slane %v321, 2
    %v363 = vsel %vm344, %v360, %v362
    %v364 = vrot.slane %v322, 2
    %v365 = vsel %vm344, %v362, %v364
    %v366 = vrot.slane %v323, 2
    %v367 = vsel %vm344, %v364, %v366
    %v368 = vrot.slane %v324, 2
    %v369 = vsel %vm344, %v366, %v368
    %v370 = vrot.slane %v325, 2
    %v371 = vsel %vm344, %v368, %v370
    %v372 = vrot.slane %v326, 2
    %v373 = vsel %vm344, %v370, %v372
    %v374 = vrot.slane %v327, 2
    %v375 = vsel %vm344, %v372, %v374
    %v392 = vadd.f32 %v295, %v347
    %v393 = vadd.f32 %v296, %v349
    %v394 = vadd.f32 %v297, %v351
    %v395 = vadd.f32 %v298, %v353
    %v396 = vadd.f32 %v299, %v355
    %v397 = vadd.f32 %v300, %v357
    %v398 = vadd.f32 %v301, %v359
    %v399 = vadd.f32 %v302, %v361
    %v400 = vadd.f32 %v303, %v363
    %v401 = vadd.f32 %v304, %v365
    %v402 = vadd.f32 %v305, %v367
    %v403 = vadd.f32 %v306, %v369
    %v404 = vadd.f32 %v307, %v371
    %v405 = vadd.f32 %v308, %v373
    %v406 = vadd.f32 %v309, %v375
    %v407 = vadd.f32 %v310, %v374
    %v408 = vperm.slane %v116, 3
    %v409 = vmul.f32 %v120, %v408
    %v410 = vmul.f32 %v125, %v408
    %v411 = vmul.f32 %v130, %v408
    %v412 = vmul.f32 %v135, %v408
    %v413 = vmul.f32 %v140, %v408
    %v414 = vmul.f32 %v145, %v408
    %v415 = vmul.f32 %v150, %v408
    %v416 = vmul.f32 %v155, %v408
    %v417 = vmul.f32 %v160, %v408
    %v418 = vmul.f32 %v165, %v408
    %v419 = vmul.f32 %v170, %v408
    %v420 = vmul.f32 %v175, %v408
    %v421 = vmul.f32 %v180, %v408
    %v422 = vmul.f32 %v185, %v408
    %v423 = vmul.f32 %v190, %v408
    %v424 = vmul.f32 %v195, %v408
    %vm441 = vcmask 1044480
    %v442 = vrot.slane %v409, 3
    %v443 = vrot.slane %v410, 3
    %v444 = vsel %vm441, %v442, %v443
    %v445 = vrot.slane %v411, 3
    %v446 = vsel %vm441, %v443, %v445
    %v447 = vrot.slane %v412, 3
    %v448 = vsel %vm441, %v445, %v447
    %v449 = vrot.slane %v413, 3
    %v450 = vsel %vm441, %v447, %v449
    %v451 = vrot.slane %v414, 3
    %v452 = vsel %vm441, %v449, %v451
    %v453 = vrot.slane %v415, 3
    %v454 = vsel %vm441, %v451, %v453
    %v455 = vrot.slane %v416, 3
    %v456 = vsel %vm441, %v453, %v455
    %v457 = vrot.slane %v417, 3
    %v458 = vsel %vm441, %v455, %v457
    %v459 = vrot.slane %v418, 3
    %v460 = vsel %vm441, %v457, %v459
    %v461 = vrot.slane %v419, 3
    %v462 = vsel %vm441, %v459, %v461
    %v463 = vrot.slane %v420, 3
    %v464 = vsel %vm441, %v461, %v463
    %v465 = vrot.slane %v421, 3
    %v466 = vsel %vm441, %v463, %v465
    %v467 = vrot.slane %v422, 3
    %v468 = vsel %vm441, %v465, %v467
    %v469 = vrot.slane %v423, 3
    %v470 = vsel %vm441, %v467, %v469
    %v471 = vrot.slane %v424, 3
    %v472 = vsel %vm441, %v469, %v471
    %v489 = vadd.f32 %v392, %v444
    %v490 = vadd.f32 %v393, %v446
    %v491 = vadd.f32 %v394, %v448
    %v492 = vadd.f32 %v395, %v450
    %v493 = vadd.f32 %v396, %v452
    %v494 = vadd.f32 %v397, %v454
    %v495 = vadd.f32 %v398, %v456
    %v496 = vadd.f32 %v399, %v458
    %v497 = vadd.f32 %v400, %v460
    %v498 = vadd.f32 %v401, %v462
    %v499 = vadd.f32 %v402, %v464
    %v500 = vadd.f32 %v403, %v466
    %v501 = vadd.f32 %v404, %v468
    %v502 = vadd.f32 %v405, %v470
    %v503 = vadd.f32 %v406, %v472
    %v504 = vadd.f32 %v407, %v471
    %v505 = vperm.slane %v116, 4
    %v506 = vmul.f32 %v120, %v505
    %v507 = vmul.f32 %v125, %v505
    %v508 = vmul.f32 %v130, %v505
    %v509 = vmul.f32 %v135, %v505
    %v510 = vmul.f32 %v140, %v505
    %v511 = vmul.f32 %v145, %v505
    %v512 = vmul.f32 %v150, %v505
    %v513 = vmul.f32 %v155, %v505
    %v514 = vmul.f32 %v160, %v505
    %v515 = vmul.f32 %v165, %v505
    %v516 = vmul.f32 %v170, %v505
    %v517 = vmul.f32 %v175, %v505
    %v518 = vmul.f32 %v180, %v505
    %v519 = vmul.f32 %v185, %v505
    %v520 = vmul.f32 %v190, %v505
    %v521 = vmul.f32 %v195, %v505
    %vm538 = vcmask 1043456
    %v539 = vrot.slane %v506, 4
    %v540 = vrot.slane %v507, 4
    %v541 = vsel %vm538, %v539, %v540
    %v542 = vrot.slane %v508, 4
    %v543 = vsel %vm538, %v540, %v542
    %v544 = vrot.slane %v509, 4
    %v545 = vsel %vm538, %v542, %v544
    %v546 = vrot.slane %v510, 4
    %v547 = vsel %vm538, %v544, %v546
    %v548 = vrot.slane %v511, 4
    %v549 = vsel %vm538, %v546, %v548
    %v550 = vrot.slane %v512, 4
    %v551 = vsel %vm538, %v548, %v550
    %v552 = vrot.slane %v513, 4
    %v553 = vsel %vm538, %v550, %v552
    %v554 = vrot.slane %v514, 4
    %v555 = vsel %vm538, %v552, %v554
    %v556 = vrot.slane %v515, 4
    %v557 = vsel %vm538, %v554, %v556
    %v558 = vrot.slane %v516, 4
    %v559 = vsel %vm538, %v556, %v558
    %v560 = vrot.slane %v517, 4
    %v561 = vsel %vm538, %v558, %v560
    %v562 = vrot.slane %v518, 4
    %v563 = vsel %vm538, %v560, %v562
    %v564 = vrot.slane %v519, 4
    %v565 = vsel %vm538, %v562, %v564
    %v566 = vrot.slane %v520, 4
    %v567 = vsel %vm538, %v564, %v566
    %v568 = vrot.slane %v521, 4
    %v569 = vsel %vm538, %v566, %v568
    %v586 = vadd.f32 %v489, %v541
    %v587 = vadd.f32 %v490, %v543
    %v588 = vadd.f32 %v491, %v545
    %v589 = vadd.f32 %v492, %v547
    %v590 = vadd.f32 %v493, %v549
    %v591 = vadd.f32 %v494, %v551
    %v592 = vadd.f32 %v495, %v553
    %v593 = vadd.f32 %v496, %v555
    %v594 = vadd.f32 %v497, %v557
    %v595 = vadd.f32 %v498, %v559
    %v596 = vadd.f32 %v499, %v561
    %v597 = vadd.f32 %v500, %v563
    %v598 = vadd.f32 %v501, %v565
    %v599 = vadd.f32 %v502, %v567
    %v600 = vadd.f32 %v503, %v569
    %v601 = vadd.f32 %v504, %v568
    %v602 = vmul.f32 %v586, %v96
    %v603 = vmul.f32 %v587, %v97
    %v604 = vmul.f32 %v588, %v98
    %v605 = vmul.f32 %v589, %v99
    %v606 = vmul.f32 %v590, %v100
    %v607 = vmul.f32 %v591, %v101
    %v608 = vmul.f32 %v592, %v102
    %v609 = vmul.f32 %v593, %v103
    %v610 = vmul.f32 %v594, %v104
    %v611 = vmul.f32 %v595, %v105
    %v612 = vmul.f32 %v596, %v106
    %v613 = vmul.f32 %v597, %v107
    %v614 = vmul.f32 %v598, %v108
    %v615 = vmul.f32 %v599, %v109
    %v616 = vmul.f32 %v600, %v110
    %v617 = vmul.f32 %v601, %v111
    %vm618 = vcmask 261120
    %v619 = vsel %vm618, %v602, 0.0
    %v620 = vsel %vm618, %v603, 0.0
    %v621 = vadd.f32 %v619, %v620
    %v622 = vsel %vm618, %v604, 0.0
    %v623 = vadd.f32 %v621, %v622
    %v624 = vsel %vm618, %v605, 0.0
    %v625 = vadd.f32 %v623, %v624
    %v626 = vsel %vm618, %v606, 0.0
    %v627 = vadd.f32 %v625, %v626
    %v628 = vsel %vm618, %v607, 0.0
    %v629 = vadd.f32 %v627, %v628
    %v630 = vsel %vm618, %v608, 0.0
    %v631 = vadd.f32 %v629, %v630
    %v632 = vsel %vm618, %v609, 0.0
    %v633 = vadd.f32 %v631, %v632
    %v634 = vsel %vm618, %v610, 0.0
    %v635 = vadd.f32 %v633, %v634
    %v636 = vsel %vm618, %v611, 0.0
    %v637 = vadd.f32 %v635, %v636
    %v638 = vsel %vm618, %v612, 0.0
    %v639 = vadd.f32 %v637, %v638
    %v640 = vsel %vm618, %v613, 0.0
    %v641 = vadd.f32 %v639, %v640
    %v642 = vsel %vm618, %v614, 0.0
    %v643 = vadd.f32 %v641, %v642
    %v644 = vsel %vm618, %v615, 0.0
    %v645 = vadd.f32 %v643, %v644
    %v646 = vsel %vm618, %v616, 0.0
    %v647 = vadd.f32 %v645, %v646
    %vm648 = vcmask 257024
    %v649 = vsel %vm648, %v617, 0.0
    %v650 = vadd.f32 %v647, %v649
    %v651 = vrot.slane %v650, 4
    %v652 = vadd.f32 %v650, %v651
    %v653 = vrot.slane %v652, 2
    %v654 = vadd.f32 %v652, %v653
    %v655 = vrot.slane %v654, 1
    %v656 = vadd.f32 %v654, %v655
    %v657 = vmul.f32 %v656, 0.008333334
    %v658 = vsub.f32 %v586, %v657
    %v659 = vsub.f32 %v587, %v657
    %v660 = vsub.f32 %v588, %v657
    %v661 = vsub.f32 %v589, %v657
    %v662 = vsub.f32 %v590, %v657
    %v663 = vsub.f32 %v591, %v657
    %v664 = vsub.f32 %v592, %v657
    %v665 = vsub.f32 %v593, %v657
    %v666 = vsub.f32 %v594, %v657
    %v667 = vsub.f32 %v595, %v657
    %v668 = vsub.f32 %v596, %v657
    %v669 = vsub.f32 %v597, %v657
    %v670 = vsub.f32 %v598, %v657
    %v671 = vsub.f32 %v599, %v657
    %v672 = vsub.f32 %v600, %v657
    %v673 = vsub.f32 %v601, %v657
    %v674 = vmul.f32 %v658, %v96
    %v675 = vmul.f32 %v659, %v97
    %v676 = vmul.f32 %v660, %v98
    %v677 = vmul.f32 %v661, %v99
    %v678 = vmul.f32 %v662, %v100
    %v679 = vmul.f32 %v663, %v101
    %v680 = vmul.f32 %v664, %v102
    %v681 = vmul.f32 %v665, %v103
    %v682 = vmul.f32 %v666, %v104
    %v683 = vmul.f32 %v667, %v105
    %v684 = vmul.f32 %v668, %v106
    %v685 = vmul.f32 %v669, %v107
    %v686 = vmul.f32 %v670, %v108
    %v687 = vmul.f32 %v671, %v109
    %v688 = vmul.f32 %v672, %v110
    %v689 = vmul.f32 %v673, %v111
    %v690 = vmul.f32 %v674, %v674
    %v691 = vmul.f32 %v675, %v675
    %v692 = vmul.f32 %v676, %v676
    %v693 = vmul.f32 %v677, %v677
    %v694 = vmul.f32 %v678, %v678
    %v695 = vmul.f32 %v679, %v679
    %v696 = vmul.f32 %v680, %v680
    %v697 = vmul.f32 %v681, %v681
    %v698 = vmul.f32 %v682, %v682
    %v699 = vmul.f32 %v683, %v683
    %v700 = vmul.f32 %v684, %v684
    %v701 = vmul.f32 %v685, %v685
    %v702 = vmul.f32 %v686, %v686
    %v703 = vmul.f32 %v687, %v687
    %v704 = vmul.f32 %v688, %v688
    %v705 = vmul.f32 %v689, %v689
    %v706 = vsel %vm618, %v690, 0.0
    %v707 = vsel %vm618, %v691, 0.0
    %v708 = vadd.f32 %v706, %v707
    %v709 = vsel %vm618, %v692, 0.0
    %v710 = vadd.f32 %v708, %v709
    %v711 = vsel %vm618, %v693, 0.0
    %v712 = vadd.f32 %v710, %v711
    %v713 = vsel %vm618, %v694, 0.0
    %v714 = vadd.f32 %v712, %v713
    %v715 = vsel %vm618, %v695, 0.0
    %v716 = vadd.f32 %v714, %v715
    %v717 = vsel %vm618, %v696, 0.0
    %v718 = vadd.f32 %v716, %v717
    %v719 = vsel %vm618, %v697, 0.0
    %v720 = vadd.f32 %v718, %v719
    %v721 = vsel %vm618, %v698, 0.0
    %v722 = vadd.f32 %v720, %v721
    %v723 = vsel %vm618, %v699, 0.0
    %v724 = vadd.f32 %v722, %v723
    %v725 = vsel %vm618, %v700, 0.0
    %v726 = vadd.f32 %v724, %v725
    %v727 = vsel %vm618, %v701, 0.0
    %v728 = vadd.f32 %v726, %v727
    %v729 = vsel %vm618, %v702, 0.0
    %v730 = vadd.f32 %v728, %v729
    %v731 = vsel %vm618, %v703, 0.0
    %v732 = vadd.f32 %v730, %v731
    %v733 = vsel %vm618, %v704, 0.0
    %v734 = vadd.f32 %v732, %v733
    %v735 = vsel %vm648, %v705, 0.0
    %v736 = vadd.f32 %v734, %v735
    %v737 = vrot.slane %v736, 4
    %v738 = vadd.f32 %v736, %v737
    %v739 = vrot.slane %v738, 2
    %v740 = vadd.f32 %v738, %v739
    %v741 = vrot.slane %v740, 1
    %v742 = vadd.f32 %v740, %v741
    %v743 = vmul.f32 %v742, 0.008333334
    %v744 = vadd.f32 %v743, 1e-05
    %v745 = vrsqrt.pop %v744
    %v746 = vmul.f32 %v745, %v744
    %v747 = vmul.f32 %v746, %v745
    %v748 = vmul.f32 0.5, %v747
    %v749 = vsub.f32 1.5, %v748
    %v750 = vmul.f32 %v745, %v749
    %vm751 = vweird.f32 %v744
    %vm752 = vweird.f32 %v745
    %vm753 = vmor %vm751, %vm752
    %v754 = vsel %vm753, %v745, %v750
    %v755 = vmul.f32 %v658, %v754
    %v756 = vmul.f32 %v659, %v754
    %v757 = vmul.f32 %v660, %v754
    %v758 = vmul.f32 %v661, %v754
    %v759 = vmul.f32 %v662, %v754
    %v760 = vmul.f32 %v663, %v754
    %v761 = vmul.f32 %v664, %v754
    %v762 = vmul.f32 %v665, %v754
    %v763 = vmul.f32 %v666, %v754
    %v764 = vmul.f32 %v667, %v754
    %v765 = vmul.f32 %v668, %v754
    %v766 = vmul.f32 %v669, %v754
    %v767 = vmul.f32 %v670, %v754
    %v768 = vmul.f32 %v671, %v754
    %v769 = vmul.f32 %v672, %v754
    %v770 = vmul.f32 %v673, %v754
    %v771 = vperm.slane %v112, 0
    %v772 = vmul.f32 %v755, %v771
    %v773 = vmul.f32 %v756, %v771
    %v774 = vmul.f32 %v757, %v771
    %v775 = vmul.f32 %v758, %v771
    %v776 = vmul.f32 %v759, %v771
    %v777 = vmul.f32 %v760, %v771
    %v778 = vmul.f32 %v761, %v771
    %v779 = vmul.f32 %v762, %v771
    %v780 = vmul.f32 %v763, %v771
    %v781 = vmul.f32 %v764, %v771
    %v782 = vmul.f32 %v765, %v771
    %v783 = vmul.f32 %v766, %v771
    %v784 = vmul.f32 %v767, %v771
    %v785 = vmul.f32 %v768, %v771
    %v786 = vmul.f32 %v769, %v771
    %v787 = vmul.f32 %v770, %v771
    %v788 = vperm.slane %v113, 0
    %v789 = vadd.f32 %v772, %v788
    %v790 = vadd.f32 %v773, %v788
    %v791 = vadd.f32 %v774, %v788
    %v792 = vadd.f32 %v775, %v788
    %v793 = vadd.f32 %v776, %v788
    %v794 = vadd.f32 %v777, %v788
    %v795 = vadd.f32 %v778, %v788
    %v796 = vadd.f32 %v779, %v788
    %v797 = vadd.f32 %v780, %v788
    %v798 = vadd.f32 %v781, %v788
    %v799 = vadd.f32 %v782, %v788
    %v800 = vadd.f32 %v783, %v788
    %v801 = vadd.f32 %v784, %v788
    %v802 = vadd.f32 %v785, %v788
    %v803 = vadd.f32 %v786, %v788
    %v804 = vadd.f32 %v787, %v788
    %v805 = vtanh.pop %v789
    %v806 = vtanh.pop %v790
    %v807 = vtanh.pop %v791
    %v808 = vtanh.pop %v792
    %v809 = vtanh.pop %v793
    %v810 = vtanh.pop %v794
    %v811 = vtanh.pop %v795
    %v812 = vtanh.pop %v796
    %v813 = vtanh.pop %v797
    %v814 = vtanh.pop %v798
    %v815 = vtanh.pop %v799
    %v816 = vtanh.pop %v800
    %v817 = vtanh.pop %v801
    %v818 = vtanh.pop %v802
    %v819 = vtanh.pop %v803
    %v820 = vtanh.pop %v804
    %v821 = vmul.f32 %v805, %v96
    %v822 = vmul.f32 %v806, %v97
    %v823 = vmul.f32 %v807, %v98
    %v824 = vmul.f32 %v808, %v99
    %v825 = vmul.f32 %v809, %v100
    %v826 = vmul.f32 %v810, %v101
    %v827 = vmul.f32 %v811, %v102
    %v828 = vmul.f32 %v812, %v103
    %v829 = vmul.f32 %v813, %v104
    %v830 = vmul.f32 %v814, %v105
    %v831 = vmul.f32 %v815, %v106
    %v832 = vmul.f32 %v816, %v107
    %v833 = vmul.f32 %v817, %v108
    %v834 = vmul.f32 %v818, %v109
    %v835 = vmul.f32 %v819, %v110
    %v836 = vmul.f32 %v820, %v111
    %v852 = vrot.slane %v821, 4
    %v853 = vrot.slane %v822, 4
    %v854 = vsel %vm538, %v852, %v853
    %v855 = vrot.slane %v823, 4
    %v856 = vsel %vm538, %v853, %v855
    %v857 = vrot.slane %v824, 4
    %v858 = vsel %vm538, %v855, %v857
    %v859 = vrot.slane %v825, 4
    %v860 = vsel %vm538, %v857, %v859
    %v861 = vrot.slane %v826, 4
    %v862 = vsel %vm538, %v859, %v861
    %v863 = vrot.slane %v827, 4
    %v864 = vsel %vm538, %v861, %v863
    %v865 = vrot.slane %v828, 4
    %v866 = vsel %vm538, %v863, %v865
    %v867 = vrot.slane %v829, 4
    %v868 = vsel %vm538, %v865, %v867
    %v869 = vrot.slane %v830, 4
    %v870 = vsel %vm538, %v867, %v869
    %v871 = vrot.slane %v831, 4
    %v872 = vsel %vm538, %v869, %v871
    %v873 = vrot.slane %v832, 4
    %v874 = vsel %vm538, %v871, %v873
    %v875 = vrot.slane %v833, 4
    %v876 = vsel %vm538, %v873, %v875
    %v877 = vrot.slane %v834, 4
    %v878 = vsel %vm538, %v875, %v877
    %v879 = vrot.slane %v835, 4
    %v880 = vsel %vm538, %v877, %v879
    %v897 = vsel %vm538, 0.0, %v852
    %vm899 = vcmask 1042432
    %v900 = vrot.slane %v821, 5
    %v901 = vrot.slane %v822, 5
    %v902 = vsel %vm899, %v900, %v901
    %v903 = vrot.slane %v823, 5
    %v904 = vsel %vm899, %v901, %v903
    %v905 = vrot.slane %v824, 5
    %v906 = vsel %vm899, %v903, %v905
    %v907 = vrot.slane %v825, 5
    %v908 = vsel %vm899, %v905, %v907
    %v909 = vrot.slane %v826, 5
    %v910 = vsel %vm899, %v907, %v909
    %v911 = vrot.slane %v827, 5
    %v912 = vsel %vm899, %v909, %v911
    %v913 = vrot.slane %v828, 5
    %v914 = vsel %vm899, %v911, %v913
    %v915 = vrot.slane %v829, 5
    %v916 = vsel %vm899, %v913, %v915
    %v917 = vrot.slane %v830, 5
    %v918 = vsel %vm899, %v915, %v917
    %v919 = vrot.slane %v831, 5
    %v920 = vsel %vm899, %v917, %v919
    %v921 = vrot.slane %v832, 5
    %v922 = vsel %vm899, %v919, %v921
    %v923 = vrot.slane %v833, 5
    %v924 = vsel %vm899, %v921, %v923
    %v925 = vrot.slane %v834, 5
    %v926 = vsel %vm899, %v923, %v925
    %v927 = vrot.slane %v835, 5
    %v928 = vsel %vm899, %v925, %v927
    %v929 = vrot.slane %v836, 5
    %v930 = vsel %vm899, %v927, %v929
    %v932 = vsel %vm899, 0.0, %v900
    %vm933 = vcmask 1041408
    %v934 = vrot.slane %v821, 6
    %v935 = vrot.slane %v822, 6
    %v936 = vsel %vm933, %v934, %v935
    %v937 = vrot.slane %v823, 6
    %v938 = vsel %vm933, %v935, %v937
    %v939 = vrot.slane %v824, 6
    %v940 = vsel %vm933, %v937, %v939
    %v941 = vrot.slane %v825, 6
    %v942 = vsel %vm933, %v939, %v941
    %v943 = vrot.slane %v826, 6
    %v944 = vsel %vm933, %v941, %v943
    %v945 = vrot.slane %v827, 6
    %v946 = vsel %vm933, %v943, %v945
    %v947 = vrot.slane %v828, 6
    %v948 = vsel %vm933, %v945, %v947
    %v949 = vrot.slane %v829, 6
    %v950 = vsel %vm933, %v947, %v949
    %v951 = vrot.slane %v830, 6
    %v952 = vsel %vm933, %v949, %v951
    %v953 = vrot.slane %v831, 6
    %v954 = vsel %vm933, %v951, %v953
    %v955 = vrot.slane %v832, 6
    %v956 = vsel %vm933, %v953, %v955
    %v957 = vrot.slane %v833, 6
    %v958 = vsel %vm933, %v955, %v957
    %v959 = vrot.slane %v834, 6
    %v960 = vsel %vm933, %v957, %v959
    %v961 = vrot.slane %v835, 6
    %v962 = vsel %vm933, %v959, %v961
    %v963 = vrot.slane %v836, 6
    %v964 = vsel %vm933, %v961, %v963
    %v966 = vsel %vm933, 0.0, %v934
    %vm967 = vcmask 1040384
    %v968 = vrot.slane %v821, 7
    %v969 = vrot.slane %v822, 7
    %v970 = vsel %vm967, %v968, %v969
    %v971 = vrot.slane %v823, 7
    %v972 = vsel %vm967, %v969, %v971
    %v973 = vrot.slane %v824, 7
    %v974 = vsel %vm967, %v971, %v973
    %v975 = vrot.slane %v825, 7
    %v976 = vsel %vm967, %v973, %v975
    %v977 = vrot.slane %v826, 7
    %v978 = vsel %vm967, %v975, %v977
    %v979 = vrot.slane %v827, 7
    %v980 = vsel %vm967, %v977, %v979
    %v981 = vrot.slane %v828, 7
    %v982 = vsel %vm967, %v979, %v981
    %v983 = vrot.slane %v829, 7
    %v984 = vsel %vm967, %v981, %v983
    %v985 = vrot.slane %v830, 7
    %v986 = vsel %vm967, %v983, %v985
    %v987 = vrot.slane %v831, 7
    %v988 = vsel %vm967, %v985, %v987
    %v989 = vrot.slane %v832, 7
    %v990 = vsel %vm967, %v987, %v989
    %v991 = vrot.slane %v833, 7
    %v992 = vsel %vm967, %v989, %v991
    %v993 = vrot.slane %v834, 7
    %v994 = vsel %vm967, %v991, %v993
    %v995 = vrot.slane %v835, 7
    %v996 = vsel %vm967, %v993, %v995
    %v997 = vrot.slane %v836, 7
    %v998 = vsel %vm967, %v995, %v997
    %v1000 = vsel %vm967, 0.0, %v968
    %1002 = vrot.lane.b32.xlu0 %v932, 32
    %v1003 = vpop.permute.xlu0 %1002
    %1004 = vrot.lane.b32.xlu0 %v902, 32
    %v1005 = vpop.permute.xlu0 %1004
    %1006 = vrot.lane.b32.xlu0 %v904, 32
    %v1007 = vpop.permute.xlu0 %1006
    %1008 = vrot.lane.b32.xlu0 %v906, 32
    %v1009 = vpop.permute.xlu0 %1008
    %1010 = vrot.lane.b32.xlu0 %v908, 32
    %v1011 = vpop.permute.xlu0 %1010
    %1012 = vrot.lane.b32.xlu0 %v910, 32
    %v1013 = vpop.permute.xlu0 %1012
    %1014 = vrot.lane.b32.xlu0 %v912, 32
    %v1015 = vpop.permute.xlu0 %1014
    %1016 = vrot.lane.b32.xlu0 %v914, 32
    %v1017 = vpop.permute.xlu0 %1016
    %1018 = vrot.lane.b32.xlu0 %v916, 32
    %v1019 = vpop.permute.xlu0 %1018
    %1020 = vrot.lane.b32.xlu0 %v918, 32
    %v1021 = vpop.permute.xlu0 %1020
    %1022 = vrot.lane.b32.xlu0 %v920, 32
    %v1023 = vpop.permute.xlu0 %1022
    %1024 = vrot.lane.b32.xlu0 %v922, 32
    %v1025 = vpop.permute.xlu0 %1024
    %1026 = vrot.lane.b32.xlu0 %v924, 32
    %v1027 = vpop.permute.xlu0 %1026
    %1028 = vrot.lane.b32.xlu0 %v926, 32
    %v1029 = vpop.permute.xlu0 %1028
    %1030 = vrot.lane.b32.xlu0 %v928, 32
    %v1031 = vpop.permute.xlu0 %1030
    %1032 = vrot.lane.b32.xlu0 %v930, 32
    %v1033 = vpop.permute.xlu0 %1032
    %1051 = vrot.lane.b32.xlu0 %v966, 64
    %v1052 = vpop.permute.xlu0 %1051
    %1053 = vrot.lane.b32.xlu0 %v936, 64
    %v1054 = vpop.permute.xlu0 %1053
    %1055 = vrot.lane.b32.xlu0 %v938, 64
    %v1056 = vpop.permute.xlu0 %1055
    %1057 = vrot.lane.b32.xlu0 %v940, 64
    %v1058 = vpop.permute.xlu0 %1057
    %1059 = vrot.lane.b32.xlu0 %v942, 64
    %v1060 = vpop.permute.xlu0 %1059
    %1061 = vrot.lane.b32.xlu0 %v944, 64
    %v1062 = vpop.permute.xlu0 %1061
    %1063 = vrot.lane.b32.xlu0 %v946, 64
    %v1064 = vpop.permute.xlu0 %1063
    %1065 = vrot.lane.b32.xlu0 %v948, 64
    %v1066 = vpop.permute.xlu0 %1065
    %1067 = vrot.lane.b32.xlu0 %v950, 64
    %v1068 = vpop.permute.xlu0 %1067
    %1069 = vrot.lane.b32.xlu0 %v952, 64
    %v1070 = vpop.permute.xlu0 %1069
    %1071 = vrot.lane.b32.xlu0 %v954, 64
    %v1072 = vpop.permute.xlu0 %1071
    %1073 = vrot.lane.b32.xlu0 %v956, 64
    %v1074 = vpop.permute.xlu0 %1073
    %1075 = vrot.lane.b32.xlu0 %v958, 64
    %v1076 = vpop.permute.xlu0 %1075
    %1077 = vrot.lane.b32.xlu0 %v960, 64
    %v1078 = vpop.permute.xlu0 %1077
    %1079 = vrot.lane.b32.xlu0 %v962, 64
    %v1080 = vpop.permute.xlu0 %1079
    %1081 = vrot.lane.b32.xlu0 %v964, 64
    %v1082 = vpop.permute.xlu0 %1081
    %1100 = vrot.lane.b32.xlu0 %v1000, 96
    %v1101 = vpop.permute.xlu0 %1100
    %1102 = vrot.lane.b32.xlu0 %v970, 96
    %v1103 = vpop.permute.xlu0 %1102
    %1104 = vrot.lane.b32.xlu0 %v972, 96
    %v1105 = vpop.permute.xlu0 %1104
    %1106 = vrot.lane.b32.xlu0 %v974, 96
    %v1107 = vpop.permute.xlu0 %1106
    %1108 = vrot.lane.b32.xlu0 %v976, 96
    %v1109 = vpop.permute.xlu0 %1108
    %1110 = vrot.lane.b32.xlu0 %v978, 96
    %v1111 = vpop.permute.xlu0 %1110
    %1112 = vrot.lane.b32.xlu0 %v980, 96
    %v1113 = vpop.permute.xlu0 %1112
    %1114 = vrot.lane.b32.xlu0 %v982, 96
    %v1115 = vpop.permute.xlu0 %1114
    %1116 = vrot.lane.b32.xlu0 %v984, 96
    %v1117 = vpop.permute.xlu0 %1116
    %1118 = vrot.lane.b32.xlu0 %v986, 96
    %v1119 = vpop.permute.xlu0 %1118
    %1120 = vrot.lane.b32.xlu0 %v988, 96
    %v1121 = vpop.permute.xlu0 %1120
    %1122 = vrot.lane.b32.xlu0 %v990, 96
    %v1123 = vpop.permute.xlu0 %1122
    %1124 = vrot.lane.b32.xlu0 %v992, 96
    %v1125 = vpop.permute.xlu0 %1124
    %1126 = vrot.lane.b32.xlu0 %v994, 96
    %v1127 = vpop.permute.xlu0 %1126
    %1128 = vrot.lane.b32.xlu0 %v996, 96
    %v1129 = vpop.permute.xlu0 %1128
    %1130 = vrot.lane.b32.xlu0 %v998, 96
    %v1131 = vpop.permute.xlu0 %1130
    %v1148 = vsel %vm618, %v897, %v1003
    %v1149 = vsel %vm618, %v854, %v1005
    %v1150 = vsel %vm618, %v856, %v1007
    %v1151 = vsel %vm618, %v858, %v1009
    %v1152 = vsel %vm618, %v860, %v1011
    %v1153 = vsel %vm618, %v862, %v1013
    %v1154 = vsel %vm618, %v864, %v1015
    %v1155 = vsel %vm618, %v866, %v1017
    %v1156 = vsel %vm618, %v868, %v1019
    %v1157 = vsel %vm618, %v870, %v1021
    %v1158 = vsel %vm618, %v872, %v1023
    %v1159 = vsel %vm618, %v874, %v1025
    %v1160 = vsel %vm618, %v876, %v1027
    %v1161 = vsel %vm618, %v878, %v1029
    %v1162 = vsel %vm618, %v880, %v1031
    %v1163 = vsel %vm618, %v879, %v1033
    %vm1164 = vcmask 523264
    %v1165 = vsel %vm1164, %v1148, %v1052
    %v1166 = vsel %vm1164, %v1149, %v1054
    %v1167 = vsel %vm1164, %v1150, %v1056
    %v1168 = vsel %vm1164, %v1151, %v1058
    %v1169 = vsel %vm1164, %v1152, %v1060
    %v1170 = vsel %vm1164, %v1153, %v1062
    %v1171 = vsel %vm1164, %v1154, %v1064
    %v1172 = vsel %vm1164, %v1155, %v1066
    %v1173 = vsel %vm1164, %v1156, %v1068
    %v1174 = vsel %vm1164, %v1157, %v1070
    %v1175 = vsel %vm1164, %v1158, %v1072
    %v1176 = vsel %vm1164, %v1159, %v1074
    %v1177 = vsel %vm1164, %v1160, %v1076
    %v1178 = vsel %vm1164, %v1161, %v1078
    %v1179 = vsel %vm1164, %v1162, %v1080
    %v1180 = vsel %vm1164, %v1163, %v1082
    %vm1181 = vcmask 785408
    %v1182 = vsel %vm1181, %v1165, %v1101
    %v1183 = vsel %vm1181, %v1166, %v1103
    %v1184 = vsel %vm1181, %v1167, %v1105
    %v1185 = vsel %vm1181, %v1168, %v1107
    %v1186 = vsel %vm1181, %v1169, %v1109
    %v1187 = vsel %vm1181, %v1170, %v1111
    %v1188 = vsel %vm1181, %v1171, %v1113
    %v1189 = vsel %vm1181, %v1172, %v1115
    %v1190 = vsel %vm1181, %v1173, %v1117
    %v1191 = vsel %vm1181, %v1174, %v1119
    %v1192 = vsel %vm1181, %v1175, %v1121
    %v1193 = vsel %vm1181, %v1176, %v1123
    %v1194 = vsel %vm1181, %v1177, %v1125
    %v1195 = vsel %vm1181, %v1178, %v1127
    %v1196 = vsel %vm1181, %v1179, %v1129
    %v1197 = vsel %vm1181, %v1180, %v1131
    %v1198 = vld [vmem:[%s1 + $0x8] sm:$0xff]
    %v1199 = vld [vmem:[%s1 + $0x10] sm:$0xff]
    %v1200 = vld [vmem:[%s1 + $0x18] sm:$0xff]
    %v1201 = vld [vmem:[%s1 + $0x20] sm:$0xff]
    %v1202 = vld [vmem:[%s1 + $0x28] sm:$0xff]
    %v1203 = vld [vmem:[%s1 + $0x30] sm:$0xff]
    %v1204 = vld [vmem:[%s1 + $0x38] sm:$0xff]
    %v1205 = vld [vmem:[%s1 + $0x40] sm:$0xff]
    %v1206 = vld [vmem:[%s1 + $0x48] sm:$0xff]
    %v1207 = vld [vmem:[%s1 + $0x50] sm:$0xff]
    %v1208 = vld [vmem:[%s1 + $0x58] sm:$0xff]
    %v1209 = vld [vmem:[%s1 + $0x60] sm:$0xff]
    %v1210 = vld [vmem:[%s1 + $0x68] sm:$0xff]
    %v1211 = vld [vmem:[%s1 + $0x70] sm:$0xff]
    %v1212 = vld [vmem:[%s1 + $0x78] sm:$0xff]
    %v1213 = vld [vmem:[%s1 + $0x80] sm:$0xff]
    %v1214 = vld [vmem:[%s1 + $0x88] sm:$0xff]
    %v1215 = vld [vmem:[%s1 + $0x90] sm:$0xff]
    %v1216 = vld [vmem:[%s1 + $0x98] sm:$0xff]
    %v1217 = vld [vmem:[%s1 + $0xa0] sm:$0xff]
    %v1218 = vsel %vm618, %v821, 0
    %v1220 = vsel %vm618, %v822, 0
    %v1222 = vsel %vm618, %v823, 0
    %v1224 = vsel %vm618, %v824, 0
    %v1226 = vsel %vm618, %v825, 0
    %v1228 = vsel %vm618, %v826, 0
    %v1230 = vsel %vm618, %v827, 0
    %v1232 = vsel %vm618, %v828, 0
    %v1234 = vsel %vm618, %v829, 0
    %v1236 = vsel %vm618, %v830, 0
    %v1238 = vsel %vm618, %v831, 0
    %v1240 = vsel %vm618, %v832, 0
    %v1242 = vsel %vm618, %v833, 0
    %v1244 = vsel %vm618, %v834, 0
    %v1246 = vsel %vm618, %v835, 0
    %v1248 = vsel %vm618, %v836, 0
    %1250 = vmatpush.msra.mxu0 %v1213
    %1251 = vmatpush.msra.mxu0 %v1212
    %1252 = vmatpush.msra.mxu0 %v1211
    %1253 = vmatpush.msra.mxu0 %v1210
    %1254 = vmatpush.msra.mxu0 %v1209
    %1255 = vmatpush.msra.mxu0 %v1208
    %1256 = vmatpush.msra.mxu0 %v1207
    %1257 = vmatpush.msra.mxu0 %v1206
    %1258 = vmatpush.msra.mxu0 %v1205
    %1259 = vmatpush.msra.mxu0 %v1204
    %1260 = vmatpush.msra.mxu0 %v1203
    %1261 = vmatpush.msra.mxu0 %v1202
    %1262 = vmatpush.msra.mxu0 %v1201
    %1263 = vmatpush.msra.mxu0 %v1200
    %1264 = vmatpush.msra.mxu0 %v1199
    %1265 = vmatpush.msra.mxu0 %v1198
    %1266 = vmatmul.f32.gmra.mxu0 %v1182
    %v1267 = vpop.f32.mrf.mxu0
    %v1268 = vadd.f32 0.0, %v1267
    %1269 = vmatmul.f32.gmra.mxu0 %v1183
    %v1270 = vpop.f32.mrf.mxu0
    %v1271 = vadd.f32 0.0, %v1270
    %1272 = vmatmul.f32.gmra.mxu0 %v1184
    %v1273 = vpop.f32.mrf.mxu0
    %v1274 = vadd.f32 0.0, %v1273
    %1275 = vmatmul.f32.gmra.mxu0 %v1185
    %v1276 = vpop.f32.mrf.mxu0
    %v1277 = vadd.f32 0.0, %v1276
    %1278 = vmatmul.f32.gmra.mxu0 %v1186
    %v1279 = vpop.f32.mrf.mxu0
    %v1280 = vadd.f32 0.0, %v1279
    %1281 = vmatmul.f32.gmra.mxu0 %v1187
    %v1282 = vpop.f32.mrf.mxu0
    %v1283 = vadd.f32 0.0, %v1282
    %1284 = vmatmul.f32.gmra.mxu0 %v1188
    %v1285 = vpop.f32.mrf.mxu0
    %v1286 = vadd.f32 0.0, %v1285
    %1287 = vmatmul.f32.gmra.mxu0 %v1189
    %v1288 = vpop.f32.mrf.mxu0
    %v1289 = vadd.f32 0.0, %v1288
    %1290 = vmatmul.f32.gmra.mxu0 %v1190
    %v1291 = vpop.f32.mrf.mxu0
    %v1292 = vadd.f32 0.0, %v1291
    %1293 = vmatmul.f32.gmra.mxu0 %v1191
    %v1294 = vpop.f32.mrf.mxu0
    %v1295 = vadd.f32 0.0, %v1294
    %1296 = vmatmul.f32.gmra.mxu0 %v1192
    %v1297 = vpop.f32.mrf.mxu0
    %v1298 = vadd.f32 0.0, %v1297
    %1299 = vmatmul.f32.gmra.mxu0 %v1193
    %v1300 = vpop.f32.mrf.mxu0
    %v1301 = vadd.f32 0.0, %v1300
    %1302 = vmatmul.f32.gmra.mxu0 %v1194
    %v1303 = vpop.f32.mrf.mxu0
    %v1304 = vadd.f32 0.0, %v1303
    %1305 = vmatmul.f32.gmra.mxu0 %v1195
    %v1306 = vpop.f32.mrf.mxu0
    %v1307 = vadd.f32 0.0, %v1306
    %1308 = vmatmul.f32.gmra.mxu0 %v1196
    %v1309 = vpop.f32.mrf.mxu0
    %v1310 = vadd.f32 0.0, %v1309
    %1311 = vmatmul.f32.gmra.mxu0 %v1197
    %v1312 = vpop.f32.mrf.mxu0
    %v1313 = vadd.f32 0.0, %v1312
    %1314 = vdwg.mxu0
    %1315 = vmatpush.msra.mxu0 0.0
    %1316 = vmatpush.msra.mxu0 0.0
    %1317 = vmatpush.msra.mxu0 0.0
    %1318 = vmatpush.msra.mxu0 0.0
    %1319 = vmatpush.msra.mxu0 0.0
    %1320 = vmatpush.msra.mxu0 0.0
    %1321 = vmatpush.msra.mxu0 0.0
    %1322 = vmatpush.msra.mxu0 0.0
    %1323 = vmatpush.msra.mxu0 0.0
    %1324 = vmatpush.msra.mxu0 0.0
    %1325 = vmatpush.msra.mxu0 0.0
    %1326 = vmatpush.msra.mxu0 0.0
    %1327 = vmatpush.msra.mxu0 %v1217
    %1328 = vmatpush.msra.mxu0 %v1216
    %1329 = vmatpush.msra.mxu0 %v1215
    %1330 = vmatpush.msra.mxu0 %v1214
    %1331 = vmatmul.f32.gmra.mxu0 %v1218
    %v1332 = vpop.f32.mrf.mxu0
    %v1333 = vadd.f32 %v1268, %v1332
    %1334 = vmatmul.f32.gmra.mxu0 %v1220
    %v1335 = vpop.f32.mrf.mxu0
    %v1336 = vadd.f32 %v1271, %v1335
    %1337 = vmatmul.f32.gmra.mxu0 %v1222
    %v1338 = vpop.f32.mrf.mxu0
    %v1339 = vadd.f32 %v1274, %v1338
    %1340 = vmatmul.f32.gmra.mxu0 %v1224
    %v1341 = vpop.f32.mrf.mxu0
    %v1342 = vadd.f32 %v1277, %v1341
    %1343 = vmatmul.f32.gmra.mxu0 %v1226
    %v1344 = vpop.f32.mrf.mxu0
    %v1345 = vadd.f32 %v1280, %v1344
    %1346 = vmatmul.f32.gmra.mxu0 %v1228
    %v1347 = vpop.f32.mrf.mxu0
    %v1348 = vadd.f32 %v1283, %v1347
    %1349 = vmatmul.f32.gmra.mxu0 %v1230
    %v1350 = vpop.f32.mrf.mxu0
    %v1351 = vadd.f32 %v1286, %v1350
    %1352 = vmatmul.f32.gmra.mxu0 %v1232
    %v1353 = vpop.f32.mrf.mxu0
    %v1354 = vadd.f32 %v1289, %v1353
    %1355 = vmatmul.f32.gmra.mxu0 %v1234
    %v1356 = vpop.f32.mrf.mxu0
    %v1357 = vadd.f32 %v1292, %v1356
    %1358 = vmatmul.f32.gmra.mxu0 %v1236
    %v1359 = vpop.f32.mrf.mxu0
    %v1360 = vadd.f32 %v1295, %v1359
    %1361 = vmatmul.f32.gmra.mxu0 %v1238
    %v1362 = vpop.f32.mrf.mxu0
    %v1363 = vadd.f32 %v1298, %v1362
    %1364 = vmatmul.f32.gmra.mxu0 %v1240
    %v1365 = vpop.f32.mrf.mxu0
    %v1366 = vadd.f32 %v1301, %v1365
    %1367 = vmatmul.f32.gmra.mxu0 %v1242
    %v1368 = vpop.f32.mrf.mxu0
    %v1369 = vadd.f32 %v1304, %v1368
    %1370 = vmatmul.f32.gmra.mxu0 %v1244
    %v1371 = vpop.f32.mrf.mxu0
    %v1372 = vadd.f32 %v1307, %v1371
    %1373 = vmatmul.f32.gmra.mxu0 %v1246
    %v1374 = vpop.f32.mrf.mxu0
    %v1375 = vadd.f32 %v1310, %v1374
    %1376 = vmatmul.f32.gmra.mxu0 %v1248
    %v1377 = vpop.f32.mrf.mxu0
    %v1378 = vadd.f32 %v1313, %v1377
    %1379 = vdwg.mxu0
    %v1380 = vmul.f32 %v1333, %v96
    %v1381 = vmul.f32 %v1336, %v97
    %v1382 = vmul.f32 %v1339, %v98
    %v1383 = vmul.f32 %v1342, %v99
    %v1384 = vmul.f32 %v1345, %v100
    %v1385 = vmul.f32 %v1348, %v101
    %v1386 = vmul.f32 %v1351, %v102
    %v1387 = vmul.f32 %v1354, %v103
    %v1388 = vmul.f32 %v1357, %v104
    %v1389 = vmul.f32 %v1360, %v105
    %v1390 = vmul.f32 %v1363, %v106
    %v1391 = vmul.f32 %v1366, %v107
    %v1392 = vmul.f32 %v1369, %v108
    %v1393 = vmul.f32 %v1372, %v109
    %v1394 = vmul.f32 %v1375, %v110
    %v1395 = vmul.f32 %v1378, %v111
    %v1396 = vsel %vm618, %v1380, 0.0
    %v1397 = vsel %vm618, %v1381, 0.0
    %v1398 = vadd.f32 %v1396, %v1397
    %v1399 = vsel %vm618, %v1382, 0.0
    %v1400 = vadd.f32 %v1398, %v1399
    %v1401 = vsel %vm618, %v1383, 0.0
    %v1402 = vadd.f32 %v1400, %v1401
    %v1403 = vsel %vm618, %v1384, 0.0
    %v1404 = vadd.f32 %v1402, %v1403
    %v1405 = vsel %vm618, %v1385, 0.0
    %v1406 = vadd.f32 %v1404, %v1405
    %v1407 = vsel %vm618, %v1386, 0.0
    %v1408 = vadd.f32 %v1406, %v1407
    %v1409 = vsel %vm618, %v1387, 0.0
    %v1410 = vadd.f32 %v1408, %v1409
    %v1411 = vsel %vm618, %v1388, 0.0
    %v1412 = vadd.f32 %v1410, %v1411
    %v1413 = vsel %vm618, %v1389, 0.0
    %v1414 = vadd.f32 %v1412, %v1413
    %v1415 = vsel %vm618, %v1390, 0.0
    %v1416 = vadd.f32 %v1414, %v1415
    %v1417 = vsel %vm618, %v1391, 0.0
    %v1418 = vadd.f32 %v1416, %v1417
    %v1419 = vsel %vm618, %v1392, 0.0
    %v1420 = vadd.f32 %v1418, %v1419
    %v1421 = vsel %vm618, %v1393, 0.0
    %v1422 = vadd.f32 %v1420, %v1421
    %v1423 = vsel %vm618, %v1394, 0.0
    %v1424 = vadd.f32 %v1422, %v1423
    %v1425 = vsel %vm648, %v1395, 0.0
    %v1426 = vadd.f32 %v1424, %v1425
    %v1427 = vrot.slane %v1426, 4
    %v1428 = vadd.f32 %v1426, %v1427
    %v1429 = vrot.slane %v1428, 2
    %v1430 = vadd.f32 %v1428, %v1429
    %v1431 = vrot.slane %v1430, 1
    %v1432 = vadd.f32 %v1430, %v1431
    %v1433 = vmul.f32 %v1432, 0.008333334
    %v1434 = vsub.f32 %v1333, %v1433
    %v1435 = vsub.f32 %v1336, %v1433
    %v1436 = vsub.f32 %v1339, %v1433
    %v1437 = vsub.f32 %v1342, %v1433
    %v1438 = vsub.f32 %v1345, %v1433
    %v1439 = vsub.f32 %v1348, %v1433
    %v1440 = vsub.f32 %v1351, %v1433
    %v1441 = vsub.f32 %v1354, %v1433
    %v1442 = vsub.f32 %v1357, %v1433
    %v1443 = vsub.f32 %v1360, %v1433
    %v1444 = vsub.f32 %v1363, %v1433
    %v1445 = vsub.f32 %v1366, %v1433
    %v1446 = vsub.f32 %v1369, %v1433
    %v1447 = vsub.f32 %v1372, %v1433
    %v1448 = vsub.f32 %v1375, %v1433
    %v1449 = vsub.f32 %v1378, %v1433
    %v1450 = vmul.f32 %v1434, %v96
    %v1451 = vmul.f32 %v1435, %v97
    %v1452 = vmul.f32 %v1436, %v98
    %v1453 = vmul.f32 %v1437, %v99
    %v1454 = vmul.f32 %v1438, %v100
    %v1455 = vmul.f32 %v1439, %v101
    %v1456 = vmul.f32 %v1440, %v102
    %v1457 = vmul.f32 %v1441, %v103
    %v1458 = vmul.f32 %v1442, %v104
    %v1459 = vmul.f32 %v1443, %v105
    %v1460 = vmul.f32 %v1444, %v106
    %v1461 = vmul.f32 %v1445, %v107
    %v1462 = vmul.f32 %v1446, %v108
    %v1463 = vmul.f32 %v1447, %v109
    %v1464 = vmul.f32 %v1448, %v110
    %v1465 = vmul.f32 %v1449, %v111
    %v1466 = vmul.f32 %v1450, %v1450
    %v1467 = vmul.f32 %v1451, %v1451
    %v1468 = vmul.f32 %v1452, %v1452
    %v1469 = vmul.f32 %v1453, %v1453
    %v1470 = vmul.f32 %v1454, %v1454
    %v1471 = vmul.f32 %v1455, %v1455
    %v1472 = vmul.f32 %v1456, %v1456
    %v1473 = vmul.f32 %v1457, %v1457
    %v1474 = vmul.f32 %v1458, %v1458
    %v1475 = vmul.f32 %v1459, %v1459
    %v1476 = vmul.f32 %v1460, %v1460
    %v1477 = vmul.f32 %v1461, %v1461
    %v1478 = vmul.f32 %v1462, %v1462
    %v1479 = vmul.f32 %v1463, %v1463
    %v1480 = vmul.f32 %v1464, %v1464
    %v1481 = vmul.f32 %v1465, %v1465
    %v1482 = vsel %vm618, %v1466, 0.0
    %v1483 = vsel %vm618, %v1467, 0.0
    %v1484 = vadd.f32 %v1482, %v1483
    %v1485 = vsel %vm618, %v1468, 0.0
    %v1486 = vadd.f32 %v1484, %v1485
    %v1487 = vsel %vm618, %v1469, 0.0
    %v1488 = vadd.f32 %v1486, %v1487
    %v1489 = vsel %vm618, %v1470, 0.0
    %v1490 = vadd.f32 %v1488, %v1489
    %v1491 = vsel %vm618, %v1471, 0.0
    %v1492 = vadd.f32 %v1490, %v1491
    %v1493 = vsel %vm618, %v1472, 0.0
    %v1494 = vadd.f32 %v1492, %v1493
    %v1495 = vsel %vm618, %v1473, 0.0
    %v1496 = vadd.f32 %v1494, %v1495
    %v1497 = vsel %vm618, %v1474, 0.0
    %v1498 = vadd.f32 %v1496, %v1497
    %v1499 = vsel %vm618, %v1475, 0.0
    %v1500 = vadd.f32 %v1498, %v1499
    %v1501 = vsel %vm618, %v1476, 0.0
    %v1502 = vadd.f32 %v1500, %v1501
    %v1503 = vsel %vm618, %v1477, 0.0
    %v1504 = vadd.f32 %v1502, %v1503
    %v1505 = vsel %vm618, %v1478, 0.0
    %v1506 = vadd.f32 %v1504, %v1505
    %v1507 = vsel %vm618, %v1479, 0.0
    %v1508 = vadd.f32 %v1506, %v1507
    %v1509 = vsel %vm618, %v1480, 0.0
    %v1510 = vadd.f32 %v1508, %v1509
    %v1511 = vsel %vm648, %v1481, 0.0
    %v1512 = vadd.f32 %v1510, %v1511
    %v1513 = vrot.slane %v1512, 4
    %v1514 = vadd.f32 %v1512, %v1513
    %v1515 = vrot.slane %v1514, 2
    %v1516 = vadd.f32 %v1514, %v1515
    %v1517 = vrot.slane %v1516, 1
    %v1518 = vadd.f32 %v1516, %v1517
    %v1519 = vmul.f32 %v1518, 0.008333334
    %v1520 = vadd.f32 %v1519, 1e-05
    %v1521 = vrsqrt.pop %v1520
    %v1522 = vmul.f32 %v1521, %v1520
    %v1523 = vmul.f32 %v1522, %v1521
    %v1524 = vmul.f32 0.5, %v1523
    %v1525 = vsub.f32 1.5, %v1524
    %v1526 = vmul.f32 %v1521, %v1525
    %vm1527 = vweird.f32 %v1520
    %vm1528 = vweird.f32 %v1521
    %vm1529 = vmor %vm1527, %vm1528
    %v1530 = vsel %vm1529, %v1521, %v1526
    %v1531 = vmul.f32 %v1434, %v1530
    %v1532 = vmul.f32 %v1435, %v1530
    %v1533 = vmul.f32 %v1436, %v1530
    %v1534 = vmul.f32 %v1437, %v1530
    %v1535 = vmul.f32 %v1438, %v1530
    %v1536 = vmul.f32 %v1439, %v1530
    %v1537 = vmul.f32 %v1440, %v1530
    %v1538 = vmul.f32 %v1441, %v1530
    %v1539 = vmul.f32 %v1442, %v1530
    %v1540 = vmul.f32 %v1443, %v1530
    %v1541 = vmul.f32 %v1444, %v1530
    %v1542 = vmul.f32 %v1445, %v1530
    %v1543 = vmul.f32 %v1446, %v1530
    %v1544 = vmul.f32 %v1447, %v1530
    %v1545 = vmul.f32 %v1448, %v1530
    %v1546 = vmul.f32 %v1449, %v1530
    %v1547 = vperm.slane %v114, 0
    %v1548 = vmul.f32 %v1531, %v1547
    %v1549 = vmul.f32 %v1532, %v1547
    %v1550 = vmul.f32 %v1533, %v1547
    %v1551 = vmul.f32 %v1534, %v1547
    %v1552 = vmul.f32 %v1535, %v1547
    %v1553 = vmul.f32 %v1536, %v1547
    %v1554 = vmul.f32 %v1537, %v1547
    %v1555 = vmul.f32 %v1538, %v1547
    %v1556 = vmul.f32 %v1539, %v1547
    %v1557 = vmul.f32 %v1540, %v1547
    %v1558 = vmul.f32 %v1541, %v1547
    %v1559 = vmul.f32 %v1542, %v1547
    %v1560 = vmul.f32 %v1543, %v1547
    %v1561 = vmul.f32 %v1544, %v1547
    %v1562 = vmul.f32 %v1545, %v1547
    %v1563 = vmul.f32 %v1546, %v1547
    %v1564 = vperm.slane %v115, 0
    %v1565 = vadd.f32 %v1548, %v1564
    %v1566 = vadd.f32 %v1549, %v1564
    %v1567 = vadd.f32 %v1550, %v1564
    %v1568 = vadd.f32 %v1551, %v1564
    %v1569 = vadd.f32 %v1552, %v1564
    %v1570 = vadd.f32 %v1553, %v1564
    %v1571 = vadd.f32 %v1554, %v1564
    %v1572 = vadd.f32 %v1555, %v1564
    %v1573 = vadd.f32 %v1556, %v1564
    %v1574 = vadd.f32 %v1557, %v1564
    %v1575 = vadd.f32 %v1558, %v1564
    %v1576 = vadd.f32 %v1559, %v1564
    %v1577 = vadd.f32 %v1560, %v1564
    %v1578 = vadd.f32 %v1561, %v1564
    %v1579 = vadd.f32 %v1562, %v1564
    %v1580 = vadd.f32 %v1563, %v1564
    %v1581 = vtanh.pop %v1565
    %v1582 = vtanh.pop %v1566
    %v1583 = vtanh.pop %v1567
    %v1584 = vtanh.pop %v1568
    %v1585 = vtanh.pop %v1569
    %v1586 = vtanh.pop %v1570
    %v1587 = vtanh.pop %v1571
    %v1588 = vtanh.pop %v1572
    %v1589 = vtanh.pop %v1573
    %v1590 = vtanh.pop %v1574
    %v1591 = vtanh.pop %v1575
    %v1592 = vtanh.pop %v1576
    %v1593 = vtanh.pop %v1577
    %v1594 = vtanh.pop %v1578
    %v1595 = vtanh.pop %v1579
    %v1596 = vtanh.pop %v1580
    %v1597 = vmul.f32 %v1581, %v96
    %v1598 = vmul.f32 %v1582, %v97
    %v1599 = vmul.f32 %v1583, %v98
    %v1600 = vmul.f32 %v1584, %v99
    %v1601 = vmul.f32 %v1585, %v100
    %v1602 = vmul.f32 %v1586, %v101
    %v1603 = vmul.f32 %v1587, %v102
    %v1604 = vmul.f32 %v1588, %v103
    %v1605 = vmul.f32 %v1589, %v104
    %v1606 = vmul.f32 %v1590, %v105
    %v1607 = vmul.f32 %v1591, %v106
    %v1608 = vmul.f32 %v1592, %v107
    %v1609 = vmul.f32 %v1593, %v108
    %v1610 = vmul.f32 %v1594, %v109
    %v1611 = vmul.f32 %v1595, %v110
    %v1612 = vmul.f32 %v1596, %v111
    %v1629 = vrot.slane %v1597, 4
    %v1630 = vrot.slane %v1598, 4
    %v1631 = vsel %vm538, %v1629, %v1630
    %v1632 = vrot.slane %v1599, 4
    %v1633 = vsel %vm538, %v1630, %v1632
    %v1634 = vrot.slane %v1600, 4
    %v1635 = vsel %vm538, %v1632, %v1634
    %v1636 = vrot.slane %v1601, 4
    %v1637 = vsel %vm538, %v1634, %v1636
    %v1638 = vrot.slane %v1602, 4
    %v1639 = vsel %vm538, %v1636, %v1638
    %v1640 = vrot.slane %v1603, 4
    %v1641 = vsel %vm538, %v1638, %v1640
    %v1642 = vrot.slane %v1604, 4
    %v1643 = vsel %vm538, %v1640, %v1642
    %v1644 = vrot.slane %v1605, 4
    %v1645 = vsel %vm538, %v1642, %v1644
    %v1646 = vrot.slane %v1606, 4
    %v1647 = vsel %vm538, %v1644, %v1646
    %v1648 = vrot.slane %v1607, 4
    %v1649 = vsel %vm538, %v1646, %v1648
    %v1650 = vrot.slane %v1608, 4
    %v1651 = vsel %vm538, %v1648, %v1650
    %v1652 = vrot.slane %v1609, 4
    %v1653 = vsel %vm538, %v1650, %v1652
    %v1654 = vrot.slane %v1610, 4
    %v1655 = vsel %vm538, %v1652, %v1654
    %v1656 = vrot.slane %v1611, 4
    %v1657 = vsel %vm538, %v1654, %v1656
    %v1658 = vrot.slane %v1612, 4
    %v1659 = vsel %vm538, %v1656, %v1658
    %v1676 = vsel %vm538, 0.0, %v1629
    %1677 = vst.msk [vmem:[#allocation2] sm:$0xff] %vm618, %v1676
    %1678 = vst.msk [vmem:[#allocation2 + $0x8] sm:$0xff] %vm618, %v1631
    %1679 = vst.msk [vmem:[#allocation2 + $0x10] sm:$0xff] %vm618, %v1633
    %1680 = vst.msk [vmem:[#allocation2 + $0x18] sm:$0xff] %vm618, %v1635
    %1681 = vst.msk [vmem:[#allocation2 + $0x20] sm:$0xff] %vm618, %v1637
    %1682 = vst.msk [vmem:[#allocation2 + $0x28] sm:$0xff] %vm618, %v1639
    %1683 = vst.msk [vmem:[#allocation2 + $0x30] sm:$0xff] %vm618, %v1641
    %1684 = vst.msk [vmem:[#allocation2 + $0x38] sm:$0xff] %vm618, %v1643
    %1685 = vst.msk [vmem:[#allocation2 + $0x40] sm:$0xff] %vm618, %v1645
    %1686 = vst.msk [vmem:[#allocation2 + $0x48] sm:$0xff] %vm618, %v1647
    %1687 = vst.msk [vmem:[#allocation2 + $0x50] sm:$0xff] %vm618, %v1649
    %1688 = vst.msk [vmem:[#allocation2 + $0x58] sm:$0xff] %vm618, %v1651
    %1689 = vst.msk [vmem:[#allocation2 + $0x60] sm:$0xff] %vm618, %v1653
    %1690 = vst.msk [vmem:[#allocation2 + $0x68] sm:$0xff] %vm618, %v1655
    %1691 = vst.msk [vmem:[#allocation2 + $0x70] sm:$0xff] %vm618, %v1657
    %1692 = vst.msk [vmem:[#allocation2 + $0x78] sm:$0xff] %vm618, %v1659
    %v1693 = vld [vmem:[#allocation2] ss:$2 sm:$0xff]
    %s1694 = scalar_lea.vmem [#allocation2], 16
    %v1695 = vld [vmem:[%s1694] ss:$2 sm:$0xff]
    %s1696 = scalar_lea.vmem [#allocation2], 32
    %v1697 = vld [vmem:[%s1696] ss:$2 sm:$0xff]
    %s1698 = scalar_lea.vmem [#allocation2], 48
    %v1699 = vld [vmem:[%s1698] ss:$2 sm:$0xff]
    %s1700 = scalar_lea.vmem [#allocation2], 64
    %v1701 = vld [vmem:[%s1700] ss:$2 sm:$0xff]
    %s1702 = scalar_lea.vmem [#allocation2], 80
    %v1703 = vld [vmem:[%s1702] ss:$2 sm:$0xff]
    %s1704 = scalar_lea.vmem [#allocation2], 96
    %v1705 = vld [vmem:[%s1704] ss:$2 sm:$0xff]
    %s1706 = scalar_lea.vmem [#allocation2], 112
    %v1707 = vld [vmem:[%s1706] ss:$2 sm:$0xff]
    %s1708 = scalar_lea.vmem [#allocation2], 1
    %v1709 = vld [vmem:[%s1708] ss:$2 sm:$0xff]
    %s1710 = scalar_lea.vmem [#allocation2], 17
    %v1711 = vld [vmem:[%s1710] ss:$2 sm:$0xff]
    %s1712 = scalar_lea.vmem [#allocation2], 33
    %v1713 = vld [vmem:[%s1712] ss:$2 sm:$0xff]
    %s1714 = scalar_lea.vmem [#allocation2], 49
    %v1715 = vld [vmem:[%s1714] ss:$2 sm:$0xff]
    %s1716 = scalar_lea.vmem [#allocation2], 65
    %v1717 = vld [vmem:[%s1716] ss:$2 sm:$0xff]
    %s1718 = scalar_lea.vmem [#allocation2], 81
    %v1719 = vld [vmem:[%s1718] ss:$2 sm:$0xff]
    %s1720 = scalar_lea.vmem [#allocation2], 97
    %v1721 = vld [vmem:[%s1720] ss:$2 sm:$0xff]
    %s1722 = scalar_lea.vmem [#allocation2], 113
    %v1723 = vld [vmem:[%s1722] ss:$2 sm:$0xff]
    %v1724 = vmax.f32 %v1693, %v1709
    %v1725 = vmax.f32 %v1695, %v1711
    %v1726 = vmax.f32 %v1697, %v1713
    %v1727 = vmax.f32 %v1699, %v1715
    %v1728 = vmax.f32 %v1701, %v1717
    %v1729 = vmax.f32 %v1703, %v1719
    %v1730 = vmax.f32 %v1705, %v1721
    %v1731 = vmax.f32 %v1707, %v1723
    %v1732 = vand.u32 %v32, 31
    %v1733 = vand.u32 %v33, 31
    %v1734 = vand.u32 %v34, 31
    %v1735 = vand.u32 %v35, 31
    %v1736 = vand.u32 %v36, 31
    %v1737 = vand.u32 %v37, 31
    %v1738 = vand.u32 %v38, 31
    %v1739 = vand.u32 %v39, 31
    %vm1740 = vcmp.lt.s32.totalorder %v1732, 28
    %vm1741 = vcmp.lt.s32.totalorder %v1733, 28
    %vm1742 = vcmp.lt.s32.totalorder %v1734, 28
    %vm1743 = vcmp.lt.s32.totalorder %v1735, 28
    %vm1744 = vcmp.lt.s32.totalorder %v1736, 28
    %vm1745 = vcmp.lt.s32.totalorder %v1737, 28
    %vm1746 = vcmp.lt.s32.totalorder %v1738, 28
    %vm1747 = vcmp.lt.s32.totalorder %v1739, 28
    %v1748 = vsel %vm1740, 1, 0
    %v1749 = vsel %vm1741, 1, 0
    %v1750 = vsel %vm1742, 1, 0
    %v1751 = vsel %vm1743, 1, 0
    %v1752 = vsel %vm1744, 1, 0
    %v1753 = vsel %vm1745, 1, 0
    %v1754 = vsel %vm1746, 1, 0
    %v1755 = vsel %vm1747, 1, 0
    %v1756 = vcvt.s32.f32 %v1748
    %v1757 = vcvt.s32.f32 %v1749
    %v1758 = vcvt.s32.f32 %v1750
    %v1759 = vcvt.s32.f32 %v1751
    %v1760 = vcvt.s32.f32 %v1752
    %v1761 = vcvt.s32.f32 %v1753
    %v1762 = vcvt.s32.f32 %v1754
    %v1763 = vcvt.s32.f32 %v1755
    %v1764 = vld [vmem:[%s2 + $0x4] sm:$0x1]
    %v1765 = vld [vmem:[%s2 + $0x5] sm:$0x1]
    %v1766 = vld [vmem:[%s2 + $0x6] sm:$0x1]
    %v1767 = vld [vmem:[%s2 + $0x7] sm:$0x1]
    %v1776 = vrot.slane %v1724, 1
    %v1777 = vrot.slane %v1725, 1
    %v1778 = vsel %vm247, %v1776, %v1777
    %v1779 = vrot.slane %v1726, 1
    %v1780 = vsel %vm247, %v1777, %v1779
    %v1781 = vrot.slane %v1727, 1
    %v1782 = vsel %vm247, %v1779, %v1781
    %v1783 = vrot.slane %v1728, 1
    %v1784 = vsel %vm247, %v1781, %v1783
    %v1785 = vrot.slane %v1729, 1
    %v1786 = vsel %vm247, %v1783, %v1785
    %v1787 = vrot.slane %v1730, 1
    %v1788 = vsel %vm247, %v1785, %v1787
    %v1789 = vrot.slane %v1731, 1
    %v1790 = vsel %vm247, %v1787, %v1789
    %1791 = vrot.lane.b32.xlu0 %v1778, 32
    %v1792 = vpop.permute.xlu0 %1791
    %1793 = vrot.lane.b32.xlu0 %v1780, 32
    %v1794 = vpop.permute.xlu0 %1793
    %1795 = vrot.lane.b32.xlu0 %v1782, 32
    %v1796 = vpop.permute.xlu0 %1795
    %1797 = vrot.lane.b32.xlu0 %v1784, 32
    %v1798 = vpop.permute.xlu0 %1797
    %1799 = vrot.lane.b32.xlu0 %v1786, 32
    %v1800 = vpop.permute.xlu0 %1799
    %1801 = vrot.lane.b32.xlu0 %v1788, 32
    %v1802 = vpop.permute.xlu0 %1801
    %1803 = vrot.lane.b32.xlu0 %v1790, 32
    %v1804 = vpop.permute.xlu0 %1803
    %1805 = vrot.lane.b32.xlu0 %v1789, 32
    %v1806 = vpop.permute.xlu0 %1805
    %v1815 = vrot.slane %v1724, 2
    %v1816 = vrot.slane %v1725, 2
    %v1817 = vsel %vm344, %v1815, %v1816
    %v1818 = vrot.slane %v1726, 2
    %v1819 = vsel %vm344, %v1816, %v1818
    %v1820 = vrot.slane %v1727, 2
    %v1821 = vsel %vm344, %v1818, %v1820
    %v1822 = vrot.slane %v1728, 2
    %v1823 = vsel %vm344, %v1820, %v1822
    %v1824 = vrot.slane %v1729, 2
    %v1825 = vsel %vm344, %v1822, %v1824
    %v1826 = vrot.slane %v1730, 2
    %v1827 = vsel %vm344, %v1824, %v1826
    %v1828 = vrot.slane %v1731, 2
    %v1829 = vsel %vm344, %v1826, %v1828
    %1830 = vrot.lane.b32.xlu0 %v1817, 64
    %v1831 = vpop.permute.xlu0 %1830
    %1832 = vrot.lane.b32.xlu0 %v1819, 64
    %v1833 = vpop.permute.xlu0 %1832
    %1834 = vrot.lane.b32.xlu0 %v1821, 64
    %v1835 = vpop.permute.xlu0 %1834
    %1836 = vrot.lane.b32.xlu0 %v1823, 64
    %v1837 = vpop.permute.xlu0 %1836
    %1838 = vrot.lane.b32.xlu0 %v1825, 64
    %v1839 = vpop.permute.xlu0 %1838
    %1840 = vrot.lane.b32.xlu0 %v1827, 64
    %v1841 = vpop.permute.xlu0 %1840
    %1842 = vrot.lane.b32.xlu0 %v1829, 64
    %v1843 = vpop.permute.xlu0 %1842
    %1844 = vrot.lane.b32.xlu0 %v1828, 64
    %v1845 = vpop.permute.xlu0 %1844
    %v1854 = vrot.slane %v1724, 3
    %v1855 = vrot.slane %v1725, 3
    %v1856 = vsel %vm441, %v1854, %v1855
    %v1857 = vrot.slane %v1726, 3
    %v1858 = vsel %vm441, %v1855, %v1857
    %v1859 = vrot.slane %v1727, 3
    %v1860 = vsel %vm441, %v1857, %v1859
    %v1861 = vrot.slane %v1728, 3
    %v1862 = vsel %vm441, %v1859, %v1861
    %v1863 = vrot.slane %v1729, 3
    %v1864 = vsel %vm441, %v1861, %v1863
    %v1865 = vrot.slane %v1730, 3
    %v1866 = vsel %vm441, %v1863, %v1865
    %v1867 = vrot.slane %v1731, 3
    %v1868 = vsel %vm441, %v1865, %v1867
    %1869 = vrot.lane.b32.xlu0 %v1856, 96
    %v1870 = vpop.permute.xlu0 %1869
    %1871 = vrot.lane.b32.xlu0 %v1858, 96
    %v1872 = vpop.permute.xlu0 %1871
    %1873 = vrot.lane.b32.xlu0 %v1860, 96
    %v1874 = vpop.permute.xlu0 %1873
    %1875 = vrot.lane.b32.xlu0 %v1862, 96
    %v1876 = vpop.permute.xlu0 %1875
    %1877 = vrot.lane.b32.xlu0 %v1864, 96
    %v1878 = vpop.permute.xlu0 %1877
    %1879 = vrot.lane.b32.xlu0 %v1866, 96
    %v1880 = vpop.permute.xlu0 %1879
    %1881 = vrot.lane.b32.xlu0 %v1868, 96
    %v1882 = vpop.permute.xlu0 %1881
    %1883 = vrot.lane.b32.xlu0 %v1867, 96
    %v1884 = vpop.permute.xlu0 %1883
    %v1893 = vrot.slane %v1724, 4
    %v1894 = vrot.slane %v1725, 4
    %v1895 = vsel %vm538, %v1893, %v1894
    %v1896 = vrot.slane %v1726, 4
    %v1897 = vsel %vm538, %v1894, %v1896
    %v1898 = vrot.slane %v1727, 4
    %v1899 = vsel %vm538, %v1896, %v1898
    %v1900 = vrot.slane %v1728, 4
    %v1901 = vsel %vm538, %v1898, %v1900
    %v1902 = vrot.slane %v1729, 4
    %v1903 = vsel %vm538, %v1900, %v1902
    %v1904 = vrot.slane %v1730, 4
    %v1905 = vsel %vm538, %v1902, %v1904
    %v1906 = vrot.slane %v1731, 4
    %v1907 = vsel %vm538, %v1904, %v1906
    %v1908 = vsel %vm618, %v1724, %v1792
    %v1909 = vsel %vm618, %v1725, %v1794
    %v1910 = vsel %vm618, %v1726, %v1796
    %v1911 = vsel %vm618, %v1727, %v1798
    %v1912 = vsel %vm618, %v1728, %v1800
    %v1913 = vsel %vm618, %v1729, %v1802
    %v1914 = vsel %vm618, %v1730, %v1804
    %v1915 = vsel %vm618, %v1731, %v1806
    %v1916 = vsel %vm1164, %v1908, %v1831
    %v1917 = vsel %vm1164, %v1909, %v1833
    %v1918 = vsel %vm1164, %v1910, %v1835
    %v1919 = vsel %vm1164, %v1911, %v1837
    %v1920 = vsel %vm1164, %v1912, %v1839
    %v1921 = vsel %vm1164, %v1913, %v1841
    %v1922 = vsel %vm1164, %v1914, %v1843
    %v1923 = vsel %vm1164, %v1915, %v1845
    %v1924 = vsel %vm1181, %v1916, %v1870
    %v1925 = vsel %vm1181, %v1917, %v1872
    %v1926 = vsel %vm1181, %v1918, %v1874
    %v1927 = vsel %vm1181, %v1919, %v1876
    %v1928 = vsel %vm1181, %v1920, %v1878
    %v1929 = vsel %vm1181, %v1921, %v1880
    %v1930 = vsel %vm1181, %v1922, %v1882
    %v1931 = vsel %vm1181, %v1923, %v1884
    %v1932 = vld [vmem:[%s1 + $0xa8] sm:$0xff]
    %v1933 = vld [vmem:[%s1 + $0xb0] sm:$0xff]
    %v1934 = vld [vmem:[%s1 + $0xb8] sm:$0xff]
    %v1935 = vld [vmem:[%s1 + $0xc0] sm:$0xff]
    %v1936 = vld [vmem:[%s1 + $0xc8] sm:$0xff]
    %v1937 = vld [vmem:[%s1 + $0xd0] sm:$0xff]
    %v1938 = vld [vmem:[%s1 + $0xd8] sm:$0xff]
    %v1939 = vld [vmem:[%s1 + $0xe0] sm:$0xff]
    %v1940 = vld [vmem:[%s1 + $0xe8] sm:$0xff]
    %v1941 = vld [vmem:[%s1 + $0xf0] sm:$0xff]
    %v1942 = vld [vmem:[%s1 + $0xf8] sm:$0xff]
    %v1943 = vld [vmem:[%s1 + $0x100] sm:$0xff]
    %v1944 = vld [vmem:[%s1 + $0x108] sm:$0xff]
    %v1945 = vld [vmem:[%s1 + $0x110] sm:$0xff]
    %v1946 = vld [vmem:[%s1 + $0x118] sm:$0xff]
    %v1947 = vld [vmem:[%s1 + $0x120] sm:$0xff]
    %v1948 = vld [vmem:[%s1 + $0x128] sm:$0xff]
    %v1949 = vld [vmem:[%s1 + $0x130] sm:$0xff]
    %v1950 = vld [vmem:[%s1 + $0x138] sm:$0xff]
    %v1951 = vld [vmem:[%s1 + $0x140] sm:$0xff]
    %v1952 = vsel %vm618, %v1895, 0
    %v1954 = vsel %vm618, %v1897, 0
    %v1956 = vsel %vm618, %v1899, 0
    %v1958 = vsel %vm618, %v1901, 0
    %v1960 = vsel %vm618, %v1903, 0
    %v1962 = vsel %vm618, %v1905, 0
    %v1964 = vsel %vm618, %v1907, 0
    %v1966 = vsel %vm618, %v1906, 0
    %1968 = vmatpush.msra.mxu0 %v1947
    %1969 = vmatpush.msra.mxu0 %v1946
    %1970 = vmatpush.msra.mxu0 %v1945
    %1971 = vmatpush.msra.mxu0 %v1944
    %1972 = vmatpush.msra.mxu0 %v1943
    %1973 = vmatpush.msra.mxu0 %v1942
    %1974 = vmatpush.msra.mxu0 %v1941
    %1975 = vmatpush.msra.mxu0 %v1940
    %1976 = vmatpush.msra.mxu0 %v1939
    %1977 = vmatpush.msra.mxu0 %v1938
    %1978 = vmatpush.msra.mxu0 %v1937
    %1979 = vmatpush.msra.mxu0 %v1936
    %1980 = vmatpush.msra.mxu0 %v1935
    %1981 = vmatpush.msra.mxu0 %v1934
    %1982 = vmatpush.msra.mxu0 %v1933
    %1983 = vmatpush.msra.mxu0 %v1932
    %1984 = vmatmul.f32.gmra.mxu0 %v1924
    %v1985 = vpop.f32.mrf.mxu0
    %v1986 = vadd.f32 0.0, %v1985
    %1987 = vmatmul.f32.gmra.mxu0 %v1925
    %v1988 = vpop.f32.mrf.mxu0
    %v1989 = vadd.f32 0.0, %v1988
    %1990 = vmatmul.f32.gmra.mxu0 %v1926
    %v1991 = vpop.f32.mrf.mxu0
    %v1992 = vadd.f32 0.0, %v1991
    %1993 = vmatmul.f32.gmra.mxu0 %v1927
    %v1994 = vpop.f32.mrf.mxu0
    %v1995 = vadd.f32 0.0, %v1994
    %1996 = vmatmul.f32.gmra.mxu0 %v1928
    %v1997 = vpop.f32.mrf.mxu0
    %v1998 = vadd.f32 0.0, %v1997
    %1999 = vmatmul.f32.gmra.mxu0 %v1929
    %v2000 = vpop.f32.mrf.mxu0
    %v2001 = vadd.f32 0.0, %v2000
    %2002 = vmatmul.f32.gmra.mxu0 %v1930
    %v2003 = vpop.f32.mrf.mxu0
    %v2004 = vadd.f32 0.0, %v2003
    %2005 = vmatmul.f32.gmra.mxu0 %v1931
    %v2006 = vpop.f32.mrf.mxu0
    %v2007 = vadd.f32 0.0, %v2006
    %2008 = vdwg.mxu0
    %2009 = vmatpush.msra.mxu0 0.0
    %2010 = vmatpush.msra.mxu0 0.0
    %2011 = vmatpush.msra.mxu0 0.0
    %2012 = vmatpush.msra.mxu0 0.0
    %2013 = vmatpush.msra.mxu0 0.0
    %2014 = vmatpush.msra.mxu0 0.0
    %2015 = vmatpush.msra.mxu0 0.0
    %2016 = vmatpush.msra.mxu0 0.0
    %2017 = vmatpush.msra.mxu0 0.0
    %2018 = vmatpush.msra.mxu0 0.0
    %2019 = vmatpush.msra.mxu0 0.0
    %2020 = vmatpush.msra.mxu0 0.0
    %2021 = vmatpush.msra.mxu0 %v1951
    %2022 = vmatpush.msra.mxu0 %v1950
    %2023 = vmatpush.msra.mxu0 %v1949
    %2024 = vmatpush.msra.mxu0 %v1948
    %2025 = vmatmul.f32.gmra.mxu0 %v1952
    %v2026 = vpop.f32.mrf.mxu0
    %v2027 = vadd.f32 %v1986, %v2026
    %2028 = vmatmul.f32.gmra.mxu0 %v1954
    %v2029 = vpop.f32.mrf.mxu0
    %v2030 = vadd.f32 %v1989, %v2029
    %2031 = vmatmul.f32.gmra.mxu0 %v1956
    %v2032 = vpop.f32.mrf.mxu0
    %v2033 = vadd.f32 %v1992, %v2032
    %2034 = vmatmul.f32.gmra.mxu0 %v1958
    %v2035 = vpop.f32.mrf.mxu0
    %v2036 = vadd.f32 %v1995, %v2035
    %2037 = vmatmul.f32.gmra.mxu0 %v1960
    %v2038 = vpop.f32.mrf.mxu0
    %v2039 = vadd.f32 %v1998, %v2038
    %2040 = vmatmul.f32.gmra.mxu0 %v1962
    %v2041 = vpop.f32.mrf.mxu0
    %v2042 = vadd.f32 %v2001, %v2041
    %2043 = vmatmul.f32.gmra.mxu0 %v1964
    %v2044 = vpop.f32.mrf.mxu0
    %v2045 = vadd.f32 %v2004, %v2044
    %2046 = vmatmul.f32.gmra.mxu0 %v1966
    %v2047 = vpop.f32.mrf.mxu0
    %v2048 = vadd.f32 %v2007, %v2047
    %2049 = vdwg.mxu0
    %v2050 = vmul.f32 %v2027, %v1756
    %v2051 = vmul.f32 %v2030, %v1757
    %v2052 = vmul.f32 %v2033, %v1758
    %v2053 = vmul.f32 %v2036, %v1759
    %v2054 = vmul.f32 %v2039, %v1760
    %v2055 = vmul.f32 %v2042, %v1761
    %v2056 = vmul.f32 %v2045, %v1762
    %v2057 = vmul.f32 %v2048, %v1763
    %vm2058 = vcmask 130048
    %v2059 = vsel %vm2058, %v2050, 0.0
    %v2060 = vsel %vm2058, %v2051, 0.0
    %v2061 = vadd.f32 %v2059, %v2060
    %v2062 = vsel %vm2058, %v2052, 0.0
    %v2063 = vadd.f32 %v2061, %v2062
    %v2064 = vsel %vm2058, %v2053, 0.0
    %v2065 = vadd.f32 %v2063, %v2064
    %v2066 = vsel %vm2058, %v2054, 0.0
    %v2067 = vadd.f32 %v2065, %v2066
    %v2068 = vsel %vm2058, %v2055, 0.0
    %v2069 = vadd.f32 %v2067, %v2068
    %v2070 = vsel %vm2058, %v2056, 0.0
    %v2071 = vadd.f32 %v2069, %v2070
    %vm2072 = vcmask 125952
    %v2073 = vsel %vm2072, %v2057, 0.0
    %v2074 = vadd.f32 %v2071, %v2073
    %v2075 = vrot.slane %v2074, 4
    %v2076 = vadd.f32 %v2074, %v2075
    %v2077 = vrot.slane %v2076, 2
    %v2078 = vadd.f32 %v2076, %v2077
    %v2079 = vrot.slane %v2078, 1
    %v2080 = vadd.f32 %v2078, %v2079
    %v2081 = vmul.f32 %v2080, 0.017857144
    %v2082 = vsub.f32 %v2027, %v2081
    %v2083 = vsub.f32 %v2030, %v2081
    %v2084 = vsub.f32 %v2033, %v2081
    %v2085 = vsub.f32 %v2036, %v2081
    %v2086 = vsub.f32 %v2039, %v2081
    %v2087 = vsub.f32 %v2042, %v2081
    %v2088 = vsub.f32 %v2045, %v2081
    %v2089 = vsub.f32 %v2048, %v2081
    %v2090 = vmul.f32 %v2082, %v1756
    %v2091 = vmul.f32 %v2083, %v1757
    %v2092 = vmul.f32 %v2084, %v1758
    %v2093 = vmul.f32 %v2085, %v1759
    %v2094 = vmul.f32 %v2086, %v1760
    %v2095 = vmul.f32 %v2087, %v1761
    %v2096 = vmul.f32 %v2088, %v1762
    %v2097 = vmul.f32 %v2089, %v1763
    %v2098 = vmul.f32 %v2090, %v2090
    %v2099 = vmul.f32 %v2091, %v2091
    %v2100 = vmul.f32 %v2092, %v2092
    %v2101 = vmul.f32 %v2093, %v2093
    %v2102 = vmul.f32 %v2094, %v2094
    %v2103 = vmul.f32 %v2095, %v2095
    %v2104 = vmul.f32 %v2096, %v2096
    %v2105 = vmul.f32 %v2097, %v2097
    %v2106 = vsel %vm2058, %v2098, 0.0
    %v2107 = vsel %vm2058, %v2099, 0.0
    %v2108 = vadd.f32 %v2106, %v2107
    %v2109 = vsel %vm2058, %v2100, 0.0
    %v2110 = vadd.f32 %v2108, %v2109
    %v2111 = vsel %vm2058, %v2101, 0.0
    %v2112 = vadd.f32 %v2110, %v2111
    %v2113 = vsel %vm2058, %v2102, 0.0
    %v2114 = vadd.f32 %v2112, %v2113
    %v2115 = vsel %vm2058, %v2103, 0.0
    %v2116 = vadd.f32 %v2114, %v2115
    %v2117 = vsel %vm2058, %v2104, 0.0
    %v2118 = vadd.f32 %v2116, %v2117
    %v2119 = vsel %vm2072, %v2105, 0.0
    %v2120 = vadd.f32 %v2118, %v2119
    %v2121 = vrot.slane %v2120, 4
    %v2122 = vadd.f32 %v2120, %v2121
    %v2123 = vrot.slane %v2122, 2
    %v2124 = vadd.f32 %v2122, %v2123
    %v2125 = vrot.slane %v2124, 1
    %v2126 = vadd.f32 %v2124, %v2125
    %v2127 = vmul.f32 %v2126, 0.017857144
    %v2128 = vadd.f32 %v2127, 1e-05
    %v2129 = vrsqrt.pop %v2128
    %v2130 = vmul.f32 %v2129, %v2128
    %v2131 = vmul.f32 %v2130, %v2129
    %v2132 = vmul.f32 0.5, %v2131
    %v2133 = vsub.f32 1.5, %v2132
    %v2134 = vmul.f32 %v2129, %v2133
    %vm2135 = vweird.f32 %v2128
    %vm2136 = vweird.f32 %v2129
    %vm2137 = vmor %vm2135, %vm2136
    %v2138 = vsel %vm2137, %v2129, %v2134
    %v2139 = vmul.f32 %v2082, %v2138
    %v2140 = vmul.f32 %v2083, %v2138
    %v2141 = vmul.f32 %v2084, %v2138
    %v2142 = vmul.f32 %v2085, %v2138
    %v2143 = vmul.f32 %v2086, %v2138
    %v2144 = vmul.f32 %v2087, %v2138
    %v2145 = vmul.f32 %v2088, %v2138
    %v2146 = vmul.f32 %v2089, %v2138
    %v2147 = vperm.slane %v1764, 0
    %v2148 = vmul.f32 %v2139, %v2147
    %v2149 = vmul.f32 %v2140, %v2147
    %v2150 = vmul.f32 %v2141, %v2147
    %v2151 = vmul.f32 %v2142, %v2147
    %v2152 = vmul.f32 %v2143, %v2147
    %v2153 = vmul.f32 %v2144, %v2147
    %v2154 = vmul.f32 %v2145, %v2147
    %v2155 = vmul.f32 %v2146, %v2147
    %v2156 = vperm.slane %v1765, 0
    %v2157 = vadd.f32 %v2148, %v2156
    %v2158 = vadd.f32 %v2149, %v2156
    %v2159 = vadd.f32 %v2150, %v2156
    %v2160 = vadd.f32 %v2151, %v2156
    %v2161 = vadd.f32 %v2152, %v2156
    %v2162 = vadd.f32 %v2153, %v2156
    %v2163 = vadd.f32 %v2154, %v2156
    %v2164 = vadd.f32 %v2155, %v2156
    %v2165 = vtanh.pop %v2157
    %v2166 = vtanh.pop %v2158
    %v2167 = vtanh.pop %v2159
    %v2168 = vtanh.pop %v2160
    %v2169 = vtanh.pop %v2161
    %v2170 = vtanh.pop %v2162
    %v2171 = vtanh.pop %v2163
    %v2172 = vtanh.pop %v2164
    %v2173 = vmul.f32 %v2165, %v1756
    %v2174 = vmul.f32 %v2166, %v1757
    %v2175 = vmul.f32 %v2167, %v1758
    %v2176 = vmul.f32 %v2168, %v1759
    %v2177 = vmul.f32 %v2169, %v1760
    %v2178 = vmul.f32 %v2170, %v1761
    %v2179 = vmul.f32 %v2171, %v1762
    %v2180 = vmul.f32 %v2172, %v1763
    %v2188 = vrot.slane %v2173, 4
    %v2189 = vrot.slane %v2174, 4
    %v2190 = vsel %vm538, %v2188, %v2189
    %v2191 = vrot.slane %v2175, 4
    %v2192 = vsel %vm538, %v2189, %v2191
    %v2193 = vrot.slane %v2176, 4
    %v2194 = vsel %vm538, %v2191, %v2193
    %v2195 = vrot.slane %v2177, 4
    %v2196 = vsel %vm538, %v2193, %v2195
    %v2197 = vrot.slane %v2178, 4
    %v2198 = vsel %vm538, %v2195, %v2197
    %v2199 = vrot.slane %v2179, 4
    %v2200 = vsel %vm538, %v2197, %v2199
    %v2209 = vsel %vm538, 0.0, %v2188
    %v2211 = vrot.slane %v2173, 5
    %v2212 = vrot.slane %v2174, 5
    %v2213 = vsel %vm899, %v2211, %v2212
    %v2214 = vrot.slane %v2175, 5
    %v2215 = vsel %vm899, %v2212, %v2214
    %v2216 = vrot.slane %v2176, 5
    %v2217 = vsel %vm899, %v2214, %v2216
    %v2218 = vrot.slane %v2177, 5
    %v2219 = vsel %vm899, %v2216, %v2218
    %v2220 = vrot.slane %v2178, 5
    %v2221 = vsel %vm899, %v2218, %v2220
    %v2222 = vrot.slane %v2179, 5
    %v2223 = vsel %vm899, %v2220, %v2222
    %v2224 = vrot.slane %v2180, 5
    %v2225 = vsel %vm899, %v2222, %v2224
    %v2227 = vsel %vm899, 0.0, %v2211
    %v2228 = vrot.slane %v2173, 6
    %v2229 = vrot.slane %v2174, 6
    %v2230 = vsel %vm933, %v2228, %v2229
    %v2231 = vrot.slane %v2175, 6
    %v2232 = vsel %vm933, %v2229, %v2231
    %v2233 = vrot.slane %v2176, 6
    %v2234 = vsel %vm933, %v2231, %v2233
    %v2235 = vrot.slane %v2177, 6
    %v2236 = vsel %vm933, %v2233, %v2235
    %v2237 = vrot.slane %v2178, 6
    %v2238 = vsel %vm933, %v2235, %v2237
    %v2239 = vrot.slane %v2179, 6
    %v2240 = vsel %vm933, %v2237, %v2239
    %v2241 = vrot.slane %v2180, 6
    %v2242 = vsel %vm933, %v2239, %v2241
    %v2244 = vsel %vm933, 0.0, %v2228
    %v2245 = vrot.slane %v2173, 7
    %v2246 = vrot.slane %v2174, 7
    %v2247 = vsel %vm967, %v2245, %v2246
    %v2248 = vrot.slane %v2175, 7
    %v2249 = vsel %vm967, %v2246, %v2248
    %v2250 = vrot.slane %v2176, 7
    %v2251 = vsel %vm967, %v2248, %v2250
    %v2252 = vrot.slane %v2177, 7
    %v2253 = vsel %vm967, %v2250, %v2252
    %v2254 = vrot.slane %v2178, 7
    %v2255 = vsel %vm967, %v2252, %v2254
    %v2256 = vrot.slane %v2179, 7
    %v2257 = vsel %vm967, %v2254, %v2256
    %v2258 = vrot.slane %v2180, 7
    %v2259 = vsel %vm967, %v2256, %v2258
    %v2261 = vsel %vm967, 0.0, %v2245
    %2263 = vrot.lane.b32.xlu0 %v2227, 16
    %v2264 = vpop.permute.xlu0 %2263
    %2265 = vrot.lane.b32.xlu0 %v2213, 16
    %v2266 = vpop.permute.xlu0 %2265
    %2267 = vrot.lane.b32.xlu0 %v2215, 16
    %v2268 = vpop.permute.xlu0 %2267
    %2269 = vrot.lane.b32.xlu0 %v2217, 16
    %v2270 = vpop.permute.xlu0 %2269
    %2271 = vrot.lane.b32.xlu0 %v2219, 16
    %v2272 = vpop.permute.xlu0 %2271
    %2273 = vrot.lane.b32.xlu0 %v2221, 16
    %v2274 = vpop.permute.xlu0 %2273
    %2275 = vrot.lane.b32.xlu0 %v2223, 16
    %v2276 = vpop.permute.xlu0 %2275
    %2277 = vrot.lane.b32.xlu0 %v2225, 16
    %v2278 = vpop.permute.xlu0 %2277
    %2288 = vrot.lane.b32.xlu0 %v2244, 32
    %v2289 = vpop.permute.xlu0 %2288
    %2290 = vrot.lane.b32.xlu0 %v2230, 32
    %v2291 = vpop.permute.xlu0 %2290
    %2292 = vrot.lane.b32.xlu0 %v2232, 32
    %v2293 = vpop.permute.xlu0 %2292
    %2294 = vrot.lane.b32.xlu0 %v2234, 32
    %v2295 = vpop.permute.xlu0 %2294
    %2296 = vrot.lane.b32.xlu0 %v2236, 32
    %v2297 = vpop.permute.xlu0 %2296
    %2298 = vrot.lane.b32.xlu0 %v2238, 32
    %v2299 = vpop.permute.xlu0 %2298
    %2300 = vrot.lane.b32.xlu0 %v2240, 32
    %v2301 = vpop.permute.xlu0 %2300
    %2302 = vrot.lane.b32.xlu0 %v2242, 32
    %v2303 = vpop.permute.xlu0 %2302
    %2313 = vrot.lane.b32.xlu0 %v2261, 48
    %v2314 = vpop.permute.xlu0 %2313
    %2315 = vrot.lane.b32.xlu0 %v2247, 48
    %v2316 = vpop.permute.xlu0 %2315
    %2317 = vrot.lane.b32.xlu0 %v2249, 48
    %v2318 = vpop.permute.xlu0 %2317
    %2319 = vrot.lane.b32.xlu0 %v2251, 48
    %v2320 = vpop.permute.xlu0 %2319
    %2321 = vrot.lane.b32.xlu0 %v2253, 48
    %v2322 = vpop.permute.xlu0 %2321
    %2323 = vrot.lane.b32.xlu0 %v2255, 48
    %v2324 = vpop.permute.xlu0 %2323
    %2325 = vrot.lane.b32.xlu0 %v2257, 48
    %v2326 = vpop.permute.xlu0 %2325
    %2327 = vrot.lane.b32.xlu0 %v2259, 48
    %v2328 = vpop.permute.xlu0 %2327
    %2337 = vrot.lane.b32.xlu0 %v2173, 64
    %v2338 = vpop.permute.xlu0 %2337
    %2339 = vrot.lane.b32.xlu0 %v2174, 64
    %v2340 = vpop.permute.xlu0 %2339
    %2341 = vrot.lane.b32.xlu0 %v2175, 64
    %v2342 = vpop.permute.xlu0 %2341
    %2343 = vrot.lane.b32.xlu0 %v2176, 64
    %v2344 = vpop.permute.xlu0 %2343
    %2345 = vrot.lane.b32.xlu0 %v2177, 64
    %v2346 = vpop.permute.xlu0 %2345
    %2347 = vrot.lane.b32.xlu0 %v2178, 64
    %v2348 = vpop.permute.xlu0 %2347
    %2349 = vrot.lane.b32.xlu0 %v2179, 64
    %v2350 = vpop.permute.xlu0 %2349
    %2351 = vrot.lane.b32.xlu0 %v2180, 64
    %v2352 = vpop.permute.xlu0 %2351
    %v2361 = vsel %vm2058, %v2209, %v2264
    %v2362 = vsel %vm2058, %v2190, %v2266
    %v2363 = vsel %vm2058, %v2192, %v2268
    %v2364 = vsel %vm2058, %v2194, %v2270
    %v2365 = vsel %vm2058, %v2196, %v2272
    %v2366 = vsel %vm2058, %v2198, %v2274
    %v2367 = vsel %vm2058, %v2200, %v2276
    %v2368 = vsel %vm2058, %v2199, %v2278
    %v2369 = vsel %vm618, %v2361, %v2289
    %v2370 = vsel %vm618, %v2362, %v2291
    %v2371 = vsel %vm618, %v2363, %v2293
    %v2372 = vsel %vm618, %v2364, %v2295
    %v2373 = vsel %vm618, %v2365, %v2297
    %v2374 = vsel %vm618, %v2366, %v2299
    %v2375 = vsel %vm618, %v2367, %v2301
    %v2376 = vsel %vm618, %v2368, %v2303
    %vm2377 = vcmask 392192
    %v2378 = vsel %vm2377, %v2369, %v2314
    %v2379 = vsel %vm2377, %v2370, %v2316
    %v2380 = vsel %vm2377, %v2371, %v2318
    %v2381 = vsel %vm2377, %v2372, %v2320
    %v2382 = vsel %vm2377, %v2373, %v2322
    %v2383 = vsel %vm2377, %v2374, %v2324
    %v2384 = vsel %vm2377, %v2375, %v2326
    %v2385 = vsel %vm2377, %v2376, %v2328
    %v2386 = vsel %vm1164, %v2378, %v2338
    %v2387 = vsel %vm1164, %v2379, %v2340
    %v2388 = vsel %vm1164, %v2380, %v2342
    %v2389 = vsel %vm1164, %v2381, %v2344
    %v2390 = vsel %vm1164, %v2382, %v2346
    %v2391 = vsel %vm1164, %v2383, %v2348
    %v2392 = vsel %vm1164, %v2384, %v2350
    %v2393 = vsel %vm1164, %v2385, %v2352
    %v2394 = vld [vmem:[%s1 + $0x148] sm:$0xff]
    %v2395 = vld [vmem:[%s1 + $0x150] sm:$0xff]
    %v2396 = vld [vmem:[%s1 + $0x158] sm:$0xff]
    %v2397 = vld [vmem:[%s1 + $0x160] sm:$0xff]
    %v2398 = vld [vmem:[%s1 + $0x168] sm:$0xff]
    %v2399 = vld [vmem:[%s1 + $0x170] sm:$0xff]
    %v2400 = vld [vmem:[%s1 + $0x178] sm:$0xff]
    %v2401 = vld [vmem:[%s1 + $0x180] sm:$0xff]
    %v2402 = vld [vmem:[%s1 + $0x188] sm:$0xff]
    %v2403 = vld [vmem:[%s1 + $0x190] sm:$0xff]
    %vm2404 = vcmask 654336
    %v2406 = vsel %vm2404, %v2386, 0
    %v2409 = vsel %vm2404, %v2387, 0
    %v2412 = vsel %vm2404, %v2388, 0
    %v2415 = vsel %vm2404, %v2389, 0
    %v2418 = vsel %vm2404, %v2390, 0
    %v2421 = vsel %vm2404, %v2391, 0
    %v2424 = vsel %vm2404, %v2392, 0
    %v2427 = vsel %vm2404, %v2393, 0
    %2429 = vmatpush.msra.mxu0 0.0
    %2430 = vmatpush.msra.mxu0 0.0
    %2431 = vmatpush.msra.mxu0 0.0
    %2432 = vmatpush.msra.mxu0 0.0
    %2433 = vmatpush.msra.mxu0 0.0
    %2434 = vmatpush.msra.mxu0 0.0
    %2435 = vmatpush.msra.mxu0 %v2403
    %2436 = vmatpush.msra.mxu0 %v2402
    %2437 = vmatpush.msra.mxu0 %v2401
    %2438 = vmatpush.msra.mxu0 %v2400
    %2439 = vmatpush.msra.mxu0 %v2399
    %2440 = vmatpush.msra.mxu0 %v2398
    %2441 = vmatpush.msra.mxu0 %v2397
    %2442 = vmatpush.msra.mxu0 %v2396
    %2443 = vmatpush.msra.mxu0 %v2395
    %2444 = vmatpush.msra.mxu0 %v2394
    %2445 = vmatmul.f32.gmra.mxu0 %v2406
    %v2446 = vpop.f32.mrf.mxu0
    %v2447 = vadd.f32 0.0, %v2446
    %2448 = vmatmul.f32.gmra.mxu0 %v2409
    %v2449 = vpop.f32.mrf.mxu0
    %v2450 = vadd.f32 0.0, %v2449
    %2451 = vmatmul.f32.gmra.mxu0 %v2412
    %v2452 = vpop.f32.mrf.mxu0
    %v2453 = vadd.f32 0.0, %v2452
    %2454 = vmatmul.f32.gmra.mxu0 %v2415
    %v2455 = vpop.f32.mrf.mxu0
    %v2456 = vadd.f32 0.0, %v2455
    %2457 = vmatmul.f32.gmra.mxu0 %v2418
    %v2458 = vpop.f32.mrf.mxu0
    %v2459 = vadd.f32 0.0, %v2458
    %2460 = vmatmul.f32.gmra.mxu0 %v2421
    %v2461 = vpop.f32.mrf.mxu0
    %v2462 = vadd.f32 0.0, %v2461
    %2463 = vmatmul.f32.gmra.mxu0 %v2424
    %v2464 = vpop.f32.mrf.mxu0
    %v2465 = vadd.f32 0.0, %v2464
    %2466 = vmatmul.f32.gmra.mxu0 %v2427
    %v2467 = vpop.f32.mrf.mxu0
    %v2468 = vadd.f32 0.0, %v2467
    %2469 = vdwg.mxu0
    %v2470 = vmul.f32 %v2447, %v1756
    %v2471 = vmul.f32 %v2450, %v1757
    %v2472 = vmul.f32 %v2453, %v1758
    %v2473 = vmul.f32 %v2456, %v1759
    %v2474 = vmul.f32 %v2459, %v1760
    %v2475 = vmul.f32 %v2462, %v1761
    %v2476 = vmul.f32 %v2465, %v1762
    %v2477 = vmul.f32 %v2468, %v1763
    %v2478 = vsel %vm2058, %v2470, 0.0
    %v2479 = vsel %vm2058, %v2471, 0.0
    %v2480 = vadd.f32 %v2478, %v2479
    %v2481 = vsel %vm2058, %v2472, 0.0
    %v2482 = vadd.f32 %v2480, %v2481
    %v2483 = vsel %vm2058, %v2473, 0.0
    %v2484 = vadd.f32 %v2482, %v2483
    %v2485 = vsel %vm2058, %v2474, 0.0
    %v2486 = vadd.f32 %v2484, %v2485
    %v2487 = vsel %vm2058, %v2475, 0.0
    %v2488 = vadd.f32 %v2486, %v2487
    %v2489 = vsel %vm2058, %v2476, 0.0
    %v2490 = vadd.f32 %v2488, %v2489
    %v2491 = vsel %vm2072, %v2477, 0.0
    %v2492 = vadd.f32 %v2490, %v2491
    %v2493 = vrot.slane %v2492, 4
    %v2494 = vadd.f32 %v2492, %v2493
    %v2495 = vrot.slane %v2494, 2
    %v2496 = vadd.f32 %v2494, %v2495
    %v2497 = vrot.slane %v2496, 1
    %v2498 = vadd.f32 %v2496, %v2497
    %v2499 = vmul.f32 %v2498, 0.017857144
    %v2500 = vsub.f32 %v2447, %v2499
    %v2501 = vsub.f32 %v2450, %v2499
    %v2502 = vsub.f32 %v2453, %v2499
    %v2503 = vsub.f32 %v2456, %v2499
    %v2504 = vsub.f32 %v2459, %v2499
    %v2505 = vsub.f32 %v2462, %v2499
    %v2506 = vsub.f32 %v2465, %v2499
    %v2507 = vsub.f32 %v2468, %v2499
    %v2508 = vmul.f32 %v2500, %v1756
    %v2509 = vmul.f32 %v2501, %v1757
    %v2510 = vmul.f32 %v2502, %v1758
    %v2511 = vmul.f32 %v2503, %v1759
    %v2512 = vmul.f32 %v2504, %v1760
    %v2513 = vmul.f32 %v2505, %v1761
    %v2514 = vmul.f32 %v2506, %v1762
    %v2515 = vmul.f32 %v2507, %v1763
    %v2516 = vmul.f32 %v2508, %v2508
    %v2517 = vmul.f32 %v2509, %v2509
    %v2518 = vmul.f32 %v2510, %v2510
    %v2519 = vmul.f32 %v2511, %v2511
    %v2520 = vmul.f32 %v2512, %v2512
    %v2521 = vmul.f32 %v2513, %v2513
    %v2522 = vmul.f32 %v2514, %v2514
    %v2523 = vmul.f32 %v2515, %v2515
    %v2524 = vsel %vm2058, %v2516, 0.0
    %v2525 = vsel %vm2058, %v2517, 0.0
    %v2526 = vadd.f32 %v2524, %v2525
    %v2527 = vsel %vm2058, %v2518, 0.0
    %v2528 = vadd.f32 %v2526, %v2527
    %v2529 = vsel %vm2058, %v2519, 0.0
    %v2530 = vadd.f32 %v2528, %v2529
    %v2531 = vsel %vm2058, %v2520, 0.0
    %v2532 = vadd.f32 %v2530, %v2531
    %v2533 = vsel %vm2058, %v2521, 0.0
    %v2534 = vadd.f32 %v2532, %v2533
    %v2535 = vsel %vm2058, %v2522, 0.0
    %v2536 = vadd.f32 %v2534, %v2535
    %v2537 = vsel %vm2072, %v2523, 0.0
    %v2538 = vadd.f32 %v2536, %v2537
    %v2539 = vrot.slane %v2538, 4
    %v2540 = vadd.f32 %v2538, %v2539
    %v2541 = vrot.slane %v2540, 2
    %v2542 = vadd.f32 %v2540, %v2541
    %v2543 = vrot.slane %v2542, 1
    %v2544 = vadd.f32 %v2542, %v2543
    %v2545 = vmul.f32 %v2544, 0.017857144
    %v2546 = vadd.f32 %v2545, 1e-05
    %v2547 = vrsqrt.pop %v2546
    %v2548 = vmul.f32 %v2547, %v2546
    %v2549 = vmul.f32 %v2548, %v2547
    %v2550 = vmul.f32 0.5, %v2549
    %v2551 = vsub.f32 1.5, %v2550
    %v2552 = vmul.f32 %v2547, %v2551
    %vm2553 = vweird.f32 %v2546
    %vm2554 = vweird.f32 %v2547
    %vm2555 = vmor %vm2553, %vm2554
    %v2556 = vsel %vm2555, %v2547, %v2552
    %v2557 = vmul.f32 %v2500, %v2556
    %v2558 = vmul.f32 %v2501, %v2556
    %v2559 = vmul.f32 %v2502, %v2556
    %v2560 = vmul.f32 %v2503, %v2556
    %v2561 = vmul.f32 %v2504, %v2556
    %v2562 = vmul.f32 %v2505, %v2556
    %v2563 = vmul.f32 %v2506, %v2556
    %v2564 = vmul.f32 %v2507, %v2556
    %v2565 = vperm.slane %v1766, 0
    %v2566 = vmul.f32 %v2557, %v2565
    %v2567 = vmul.f32 %v2558, %v2565
    %v2568 = vmul.f32 %v2559, %v2565
    %v2569 = vmul.f32 %v2560, %v2565
    %v2570 = vmul.f32 %v2561, %v2565
    %v2571 = vmul.f32 %v2562, %v2565
    %v2572 = vmul.f32 %v2563, %v2565
    %v2573 = vmul.f32 %v2564, %v2565
    %v2574 = vperm.slane %v1767, 0
    %v2575 = vadd.f32 %v2566, %v2574
    %v2576 = vadd.f32 %v2567, %v2574
    %v2577 = vadd.f32 %v2568, %v2574
    %v2578 = vadd.f32 %v2569, %v2574
    %v2579 = vadd.f32 %v2570, %v2574
    %v2580 = vadd.f32 %v2571, %v2574
    %v2581 = vadd.f32 %v2572, %v2574
    %v2582 = vadd.f32 %v2573, %v2574
    %v2583 = vtanh.pop %v2575
    %v2584 = vtanh.pop %v2576
    %v2585 = vtanh.pop %v2577
    %v2586 = vtanh.pop %v2578
    %v2587 = vtanh.pop %v2579
    %v2588 = vtanh.pop %v2580
    %v2589 = vtanh.pop %v2581
    %v2590 = vtanh.pop %v2582
    %v2591 = vmul.f32 %v2583, %v1756
    %v2592 = vmul.f32 %v2584, %v1757
    %v2593 = vmul.f32 %v2585, %v1758
    %v2594 = vmul.f32 %v2586, %v1759
    %v2595 = vmul.f32 %v2587, %v1760
    %v2596 = vmul.f32 %v2588, %v1761
    %v2597 = vmul.f32 %v2589, %v1762
    %v2598 = vmul.f32 %v2590, %v1763
    %v2607 = vrot.slane %v2591, 4
    %v2608 = vrot.slane %v2592, 4
    %v2609 = vsel %vm538, %v2607, %v2608
    %v2610 = vrot.slane %v2593, 4
    %v2611 = vsel %vm538, %v2608, %v2610
    %v2612 = vrot.slane %v2594, 4
    %v2613 = vsel %vm538, %v2610, %v2612
    %v2614 = vrot.slane %v2595, 4
    %v2615 = vsel %vm538, %v2612, %v2614
    %v2616 = vrot.slane %v2596, 4
    %v2617 = vsel %vm538, %v2614, %v2616
    %v2618 = vrot.slane %v2597, 4
    %v2619 = vsel %vm538, %v2616, %v2618
    %v2620 = vrot.slane %v2598, 4
    %v2621 = vsel %vm538, %v2618, %v2620
    %v2630 = vsel %vm538, 0.0, %v2607
    %2631 = vst.msk [vmem:[#allocation3] sm:$0xff] %vm2058, %v2630
    %2632 = vst.msk [vmem:[#allocation3 + $0x8] sm:$0xff] %vm2058, %v2609
    %2633 = vst.msk [vmem:[#allocation3 + $0x10] sm:$0xff] %vm2058, %v2611
    %2634 = vst.msk [vmem:[#allocation3 + $0x18] sm:$0xff] %vm2058, %v2613
    %2635 = vst.msk [vmem:[#allocation3 + $0x20] sm:$0xff] %vm2058, %v2615
    %2636 = vst.msk [vmem:[#allocation3 + $0x28] sm:$0xff] %vm2058, %v2617
    %2637 = vst.msk [vmem:[#allocation3 + $0x30] sm:$0xff] %vm2058, %v2619
    %2638 = vst.msk [vmem:[#allocation3 + $0x38] sm:$0xff] %vm2058, %v2621
    %v2639 = vld [vmem:[#allocation3] ss:$2 sm:$0xff]
    %s2640 = scalar_lea.vmem [#allocation3], 16
    %v2641 = vld [vmem:[%s2640] ss:$2 sm:$0xff]
    %s2642 = scalar_lea.vmem [#allocation3], 32
    %v2643 = vld [vmem:[%s2642] ss:$2 sm:$0xff]
    %s2644 = scalar_lea.vmem [#allocation3], 48
    %v2645 = vld [vmem:[%s2644] ss:$2 sm:$0xff]
    %s2646 = scalar_lea.vmem [#allocation3], 1
    %v2647 = vld [vmem:[%s2646] ss:$2 sm:$0xff]
    %s2648 = scalar_lea.vmem [#allocation3], 17
    %v2649 = vld [vmem:[%s2648] ss:$2 sm:$0xff]
    %s2650 = scalar_lea.vmem [#allocation3], 33
    %v2651 = vld [vmem:[%s2650] ss:$2 sm:$0xff]
    %s2652 = scalar_lea.vmem [#allocation3], 49
    %v2653 = vld [vmem:[%s2652] ss:$2 sm:$0xff]
    %v2654 = vmax.f32 %v2639, %v2647
    %v2655 = vmax.f32 %v2641, %v2649
    %v2656 = vmax.f32 %v2643, %v2651
    %v2657 = vmax.f32 %v2645, %v2653
    %v2658 = vand.u32 %v32, 15
    %v2659 = vand.u32 %v33, 15
    %v2660 = vand.u32 %v34, 15
    %v2661 = vand.u32 %v35, 15
    %vm2662 = vcmp.lt.s32.totalorder %v2658, 12
    %vm2663 = vcmp.lt.s32.totalorder %v2659, 12
    %vm2664 = vcmp.lt.s32.totalorder %v2660, 12
    %vm2665 = vcmp.lt.s32.totalorder %v2661, 12
    %v2666 = vsel %vm2662, 1, 0
    %v2667 = vsel %vm2663, 1, 0
    %v2668 = vsel %vm2664, 1, 0
    %v2669 = vsel %vm2665, 1, 0
    %v2670 = vcvt.s32.f32 %v2666
    %v2671 = vcvt.s32.f32 %v2667
    %v2672 = vcvt.s32.f32 %v2668
    %v2673 = vcvt.s32.f32 %v2669
    %v2674 = vld [vmem:[%s2 + $0x8] sm:$0x1]
    %v2675 = vld [vmem:[%s2 + $0x9] sm:$0x1]
    %v2676 = vld [vmem:[%s2 + $0xa] sm:$0x1]
    %v2677 = vld [vmem:[%s2 + $0xb] sm:$0x1]
    %v2682 = vrot.slane %v2654, 1
    %v2683 = vrot.slane %v2655, 1
    %v2684 = vsel %vm247, %v2682, %v2683
    %v2685 = vrot.slane %v2656, 1
    %v2686 = vsel %vm247, %v2683, %v2685
    %v2687 = vrot.slane %v2657, 1
    %v2688 = vsel %vm247, %v2685, %v2687
    %2689 = vrot.lane.b32.xlu0 %v2684, 16
    %v2690 = vpop.permute.xlu0 %2689
    %2691 = vrot.lane.b32.xlu0 %v2686, 16
    %v2692 = vpop.permute.xlu0 %2691
    %2693 = vrot.lane.b32.xlu0 %v2688, 16
    %v2694 = vpop.permute.xlu0 %2693
    %2695 = vrot.lane.b32.xlu0 %v2687, 16
    %v2696 = vpop.permute.xlu0 %2695
    %v2701 = vrot.slane %v2654, 2
    %v2702 = vrot.slane %v2655, 2
    %v2703 = vsel %vm344, %v2701, %v2702
    %v2704 = vrot.slane %v2656, 2
    %v2705 = vsel %vm344, %v2702, %v2704
    %v2706 = vrot.slane %v2657, 2
    %v2707 = vsel %vm344, %v2704, %v2706
    %2708 = vrot.lane.b32.xlu0 %v2703, 32
    %v2709 = vpop.permute.xlu0 %2708
    %2710 = vrot.lane.b32.xlu0 %v2705, 32
    %v2711 = vpop.permute.xlu0 %2710
    %2712 = vrot.lane.b32.xlu0 %v2707, 32
    %v2713 = vpop.permute.xlu0 %2712
    %2714 = vrot.lane.b32.xlu0 %v2706, 32
    %v2715 = vpop.permute.xlu0 %2714
    %v2720 = vrot.slane %v2654, 3
    %v2721 = vrot.slane %v2655, 3
    %v2722 = vsel %vm441, %v2720, %v2721
    %v2723 = vrot.slane %v2656, 3
    %v2724 = vsel %vm441, %v2721, %v2723
    %v2725 = vrot.slane %v2657, 3
    %v2726 = vsel %vm441, %v2723, %v2725
    %2727 = vrot.lane.b32.xlu0 %v2722, 48
    %v2728 = vpop.permute.xlu0 %2727
    %2729 = vrot.lane.b32.xlu0 %v2724, 48
    %v2730 = vpop.permute.xlu0 %2729
    %2731 = vrot.lane.b32.xlu0 %v2726, 48
    %v2732 = vpop.permute.xlu0 %2731
    %2733 = vrot.lane.b32.xlu0 %v2725, 48
    %v2734 = vpop.permute.xlu0 %2733
    %v2739 = vrot.slane %v2654, 4
    %v2740 = vrot.slane %v2655, 4
    %v2741 = vsel %vm538, %v2739, %v2740
    %v2742 = vrot.slane %v2656, 4
    %v2743 = vsel %vm538, %v2740, %v2742
    %v2744 = vrot.slane %v2657, 4
    %v2745 = vsel %vm538, %v2742, %v2744
    %2746 = vrot.lane.b32.xlu0 %v2741, 64
    %v2747 = vpop.permute.xlu0 %2746
    %2748 = vrot.lane.b32.xlu0 %v2743, 64
    %v2749 = vpop.permute.xlu0 %2748
    %2750 = vrot.lane.b32.xlu0 %v2745, 64
    %v2751 = vpop.permute.xlu0 %2750
    %2752 = vrot.lane.b32.xlu0 %v2744, 64
    %v2753 = vpop.permute.xlu0 %2752
    %v2758 = vsel %vm2058, %v2654, %v2690
    %v2759 = vsel %vm2058, %v2655, %v2692
    %v2760 = vsel %vm2058, %v2656, %v2694
    %v2761 = vsel %vm2058, %v2657, %v2696
    %v2762 = vsel %vm618, %v2758, %v2709
    %v2763 = vsel %vm618, %v2759, %v2711
    %v2764 = vsel %vm618, %v2760, %v2713
    %v2765 = vsel %vm618, %v2761, %v2715
    %v2766 = vsel %vm2377, %v2762, %v2728
    %v2767 = vsel %vm2377, %v2763, %v2730
    %v2768 = vsel %vm2377, %v2764, %v2732
    %v2769 = vsel %vm2377, %v2765, %v2734
    %v2770 = vsel %vm1164, %v2766, %v2747
    %v2771 = vsel %vm1164, %v2767, %v2749
    %v2772 = vsel %vm1164, %v2768, %v2751
    %v2773 = vsel %vm1164, %v2769, %v2753
    %v2774 = vld [vmem:[%s1 + $0x198] sm:$0xff]
    %v2775 = vld [vmem:[%s1 + $0x1a0] sm:$0xff]
    %v2776 = vld [vmem:[%s1 + $0x1a8] sm:$0xff]
    %v2777 = vld [vmem:[%s1 + $0x1b0] sm:$0xff]
    %v2778 = vld [vmem:[%s1 + $0x1b8] sm:$0xff]
    %v2779 = vld [vmem:[%s1 + $0x1c0] sm:$0xff]
    %v2780 = vld [vmem:[%s1 + $0x1c8] sm:$0xff]
    %v2781 = vld [vmem:[%s1 + $0x1d0] sm:$0xff]
    %v2782 = vld [vmem:[%s1 + $0x1d8] sm:$0xff]
    %v2783 = vld [vmem:[%s1 + $0x1e0] sm:$0xff]
    %v2785 = vsel %vm2404, %v2770, 0
    %v2788 = vsel %vm2404, %v2771, 0
    %v2791 = vsel %vm2404, %v2772, 0
    %v2794 = vsel %vm2404, %v2773, 0
    %2796 = vmatpush.msra.mxu0 0.0
    %2797 = vmatpush.msra.mxu0 0.0
    %2798 = vmatpush.msra.mxu0 0.0
    %2799 = vmatpush.msra.mxu0 0.0
    %2800 = vmatpush.msra.mxu0 0.0
    %2801 = vmatpush.msra.mxu0 0.0
    %2802 = vmatpush.msra.mxu0 %v2783
    %2803 = vmatpush.msra.mxu0 %v2782
    %2804 = vmatpush.msra.mxu0 %v2781
    %2805 = vmatpush.msra.mxu0 %v2780
    %2806 = vmatpush.msra.mxu0 %v2779
    %2807 = vmatpush.msra.mxu0 %v2778
    %2808 = vmatpush.msra.mxu0 %v2777
    %2809 = vmatpush.msra.mxu0 %v2776
    %2810 = vmatpush.msra.mxu0 %v2775
    %2811 = vmatpush.msra.mxu0 %v2774
    %2812 = vmatmul.f32.gmra.mxu0 %v2785
    %v2813 = vpop.f32.mrf.mxu0
    %v2814 = vadd.f32 0.0, %v2813
    %2815 = vmatmul.f32.gmra.mxu0 %v2788
    %v2816 = vpop.f32.mrf.mxu0
    %v2817 = vadd.f32 0.0, %v2816
    %2818 = vmatmul.f32.gmra.mxu0 %v2791
    %v2819 = vpop.f32.mrf.mxu0
    %v2820 = vadd.f32 0.0, %v2819
    %2821 = vmatmul.f32.gmra.mxu0 %v2794
    %v2822 = vpop.f32.mrf.mxu0
    %v2823 = vadd.f32 0.0, %v2822
    %2824 = vdwg.mxu0
    %v2825 = vmul.f32 %v2814, %v2670
    %v2826 = vmul.f32 %v2817, %v2671
    %v2827 = vmul.f32 %v2820, %v2672
    %v2828 = vmul.f32 %v2823, %v2673
    %vm2829 = vcmask 64512
    %v2830 = vsel %vm2829, %v2825, 0.0
    %v2831 = vsel %vm2829, %v2826, 0.0
    %v2832 = vadd.f32 %v2830, %v2831
    %v2833 = vsel %vm2829, %v2827, 0.0
    %v2834 = vadd.f32 %v2832, %v2833
    %vm2835 = vcmask 60416
    %v2836 = vsel %vm2835, %v2828, 0.0
    %v2837 = vadd.f32 %v2834, %v2836
    %v2838 = vrot.slane %v2837, 4
    %v2839 = vadd.f32 %v2837, %v2838
    %v2840 = vrot.slane %v2839, 2
    %v2841 = vadd.f32 %v2839, %v2840
    %v2842 = vrot.slane %v2841, 1
    %v2843 = vadd.f32 %v2841, %v2842
    %v2844 = vmul.f32 %v2843, 0.041666668
    %v2845 = vsub.f32 %v2814, %v2844
    %v2846 = vsub.f32 %v2817, %v2844
    %v2847 = vsub.f32 %v2820, %v2844
    %v2848 = vsub.f32 %v2823, %v2844
    %v2849 = vmul.f32 %v2845, %v2670
    %v2850 = vmul.f32 %v2846, %v2671
    %v2851 = vmul.f32 %v2847, %v2672
    %v2852 = vmul.f32 %v2848, %v2673
    %v2853 = vmul.f32 %v2849, %v2849
    %v2854 = vmul.f32 %v2850, %v2850
    %v2855 = vmul.f32 %v2851, %v2851
    %v2856 = vmul.f32 %v2852, %v2852
    %v2857 = vsel %vm2829, %v2853, 0.0
    %v2858 = vsel %vm2829, %v2854, 0.0
    %v2859 = vadd.f32 %v2857, %v2858
    %v2860 = vsel %vm2829, %v2855, 0.0
    %v2861 = vadd.f32 %v2859, %v2860
    %v2862 = vsel %vm2835, %v2856, 0.0
    %v2863 = vadd.f32 %v2861, %v2862
    %v2864 = vrot.slane %v2863, 4
    %v2865 = vadd.f32 %v2863, %v2864
    %v2866 = vrot.slane %v2865, 2
    %v2867 = vadd.f32 %v2865, %v2866
    %v2868 = vrot.slane %v2867, 1
    %v2869 = vadd.f32 %v2867, %v2868
    %v2870 = vmul.f32 %v2869, 0.041666668
    %v2871 = vadd.f32 %v2870, 1e-05
    %v2872 = vrsqrt.pop %v2871
    %v2873 = vmul.f32 %v2872, %v2871
    %v2874 = vmul.f32 %v2873, %v2872
    %v2875 = vmul.f32 0.5, %v2874
    %v2876 = vsub.f32 1.5, %v2875
    %v2877 = vmul.f32 %v2872, %v2876
    %vm2878 = vweird.f32 %v2871
    %vm2879 = vweird.f32 %v2872
    %vm2880 = vmor %vm2878, %vm2879
    %v2881 = vsel %vm2880, %v2872, %v2877
    %v2882 = vmul.f32 %v2845, %v2881
    %v2883 = vmul.f32 %v2846, %v2881
    %v2884 = vmul.f32 %v2847, %v2881
    %v2885 = vmul.f32 %v2848, %v2881
    %v2886 = vperm.slane %v2674, 0
    %v2887 = vmul.f32 %v2882, %v2886
    %v2888 = vmul.f32 %v2883, %v2886
    %v2889 = vmul.f32 %v2884, %v2886
    %v2890 = vmul.f32 %v2885, %v2886
    %v2891 = vperm.slane %v2675, 0
    %v2892 = vadd.f32 %v2887, %v2891
    %v2893 = vadd.f32 %v2888, %v2891
    %v2894 = vadd.f32 %v2889, %v2891
    %v2895 = vadd.f32 %v2890, %v2891
    %v2896 = vtanh.pop %v2892
    %v2897 = vtanh.pop %v2893
    %v2898 = vtanh.pop %v2894
    %v2899 = vtanh.pop %v2895
    %v2900 = vmul.f32 %v2896, %v2670
    %v2901 = vmul.f32 %v2897, %v2671
    %v2902 = vmul.f32 %v2898, %v2672
    %v2903 = vmul.f32 %v2899, %v2673
    %v2907 = vrot.slane %v2900, 4
    %v2908 = vrot.slane %v2901, 4
    %v2909 = vsel %vm538, %v2907, %v2908
    %v2910 = vrot.slane %v2902, 4
    %v2911 = vsel %vm538, %v2908, %v2910
    %v2916 = vsel %vm538, 0.0, %v2907
    %v2918 = vrot.slane %v2900, 5
    %v2919 = vrot.slane %v2901, 5
    %v2920 = vsel %vm899, %v2918, %v2919
    %v2921 = vrot.slane %v2902, 5
    %v2922 = vsel %vm899, %v2919, %v2921
    %v2923 = vrot.slane %v2903, 5
    %v2924 = vsel %vm899, %v2921, %v2923
    %v2926 = vsel %vm899, 0.0, %v2918
    %v2927 = vrot.slane %v2900, 6
    %v2928 = vrot.slane %v2901, 6
    %v2929 = vsel %vm933, %v2927, %v2928
    %v2930 = vrot.slane %v2902, 6
    %v2931 = vsel %vm933, %v2928, %v2930
    %v2932 = vrot.slane %v2903, 6
    %v2933 = vsel %vm933, %v2930, %v2932
    %v2935 = vsel %vm933, 0.0, %v2927
    %v2936 = vrot.slane %v2900, 7
    %v2937 = vrot.slane %v2901, 7
    %v2938 = vsel %vm967, %v2936, %v2937
    %v2939 = vrot.slane %v2902, 7
    %v2940 = vsel %vm967, %v2937, %v2939
    %v2941 = vrot.slane %v2903, 7
    %v2942 = vsel %vm967, %v2939, %v2941
    %v2944 = vsel %vm967, 0.0, %v2936
    %2946 = vrot.lane.b32.xlu0 %v2926, 8
    %v2947 = vpop.permute.xlu0 %2946
    %2948 = vrot.lane.b32.xlu0 %v2920, 8
    %v2949 = vpop.permute.xlu0 %2948
    %2950 = vrot.lane.b32.xlu0 %v2922, 8
    %v2951 = vpop.permute.xlu0 %2950
    %2952 = vrot.lane.b32.xlu0 %v2924, 8
    %v2953 = vpop.permute.xlu0 %2952
    %2959 = vrot.lane.b32.xlu0 %v2935, 16
    %v2960 = vpop.permute.xlu0 %2959
    %2961 = vrot.lane.b32.xlu0 %v2929, 16
    %v2962 = vpop.permute.xlu0 %2961
    %2963 = vrot.lane.b32.xlu0 %v2931, 16
    %v2964 = vpop.permute.xlu0 %2963
    %2965 = vrot.lane.b32.xlu0 %v2933, 16
    %v2966 = vpop.permute.xlu0 %2965
    %2972 = vrot.lane.b32.xlu0 %v2944, 24
    %v2973 = vpop.permute.xlu0 %2972
    %2974 = vrot.lane.b32.xlu0 %v2938, 24
    %v2975 = vpop.permute.xlu0 %2974
    %2976 = vrot.lane.b32.xlu0 %v2940, 24
    %v2977 = vpop.permute.xlu0 %2976
    %2978 = vrot.lane.b32.xlu0 %v2942, 24
    %v2979 = vpop.permute.xlu0 %2978
    %2984 = vrot.lane.b32.xlu0 %v2900, 32
    %v2985 = vpop.permute.xlu0 %2984
    %2986 = vrot.lane.b32.xlu0 %v2901, 32
    %v2987 = vpop.permute.xlu0 %2986
    %2988 = vrot.lane.b32.xlu0 %v2902, 32
    %v2989 = vpop.permute.xlu0 %2988
    %2990 = vrot.lane.b32.xlu0 %v2903, 32
    %v2991 = vpop.permute.xlu0 %2990
    %v2996 = vsel %vm2829, %v2916, %v2947
    %v2997 = vsel %vm2829, %v2909, %v2949
    %v2998 = vsel %vm2829, %v2911, %v2951
    %v2999 = vsel %vm2829, %v2910, %v2953
    %v3000 = vsel %vm2058, %v2996, %v2960
    %v3001 = vsel %vm2058, %v2997, %v2962
    %v3002 = vsel %vm2058, %v2998, %v2964
    %v3003 = vsel %vm2058, %v2999, %v2966
    %vm3004 = vcmask 195584
    %v3005 = vsel %vm3004, %v3000, %v2973
    %v3006 = vsel %vm3004, %v3001, %v2975
    %v3007 = vsel %vm3004, %v3002, %v2977
    %v3008 = vsel %vm3004, %v3003, %v2979
    %v3009 = vsel %vm618, %v3005, %v2985
    %v3010 = vsel %vm618, %v3006, %v2987
    %v3011 = vsel %vm618, %v3007, %v2989
    %v3012 = vsel %vm618, %v3008, %v2991
    %v3013 = vld [vmem:[%s1 + $0x1e8] sm:$0xff]
    %v3014 = vld [vmem:[%s1 + $0x1f0] sm:$0xff]
    %v3015 = vld [vmem:[%s1 + $0x1f8] sm:$0xff]
    %v3016 = vld [vmem:[%s1 + $0x200] sm:$0xff]
    %v3017 = vld [vmem:[%s1 + $0x208] sm:$0xff]
    %vm3018 = vcmask 326656
    %v3020 = vsel %vm3018, %v3009, 0
    %v3023 = vsel %vm3018, %v3010, 0
    %v3026 = vsel %vm3018, %v3011, 0
    %v3029 = vsel %vm3018, %v3012, 0
    %3031 = vmatpush.msra.mxu0 0.0
    %3032 = vmatpush.msra.mxu0 0.0
    %3033 = vmatpush.msra.mxu0 0.0
    %3034 = vmatpush.msra.mxu0 0.0
    %3035 = vmatpush.msra.mxu0 0.0
    %3036 = vmatpush.msra.mxu0 0.0
    %3037 = vmatpush.msra.mxu0 0.0
    %3038 = vmatpush.msra.mxu0 0.0
    %3039 = vmatpush.msra.mxu0 0.0
    %3040 = vmatpush.msra.mxu0 0.0
    %3041 = vmatpush.msra.mxu0 0.0
    %3042 = vmatpush.msra.mxu0 %v3017
    %3043 = vmatpush.msra.mxu0 %v3016
    %3044 = vmatpush.msra.mxu0 %v3015
    %3045 = vmatpush.msra.mxu0 %v3014
    %3046 = vmatpush.msra.mxu0 %v3013
    %3047 = vmatmul.f32.gmra.mxu0 %v3020
    %v3048 = vpop.f32.mrf.mxu0
    %v3049 = vadd.f32 0.0, %v3048
    %3050 = vmatmul.f32.gmra.mxu0 %v3023
    %v3051 = vpop.f32.mrf.mxu0
    %v3052 = vadd.f32 0.0, %v3051
    %3053 = vmatmul.f32.gmra.mxu0 %v3026
    %v3054 = vpop.f32.mrf.mxu0
    %v3055 = vadd.f32 0.0, %v3054
    %3056 = vmatmul.f32.gmra.mxu0 %v3029
    %v3057 = vpop.f32.mrf.mxu0
    %v3058 = vadd.f32 0.0, %v3057
    %3059 = vdwg.mxu0
    %v3060 = vmul.f32 %v3049, %v2670
    %v3061 = vmul.f32 %v3052, %v2671
    %v3062 = vmul.f32 %v3055, %v2672
    %v3063 = vmul.f32 %v3058, %v2673
    %v3064 = vsel %vm2829, %v3060, 0.0
    %v3065 = vsel %vm2829, %v3061, 0.0
    %v3066 = vadd.f32 %v3064, %v3065
    %v3067 = vsel %vm2829, %v3062, 0.0
    %v3068 = vadd.f32 %v3066, %v3067
    %v3069 = vsel %vm2835, %v3063, 0.0
    %v3070 = vadd.f32 %v3068, %v3069
    %v3071 = vrot.slane %v3070, 4
    %v3072 = vadd.f32 %v3070, %v3071
    %v3073 = vrot.slane %v3072, 2
    %v3074 = vadd.f32 %v3072, %v3073
    %v3075 = vrot.slane %v3074, 1
    %v3076 = vadd.f32 %v3074, %v3075
    %v3077 = vmul.f32 %v3076, 0.041666668
    %v3078 = vsub.f32 %v3049, %v3077
    %v3079 = vsub.f32 %v3052, %v3077
    %v3080 = vsub.f32 %v3055, %v3077
    %v3081 = vsub.f32 %v3058, %v3077
    %v3082 = vmul.f32 %v3078, %v2670
    %v3083 = vmul.f32 %v3079, %v2671
    %v3084 = vmul.f32 %v3080, %v2672
    %v3085 = vmul.f32 %v3081, %v2673
    %v3086 = vmul.f32 %v3082, %v3082
    %v3087 = vmul.f32 %v3083, %v3083
    %v3088 = vmul.f32 %v3084, %v3084
    %v3089 = vmul.f32 %v3085, %v3085
    %v3090 = vsel %vm2829, %v3086, 0.0
    %v3091 = vsel %vm2829, %v3087, 0.0
    %v3092 = vadd.f32 %v3090, %v3091
    %v3093 = vsel %vm2829, %v3088, 0.0
    %v3094 = vadd.f32 %v3092, %v3093
    %v3095 = vsel %vm2835, %v3089, 0.0
    %v3096 = vadd.f32 %v3094, %v3095
    %v3097 = vrot.slane %v3096, 4
    %v3098 = vadd.f32 %v3096, %v3097
    %v3099 = vrot.slane %v3098, 2
    %v3100 = vadd.f32 %v3098, %v3099
    %v3101 = vrot.slane %v3100, 1
    %v3102 = vadd.f32 %v3100, %v3101
    %v3103 = vmul.f32 %v3102, 0.041666668
    %v3104 = vadd.f32 %v3103, 1e-05
    %v3105 = vrsqrt.pop %v3104
    %v3106 = vmul.f32 %v3105, %v3104
    %v3107 = vmul.f32 %v3106, %v3105
    %v3108 = vmul.f32 0.5, %v3107
    %v3109 = vsub.f32 1.5, %v3108
    %v3110 = vmul.f32 %v3105, %v3109
    %vm3111 = vweird.f32 %v3104
    %vm3112 = vweird.f32 %v3105
    %vm3113 = vmor %vm3111, %vm3112
    %v3114 = vsel %vm3113, %v3105, %v3110
    %v3115 = vmul.f32 %v3078, %v3114
    %v3116 = vmul.f32 %v3079, %v3114
    %v3117 = vmul.f32 %v3080, %v3114
    %v3118 = vmul.f32 %v3081, %v3114
    %v3119 = vperm.slane %v2676, 0
    %v3120 = vmul.f32 %v3115, %v3119
    %v3121 = vmul.f32 %v3116, %v3119
    %v3122 = vmul.f32 %v3117, %v3119
    %v3123 = vmul.f32 %v3118, %v3119
    %v3124 = vperm.slane %v2677, 0
    %v3125 = vadd.f32 %v3120, %v3124
    %v3126 = vadd.f32 %v3121, %v3124
    %v3127 = vadd.f32 %v3122, %v3124
    %v3128 = vadd.f32 %v3123, %v3124
    %v3129 = vtanh.pop %v3125
    %v3130 = vtanh.pop %v3126
    %v3131 = vtanh.pop %v3127
    %v3132 = vtanh.pop %v3128
    %v3133 = vmul.f32 %v3129, %v2670
    %v3134 = vmul.f32 %v3130, %v2671
    %v3135 = vmul.f32 %v3131, %v2672
    %v3136 = vmul.f32 %v3132, %v2673
    %v3141 = vrot.slane %v3133, 4
    %v3142 = vrot.slane %v3134, 4
    %v3143 = vsel %vm538, %v3141, %v3142
    %v3144 = vrot.slane %v3135, 4
    %v3145 = vsel %vm538, %v3142, %v3144
    %v3146 = vrot.slane %v3136, 4
    %v3147 = vsel %vm538, %v3144, %v3146
    %v3152 = vsel %vm538, 0.0, %v3141
    %3153 = vst.msk [vmem:[#allocation4] sm:$0xff] %vm2829, %v3152
    %3154 = vst.msk [vmem:[#allocation4 + $0x8] sm:$0xff] %vm2829, %v3143
    %3155 = vst.msk [vmem:[#allocation4 + $0x10] sm:$0xff] %vm2829, %v3145
    %3156 = vst.msk [vmem:[#allocation4 + $0x18] sm:$0xff] %vm2829, %v3147
    %v3157 = vld [vmem:[#allocation4] ss:$2 sm:$0xff]
    %s3158 = scalar_lea.vmem [#allocation4], 16
    %v3159 = vld [vmem:[%s3158] ss:$2 sm:$0xff]
    %s3160 = scalar_lea.vmem [#allocation4], 1
    %v3161 = vld [vmem:[%s3160] ss:$2 sm:$0xff]
    %s3162 = scalar_lea.vmem [#allocation4], 17
    %v3163 = vld [vmem:[%s3162] ss:$2 sm:$0xff]
    %v3164 = vmax.f32 %v3157, %v3161
    %v3165 = vmax.f32 %v3159, %v3163
    %v3166 = vsel %vm2829, %v3164, 0.0
    %v3167 = vrot.slane %v3166, 4
    %v3168 = vadd.f32 %v3166, %v3167
    %v3169 = vrot.slane %v3168, 2
    %v3170 = vadd.f32 %v3168, %v3169
    %v3171 = vrot.slane %v3170, 1
    %v3172 = vadd.f32 %v3170, %v3171
    %v3173 = vsel %vm2829, %v3165, 0.0
    %v3174 = vrot.slane %v3173, 4
    %v3175 = vadd.f32 %v3173, %v3174
    %v3176 = vrot.slane %v3175, 2
    %v3177 = vadd.f32 %v3175, %v3176
    %v3178 = vrot.slane %v3177, 1
    %v3179 = vadd.f32 %v3177, %v3178
    %v3180 = vmul.f32 %v3172, 0.125
    %v3181 = vmul.f32 %v3179, 0.125
    %v3182 = vld [vmem:[%s1 + $0x210] sm:$0xff]
    %v3183 = vld [vmem:[%s2 + $0xc] sm:$0x1]
    %v3184 = vperm.slane %v3183, 0
    %vm3187 = vcmask 1041409
    %v3188 = vsel %vm3187, %v3181, %v3180
    %v3189 = vsel %vm2829, %v3188, 0
    %3191 = vmatpush.msra.mxu0 0.0
    %3192 = vmatpush.msra.mxu0 0.0
    %3193 = vmatpush.msra.mxu0 0.0
    %3194 = vmatpush.msra.mxu0 0.0
    %3195 = vmatpush.msra.mxu0 0.0
    %3196 = vmatpush.msra.mxu0 0.0
    %3197 = vmatpush.msra.mxu0 0.0
    %3198 = vmatpush.msra.mxu0 0.0
    %3199 = vmatpush.msra.mxu0 0.0
    %3200 = vmatpush.msra.mxu0 0.0
    %3201 = vmatpush.msra.mxu0 0.0
    %3202 = vmatpush.msra.mxu0 0.0
    %3203 = vmatpush.msra.mxu0 0.0
    %3204 = vmatpush.msra.mxu0 0.0
    %3205 = vmatpush.msra.mxu0 0.0
    %3206 = vmatpush.msra.mxu0 %v3182
    %3207 = vmatmul.f32.gmra.mxu0 %v3189
    %v3208 = vpop.f32.mrf.mxu0
    %v3209 = vadd.f32 %v3184, %v3208
    %3210 = vdwg.mxu0
    %vm3211 = vcmask 33792
    %v3212 = vsel %vm3211, %v3209, -inf
    %3213 = vmax.xlane.f32.xlu0 %v3212
    %v3214 = vpop.xlane.xlu0 %3213
    %v3215 = vsub.f32 %v3209, %v3214
    %v3216 = vmul.f32 %v3215, 1.442695
    %v3217 = vpow.pop %v3216
    %v3218 = vsel %vm3211, %v3217, 0.0
    %3219 = vadd.xlane.f32.xlu0 %v3218
    %v3220 = vpop.xlane.xlu0 %3219
    %v3221 = vrcp.pop %v3220
    %v3222 = vmul.f32 %v3220, %v3221
    %v3223 = vsub.f32 1.0, %v3222
    %v3224 = vmul.f32 %v3221, %v3223
    %v3225 = vadd.f32 %v3221, %v3224
    %vm3226 = vweird.f32 %v3220
    %vm3227 = vweird.f32 %v3221
    %vm3228 = vmor %vm3226, %vm3227
    %v3229 = vsel %vm3228, %v3221, %v3225
    %v3230 = vand.u32 2147483647, %v3220
    %vm3231 = vcmp.eq.f32.partialorder %v3230, 8.507059e+37
    %v3232 = vand.u32 %v3220, 2147483648
    %v3233 = vor.u32 1.1754944e-38, %v3232
    %v3234 = vsel %vm3231, %v3233, %v3229
    %v3235 = vmul.f32 %v3217, %v3234
    %3236 = vst.msk [vmem:[#allocation5] sm:$0x3] %vm3211, %v3235
    // Predicated region
    $region14: #{tpu_custom_call.1} parent=1 // pred_check
      _
    $region15: #{tpu_custom_call.1} parent=1 // pred_check_branch
      %3238 = sbr.rel (0) target = $region17
    $region16: #{tpu_custom_call.1} parent=1 // pred_region
      %3240 = vsyncadd [#allocation6], 0
      %s3242 = sshll.u32 [#allocation5], 4
      %s3243 = int_to_ptr.vmem [resolvable:$true] %s3242
      %s3244 = sshll.u32 %s3, 4
      %s3245 = int_to_ptr.hbm [resolvable:$true] %s3244
      %3247 = dma.vmem_to_hbm [thread:$0]  %s3243, 32, %s3245, [#allocation6]
    $region17: #{tpu_custom_call.1} parent=1 // pred_fallthru
      _
    // Predicated region
    $region18: #{tpu_custom_call.1} parent=1 // pred_check
      _
    $region19: #{tpu_custom_call.1} parent=1 // pred_check_branch
      %3249 = sbr.rel (0) target = $region21
    $region20: #{tpu_custom_call.1} parent=1 // pred_region
      %3251 = dma.done [#allocation6], 32
    $region21: #{tpu_custom_call.1} parent=1 // pred_fallthru
      _
    %3252 = vsyncpa [#allocation6], 1

</llo_original>
